<compile_context>
chip_gen: v6e
topology: v6e:2x2x1
jax: 0.10.0
libtpu: 0.0.40
codegen_flags: <defaults>
</compile_context>

<pallas_src>
import math
from functools import partial

import jax
import jax.numpy as jnp
from jax import lax
from jax.experimental import pallas as pl
from jax.experimental.pallas import tpu as pltpu


# ----------------------------- in-kernel helpers -----------------------------

def _layer_norm(x, gamma, beta, eps=1e-5):
    # x: (L, E) f32; gamma/beta: (1, E) f32.  PyTorch LayerNorm (biased var).
    mu = jnp.mean(x, axis=-1, keepdims=True)
    var = jnp.mean((x - mu) ** 2, axis=-1, keepdims=True)
    return (x - mu) * lax.rsqrt(var + eps) * gamma + beta


def _attention(q_in, k_in, v_in, bias, wq, wk, wv, wo, bo, heads, head_dim):
    """SelfAttention.forward with all heads batched.

    q_in / k_in / v_in: the tensors the reference routes to its
    `queries` / `keys` / `values` arguments, shape (Lq/Lk/Lk, E), bf16.
    wq/wk/wv: block-diagonal (E, E) bf16 (wq has 1/sqrt(E) pre-folded);
    wo: (E, E) bf16; bo: (1, E) f32; bias: (Lq, Lk) f32 additive mask bias.
    """
    # Block-diagonal projections: one K=E MXU matmul each.
    q = jnp.dot(q_in, wq, preferred_element_type=jnp.float32)      # (Lq, E) f32
    k = jnp.dot(k_in, wk, preferred_element_type=jnp.float32)      # (Lk, E) f32
    v = jnp.dot(v_in, wv, preferred_element_type=jnp.float32)      # (Lk, E) f32

    # Head-major (H, L, d) views.  The static slice/stack is layout-only
    # (no matmuls are issued per head); every einsum below is batched over all
    # heads at once.  (Equivalent to pltpu.einshape("l(hd)->hld", ...); the
    # explicit form is kept for robust Mosaic lowering at head_dim=8.)
    def to_heads(t):
        return jnp.stack(
            [t[:, h * head_dim:(h + 1) * head_dim] for h in range(heads)],
            axis=0)

    qh = to_heads(q).astype(jnp.bfloat16)                           # (H, Lq, d)
    kh = to_heads(k).astype(jnp.bfloat16)                           # (H, Lk, d)
    vh = to_heads(v).astype(jnp.bfloat16)                           # (H, Lk, d)

    # energy: (H, Lq, Lk).  Scale already folded into wq; the mask is a single
    # additive bias (0 / -1e20), hoisted out of any per-head work.  After the
    # softmax max-subtraction this is numerically equivalent to the reference
    # masked_fill(-1e20) followed by the 1/sqrt(E) divide.
    energy = jnp.einsum("hqd,hkd->hqk", qh, kh,
                        preferred_element_type=jnp.float32)
    energy = energy + bias[None, :, :]

    m = jnp.max(energy, axis=-1, keepdims=True)
    p = jnp.exp(energy - m)
    att = p * pl.reciprocal(jnp.sum(p, axis=-1, keepdims=True), approx=True)

    ctx = jnp.einsum("hqk,hkd->hqd", att.astype(jnp.bfloat16), vh,
                     preferred_element_type=jnp.float32)            # (H, Lq, d)
    # Concatenate heads back onto the lane dim -> ONE K=E output projection.
    ctx = jnp.concatenate([ctx[h] for h in range(heads)], axis=-1)  # (Lq, E)
    return jnp.dot(ctx.astype(jnp.bfloat16), wo,
                   preferred_element_type=jnp.float32) + bo         # (Lq, E) f32


# --------------------------------- kernel ------------------------------------

def _decoder_block_kernel(heads, head_dim,
                          x_ref, value_ref, key_ref, sbias_ref, tbias_ref,
                          wq1_ref, wk1_ref, wv1_ref, wo1_ref,
                          wq2_ref, wk2_ref, wv2_ref, wo2_ref,
                          wff1_ref, wff2_ref, bff1_ref, vecs_ref,
                          out_ref):
    x = x_ref[...]              # (L, E) bf16
    value = value_ref[...]      # (L, E) bf16
    key = key_ref[...]          # (L, E) bf16
    sbias = sbias_ref[...]      # (L, L) f32 additive bias (source mask)
    tbias = tbias_ref[...]      # (L, L) f32 additive bias (target mask)

    vecs = vecs_ref[...]        # (9, E) f32 packed small vectors
    bo1, g0, b0 = vecs[0:1], vecs[1:2], vecs[2:3]
    bo2, g1, b1 = vecs[3:4], vecs[4:5], vecs[5:6]
    bff2, g2, b2 = vecs[6:7], vecs[7:8], vecs[8:9]
    bff1 = bff1_ref[...]        # (1, hid) f32

    # ---- DecoderBlock: masked self-attention on x --------------------------
    attn1 = _attention(x, x, x, tbias,
                       wq1_ref[...], wk1_ref[...], wv1_ref[...], wo1_ref[...],
                       bo1, heads, head_dim)
    # query = dropout(norm(attention + x)); dropout == identity (eval mode)
    query = _layer_norm(attn1 + x.astype(jnp.float32), g0, b0)      # (L, E) f32

    # ---- TransformerBlock(value, key, query, source_mask) ------------------
    # NOTE: the reference calls SelfAttention.forward(values, queries, keys)
    # as self.attention(value, key, query, mask), i.e. queries<-key, keys<-query.
    attn2 = _attention(key, query.astype(jnp.bfloat16), value, sbias,
                       wq2_ref[...], wk2_ref[...], wv2_ref[...], wo2_ref[...],
                       bo2, heads, head_dim)
    # x2 = dropout(norm1(attention + query))
    x2 = _layer_norm(attn2 + query, g1, b1)

    # feedforward: Linear(E, fe*E) -> ReLU -> Linear(fe*E, E), bf16 MXU ops.
    hdn = jnp.dot(x2.astype(jnp.bfloat16), wff1_ref[...],
                  preferred_element_type=jnp.float32) + bff1
    hdn = jnp.maximum(hdn, 0.0)
    ff = jnp.dot(hdn.astype(jnp.bfloat16), wff2_ref[...],
                 preferred_element_type=jnp.float32) + bff2

    # out = dropout(norm2(forward + x2))
    out_ref[...] = _layer_norm(ff + x2, g2, b2).astype(out_ref.dtype)


# -------------------------------- wrapper -------------------------------------

_VEC_ORDER = ("bo1", "g0", "b0", "bo2", "g1", "b1", "bff2", "g2", "b2")


def decoder_block(x, value, key, source_mask, target_mask, params, heads):
    N, L, E = x.shape
    head_dim = E // heads
    assert head_dim * heads == E
    hid = params["wff1"].shape[1]

    # PyTorch-style (N,1,Lq,Lk) masks -> additive f32 bias (N, Lq, Lk), built
    # once host-side so the kernel never re-masks per head.
    def to_bias(mask):
        m = mask.reshape(N, mask.shape[-2], mask.shape[-1])
        return jnp.where(m == 0, jnp.float32(-1e20), jnp.float32(0.0))

    sbias = to_bias(source_mask)
    tbias = to_bias(target_mask)

    # Shared per-head Linear(head_dim, head_dim) -> block-diagonal (E, E);
    # fold the 1/sqrt(E) softmax scale into the query projections.
    eye = jnp.eye(heads, dtype=jnp.float32)
    bd = lambda w: jnp.kron(eye, w)
    scale = 1.0 / math.sqrt(E)
    wq1 = (bd(params["wq1"]) * scale).astype(jnp.bfloat16)
    wk1 = bd(params["wk1"]).astype(jnp.bfloat16)
    wv1 = bd(params["wv1"]).astype(jnp.bfloat16)
    wo1 = params["wo1"].astype(jnp.bfloat16)
    wq2 = (bd(params["wq2"]) * scale).astype(jnp.bfloat16)
    wk2 = bd(params["wk2"]).astype(jnp.bfloat16)
    wv2 = bd(params["wv2"]).astype(jnp.bfloat16)
    wo2 = params["wo2"].astype(jnp.bfloat16)
    wff1 = params["wff1"].astype(jnp.bfloat16)
    wff2 = params["wff2"].astype(jnp.bfloat16)
    bff1 = params["bff1"].astype(jnp.float32)
    vecs = jnp.concatenate([params[k] for k in _VEC_ORDER], axis=0)  # (9, E) f32

    args = [x.astype(jnp.bfloat16), value.astype(jnp.bfloat16),
            key.astype(jnp.bfloat16), sbias, tbias,
            wq1, wk1, wv1, wo1, wq2, wk2, wv2, wo2,
            wff1, wff2, bff1, vecs]

    seq_spec = pl.BlockSpec((None, L, E), lambda n: (n, 0, 0))
    bias_spec = pl.BlockSpec((None, L, L), lambda n: (n, 0, 0))
    res = lambda shape: pl.BlockSpec(shape, lambda n: (0, 0))  # grid-resident

    in_specs = [seq_spec, seq_spec, seq_spec, bias_spec, bias_spec,
                res((E, E)), res((E, E)), res((E, E)), res((E, E)),
                res((E, E)), res((E, E)), res((E, E)), res((E, E)),
                res((E, hid)), res((hid, E)), res((1, hid)), res((9, E))]

    kernel = partial(_decoder_block_kernel, heads, head_dim)
    return pl.pallas_call(
        kernel,
        grid=(N,),
        out_shape=jax.ShapeDtypeStruct((N, L, E), jnp.float32),
        in_specs=in_specs,
        out_specs=pl.BlockSpec((None, L, E), lambda n: (n, 0, 0)),
        compiler_params=pltpu.CompilerParams(
            dimension_semantics=("parallel",)),
    )(*args)


def init_params(key, embed_size, heads, forward_expansion):
    head_dim = embed_size // heads
    ks = jax.random.split(key, 14)

    def w(k, shape, scale=0.05):
        return jax.random.normal(k, shape, jnp.float32) * scale

    hid = forward_expansion * embed_size
    return dict(
        # decoder self-attention
        wv1=w(ks[0], (head_dim, head_dim)),
        wk1=w(ks[1], (head_dim, head_dim)),
        wq1=w(ks[2], (head_dim, head_dim)),
        wo1=w(ks[3], (embed_size, embed_size)),
        bo1=w(ks[4], (1, embed_size)),
        # decoder norm
        g0=jnp.ones((1, embed_size), jnp.float32),
        b0=jnp.zeros((1, embed_size), jnp.float32),
        # transformer-block attention
        wv2=w(ks[5], (head_dim, head_dim)),
        wk2=w(ks[6], (head_dim, head_dim)),
        wq2=w(ks[7], (head_dim, head_dim)),
        wo2=w(ks[8], (embed_size, embed_size)),
        bo2=w(ks[9], (1, embed_size)),
        # norm1 / norm2
        g1=jnp.ones((1, embed_size), jnp.float32),
        b1=jnp.zeros((1, embed_size), jnp.float32),
        g2=jnp.ones((1, embed_size), jnp.float32),
        b2=jnp.zeros((1, embed_size), jnp.float32),
        # feedforward
        wff1=w(ks[10], (embed_size, hid)),
        bff1=w(ks[11], (1, hid)),
        wff2=w(ks[12], (hid, embed_size)),
        bff2=w(ks[13], (1, embed_size)),
    )


if __name__ == "__main__":
    N, L, E, H, FE = 2, 8, 32, 4, 4

    root = jax.random.PRNGKey(0)
    kx, kv, kk, kp = jax.random.split(root, 4)
    x = jax.random.normal(kx, (N, L, E), jnp.float32)
    value = jax.random.normal(kv, (N, L, E), jnp.float32)
    key_t = jax.random.normal(kk, (N, L, E), jnp.float32)

    # target mask: causal lower-triangular; source mask: all ones.  (N,1,Lq,Lk)
    target_mask = jnp.broadcast_to(
        jnp.tril(jnp.ones((L, L), jnp.int32))[None, None], (N, 1, L, L))
    source_mask = jnp.ones((N, 1, L, L), jnp.int32)

    params = init_params(kp, E, H, FE)

    out = decoder_block(x, value, key_t, source_mask, target_mask, params, H)
    out = jax.block_until_ready(out)
    assert out.shape == (N, L, E) and out.dtype == jnp.float32
    assert bool(jnp.all(jnp.isfinite(out)))
    print("KERNEL_OK")
</pallas_src>

<mosaic_0001>
module attributes {stable_mosaic.version = 11 : i64} {
  func.func @_decoder_block_kernel(%arg0: i32, %arg1: memref<1x8x32xbf16, #tpu.memory_space<vmem>>, %arg2: memref<1x8x32xbf16, #tpu.memory_space<vmem>>, %arg3: memref<1x8x32xbf16, #tpu.memory_space<vmem>>, %arg4: memref<1x8x8xf32, #tpu.memory_space<vmem>>, %arg5: memref<1x8x8xf32, #tpu.memory_space<vmem>>, %arg6: memref<32x32xbf16, #tpu.memory_space<vmem>>, %arg7: memref<32x32xbf16, #tpu.memory_space<vmem>>, %arg8: memref<32x32xbf16, #tpu.memory_space<vmem>>, %arg9: memref<32x32xbf16, #tpu.memory_space<vmem>>, %arg10: memref<32x32xbf16, #tpu.memory_space<vmem>>, %arg11: memref<32x32xbf16, #tpu.memory_space<vmem>>, %arg12: memref<32x32xbf16, #tpu.memory_space<vmem>>, %arg13: memref<32x32xbf16, #tpu.memory_space<vmem>>, %arg14: memref<32x128xbf16, #tpu.memory_space<vmem>>, %arg15: memref<128x32xbf16, #tpu.memory_space<vmem>>, %arg16: memref<1x128xf32, #tpu.memory_space<vmem>>, %arg17: memref<9x32xf32, #tpu.memory_space<vmem>>, %arg18: memref<1x8x32xf32, #tpu.memory_space<vmem>>) attributes {dimension_semantics = [#tpu.dimension_semantics<parallel>], iteration_bounds = array<i64: 2>, scalar_prefetch = 0 : i64, scratch_operands = 0 : i64, tpu.core_type = #tpu.core_type<tc>, window_params = [{transform_indices = @transform_0, window_bounds = array<i64: 1, 8, 32>}, {transform_indices = @transform_1, window_bounds = array<i64: 1, 8, 32>}, {transform_indices = @transform_2, window_bounds = array<i64: 1, 8, 32>}, {transform_indices = @transform_3, window_bounds = array<i64: 1, 8, 8>}, {transform_indices = @transform_4, window_bounds = array<i64: 1, 8, 8>}, {pipeline_mode = #tpu.pipeline_mode<synchronous>, transform_indices = @transform_5, window_bounds = array<i64: 32, 32>}, {pipeline_mode = #tpu.pipeline_mode<synchronous>, transform_indices = @transform_6, window_bounds = array<i64: 32, 32>}, {pipeline_mode = #tpu.pipeline_mode<synchronous>, transform_indices = @transform_7, window_bounds = array<i64: 32, 32>}, {pipeline_mode = #tpu.pipeline_mode<synchronous>, transform_indices = @transform_8, window_bounds = array<i64: 32, 32>}, {pipeline_mode = #tpu.pipeline_mode<synchronous>, transform_indices = @transform_9, window_bounds = array<i64: 32, 32>}, {pipeline_mode = #tpu.pipeline_mode<synchronous>, transform_indices = @transform_10, window_bounds = array<i64: 32, 32>}, {pipeline_mode = #tpu.pipeline_mode<synchronous>, transform_indices = @transform_11, window_bounds = array<i64: 32, 32>}, {pipeline_mode = #tpu.pipeline_mode<synchronous>, transform_indices = @transform_12, window_bounds = array<i64: 32, 32>}, {pipeline_mode = #tpu.pipeline_mode<synchronous>, transform_indices = @transform_13, window_bounds = array<i64: 32, 128>}, {pipeline_mode = #tpu.pipeline_mode<synchronous>, transform_indices = @transform_14, window_bounds = array<i64: 128, 32>}, {pipeline_mode = #tpu.pipeline_mode<synchronous>, transform_indices = @transform_15, window_bounds = array<i64: 1, 128>}, {pipeline_mode = #tpu.pipeline_mode<synchronous>, transform_indices = @transform_16, window_bounds = array<i64: 9, 32>}, {transform_indices = @transform_17, window_bounds = array<i64: 1, 8, 32>}]} {
    %c0 = arith.constant 0 : index
    %c0_0 = arith.constant 0 : index
    %c0_1 = arith.constant 0 : index
    %0 = vector.load %arg1[%c0, %c0_0, %c0_1] : memref<1x8x32xbf16, #tpu.memory_space<vmem>>, vector<1x8x32xbf16>
    %1 = vector.shape_cast %0 : vector<1x8x32xbf16> to vector<8x32xbf16>
    %c0_2 = arith.constant 0 : index
    %c0_3 = arith.constant 0 : index
    %c0_4 = arith.constant 0 : index
    %2 = vector.load %arg2[%c0_2, %c0_3, %c0_4] : memref<1x8x32xbf16, #tpu.memory_space<vmem>>, vector<1x8x32xbf16>
    %3 = vector.shape_cast %2 : vector<1x8x32xbf16> to vector<8x32xbf16>
    %c0_5 = arith.constant 0 : index
    %c0_6 = arith.constant 0 : index
    %c0_7 = arith.constant 0 : index
    %4 = vector.load %arg3[%c0_5, %c0_6, %c0_7] : memref<1x8x32xbf16, #tpu.memory_space<vmem>>, vector<1x8x32xbf16>
    %5 = vector.shape_cast %4 : vector<1x8x32xbf16> to vector<8x32xbf16>
    %c0_8 = arith.constant 0 : index
    %c0_9 = arith.constant 0 : index
    %c0_10 = arith.constant 0 : index
    %6 = vector.load %arg4[%c0_8, %c0_9, %c0_10] : memref<1x8x8xf32, #tpu.memory_space<vmem>>, vector<1x8x8xf32>
    %7 = vector.shape_cast %6 : vector<1x8x8xf32> to vector<8x8xf32>
    %c0_11 = arith.constant 0 : index
    %c0_12 = arith.constant 0 : index
    %c0_13 = arith.constant 0 : index
    %8 = vector.load %arg5[%c0_11, %c0_12, %c0_13] : memref<1x8x8xf32, #tpu.memory_space<vmem>>, vector<1x8x8xf32>
    %9 = vector.shape_cast %8 : vector<1x8x8xf32> to vector<8x8xf32>
    %c0_14 = arith.constant 0 : index
    %c0_15 = arith.constant 0 : index
    %10 = vector.load %arg17[%c0_14, %c0_15] : memref<9x32xf32, #tpu.memory_space<vmem>>, vector<9x32xf32>
    %11 = vector.extract_strided_slice %10 {offsets = [0, 0], sizes = [1, 32], strides = [1, 1]} : vector<9x32xf32> to vector<1x32xf32>
    %12 = vector.extract_strided_slice %10 {offsets = [1, 0], sizes = [1, 32], strides = [1, 1]} : vector<9x32xf32> to vector<1x32xf32>
    %13 = vector.extract_strided_slice %10 {offsets = [2, 0], sizes = [1, 32], strides = [1, 1]} : vector<9x32xf32> to vector<1x32xf32>
    %14 = vector.extract_strided_slice %10 {offsets = [3, 0], sizes = [1, 32], strides = [1, 1]} : vector<9x32xf32> to vector<1x32xf32>
    %15 = vector.extract_strided_slice %10 {offsets = [4, 0], sizes = [1, 32], strides = [1, 1]} : vector<9x32xf32> to vector<1x32xf32>
    %16 = vector.extract_strided_slice %10 {offsets = [5, 0], sizes = [1, 32], strides = [1, 1]} : vector<9x32xf32> to vector<1x32xf32>
    %17 = vector.extract_strided_slice %10 {offsets = [6, 0], sizes = [1, 32], strides = [1, 1]} : vector<9x32xf32> to vector<1x32xf32>
    %18 = vector.extract_strided_slice %10 {offsets = [7, 0], sizes = [1, 32], strides = [1, 1]} : vector<9x32xf32> to vector<1x32xf32>
    %19 = vector.extract_strided_slice %10 {offsets = [8, 0], sizes = [1, 32], strides = [1, 1]} : vector<9x32xf32> to vector<1x32xf32>
    %c0_16 = arith.constant 0 : index
    %c0_17 = arith.constant 0 : index
    %20 = vector.load %arg16[%c0_16, %c0_17] : memref<1x128xf32, #tpu.memory_space<vmem>>, vector<1x128xf32>
    %c0_18 = arith.constant 0 : index
    %c0_19 = arith.constant 0 : index
    %21 = vector.load %arg6[%c0_18, %c0_19] : memref<32x32xbf16, #tpu.memory_space<vmem>>, vector<32x32xbf16>
    %c0_20 = arith.constant 0 : index
    %c0_21 = arith.constant 0 : index
    %22 = vector.load %arg7[%c0_20, %c0_21] : memref<32x32xbf16, #tpu.memory_space<vmem>>, vector<32x32xbf16>
    %c0_22 = arith.constant 0 : index
    %c0_23 = arith.constant 0 : index
    %23 = vector.load %arg8[%c0_22, %c0_23] : memref<32x32xbf16, #tpu.memory_space<vmem>>, vector<32x32xbf16>
    %c0_24 = arith.constant 0 : index
    %c0_25 = arith.constant 0 : index
    %24 = vector.load %arg9[%c0_24, %c0_25] : memref<32x32xbf16, #tpu.memory_space<vmem>>, vector<32x32xbf16>
    %cst = arith.constant dense<0.000000e+00> : vector<8x32xf32>
    %25 = tpu.matmul %1, %21, %cst {dimension_numbers = #tpu.dot_dimension_numbers<[1], [0], [0], [1], [0, 0, 1, 1], [], []>} : vector<8x32xbf16>, vector<32x32xbf16>, vector<8x32xf32> -> vector<8x32xf32>
    %cst_26 = arith.constant dense<0.000000e+00> : vector<8x32xf32>
    %26 = tpu.matmul %1, %22, %cst_26 {dimension_numbers = #tpu.dot_dimension_numbers<[1], [0], [0], [1], [0, 0, 1, 1], [], []>} : vector<8x32xbf16>, vector<32x32xbf16>, vector<8x32xf32> -> vector<8x32xf32>
    %cst_27 = arith.constant dense<0.000000e+00> : vector<8x32xf32>
    %27 = tpu.matmul %1, %23, %cst_27 {dimension_numbers = #tpu.dot_dimension_numbers<[1], [0], [0], [1], [0, 0, 1, 1], [], []>} : vector<8x32xbf16>, vector<32x32xbf16>, vector<8x32xf32> -> vector<8x32xf32>
    %28 = vector.extract_strided_slice %25 {offsets = [0, 0], sizes = [8, 8], strides = [1, 1]} : vector<8x32xf32> to vector<8x8xf32>
    %29 = vector.extract_strided_slice %25 {offsets = [0, 8], sizes = [8, 8], strides = [1, 1]} : vector<8x32xf32> to vector<8x8xf32>
    %30 = vector.extract_strided_slice %25 {offsets = [0, 16], sizes = [8, 8], strides = [1, 1]} : vector<8x32xf32> to vector<8x8xf32>
    %31 = vector.extract_strided_slice %25 {offsets = [0, 24], sizes = [8, 8], strides = [1, 1]} : vector<8x32xf32> to vector<8x8xf32>
    %32 = vector.shape_cast %28 : vector<8x8xf32> to vector<1x8x8xf32>
    %33 = vector.shape_cast %29 : vector<8x8xf32> to vector<1x8x8xf32>
    %34 = vector.shape_cast %30 : vector<8x8xf32> to vector<1x8x8xf32>
    %35 = vector.shape_cast %31 : vector<8x8xf32> to vector<1x8x8xf32>
    %36 = tpu.concatenate %32, %33, %34, %35 in 0 : vector<1x8x8xf32>, vector<1x8x8xf32>, vector<1x8x8xf32>, vector<1x8x8xf32> -> vector<4x8x8xf32>
    %37 = arith.truncf %36 : vector<4x8x8xf32> to vector<4x8x8xbf16>
    %38 = vector.extract_strided_slice %26 {offsets = [0, 0], sizes = [8, 8], strides = [1, 1]} : vector<8x32xf32> to vector<8x8xf32>
    %39 = vector.extract_strided_slice %26 {offsets = [0, 8], sizes = [8, 8], strides = [1, 1]} : vector<8x32xf32> to vector<8x8xf32>
    %40 = vector.extract_strided_slice %26 {offsets = [0, 16], sizes = [8, 8], strides = [1, 1]} : vector<8x32xf32> to vector<8x8xf32>
    %41 = vector.extract_strided_slice %26 {offsets = [0, 24], sizes = [8, 8], strides = [1, 1]} : vector<8x32xf32> to vector<8x8xf32>
    %42 = vector.shape_cast %38 : vector<8x8xf32> to vector<1x8x8xf32>
    %43 = vector.shape_cast %39 : vector<8x8xf32> to vector<1x8x8xf32>
    %44 = vector.shape_cast %40 : vector<8x8xf32> to vector<1x8x8xf32>
    %45 = vector.shape_cast %41 : vector<8x8xf32> to vector<1x8x8xf32>
    %46 = tpu.concatenate %42, %43, %44, %45 in 0 : vector<1x8x8xf32>, vector<1x8x8xf32>, vector<1x8x8xf32>, vector<1x8x8xf32> -> vector<4x8x8xf32>
    %47 = arith.truncf %46 : vector<4x8x8xf32> to vector<4x8x8xbf16>
    %48 = vector.extract_strided_slice %27 {offsets = [0, 0], sizes = [8, 8], strides = [1, 1]} : vector<8x32xf32> to vector<8x8xf32>
    %49 = vector.extract_strided_slice %27 {offsets = [0, 8], sizes = [8, 8], strides = [1, 1]} : vector<8x32xf32> to vector<8x8xf32>
    %50 = vector.extract_strided_slice %27 {offsets = [0, 16], sizes = [8, 8], strides = [1, 1]} : vector<8x32xf32> to vector<8x8xf32>
    %51 = vector.extract_strided_slice %27 {offsets = [0, 24], sizes = [8, 8], strides = [1, 1]} : vector<8x32xf32> to vector<8x8xf32>
    %52 = vector.shape_cast %48 : vector<8x8xf32> to vector<1x8x8xf32>
    %53 = vector.shape_cast %49 : vector<8x8xf32> to vector<1x8x8xf32>
    %54 = vector.shape_cast %50 : vector<8x8xf32> to vector<1x8x8xf32>
    %55 = vector.shape_cast %51 : vector<8x8xf32> to vector<1x8x8xf32>
    %56 = tpu.concatenate %52, %53, %54, %55 in 0 : vector<1x8x8xf32>, vector<1x8x8xf32>, vector<1x8x8xf32>, vector<1x8x8xf32> -> vector<4x8x8xf32>
    %57 = arith.truncf %56 : vector<4x8x8xf32> to vector<4x8x8xbf16>
    "tpu.trace_start"() <{level = 10 : i32, message = "hqd,hkd->hqk"}> : () -> ()
    %cst_28 = arith.constant dense<0.000000e+00> : vector<4x8x8xf32>
    %58 = tpu.matmul %37, %47, %cst_28 {dimension_numbers = #tpu.dot_dimension_numbers<[2], [2], [1], [1], [0, 0, 0, 1, 1, 1], [0], [0]>} : vector<4x8x8xbf16>, vector<4x8x8xbf16>, vector<4x8x8xf32> -> vector<4x8x8xf32>
    "tpu.trace_stop"() : () -> ()
    %59 = vector.shape_cast %9 : vector<8x8xf32> to vector<1x8x8xf32>
    %60 = vector.broadcast %59 : vector<1x8x8xf32> to vector<4x8x8xf32>
    %61 = arith.addf %58, %60 : vector<4x8x8xf32>
    %cst_29 = arith.constant dense<0xFF800000> : vector<4x8xf32>
    %62 = vector.multi_reduction <maximumf>, %61, %cst_29 [2] : vector<4x8x8xf32> to vector<4x8xf32>
    %63 = vector.shape_cast %62 : vector<4x8xf32> to vector<4x8x1xf32>
    %64 = vector.broadcast %63 : vector<4x8x1xf32> to vector<4x8x8xf32>
    %65 = arith.subf %61, %64 : vector<4x8x8xf32>
    %66 = math.exp %65 : vector<4x8x8xf32>
    %cst_30 = arith.constant dense<0.000000e+00> : vector<4x8xf32>
    %67 = vector.multi_reduction <add>, %66, %cst_30 [2] : vector<4x8x8xf32> to vector<4x8xf32>
    %68 = vector.shape_cast %67 : vector<4x8xf32> to vector<4x8x1xf32>
    %69 = tpu.reciprocal %68 {approx = true} : vector<4x8x1xf32> -> vector<4x8x1xf32>
    %70 = vector.broadcast %69 : vector<4x8x1xf32> to vector<4x8x8xf32>
    %71 = arith.mulf %66, %70 : vector<4x8x8xf32>
    %72 = arith.truncf %71 : vector<4x8x8xf32> to vector<4x8x8xbf16>
    "tpu.trace_start"() <{level = 10 : i32, message = "hqk,hkd->hqd"}> : () -> ()
    %cst_31 = arith.constant dense<0.000000e+00> : vector<4x8x8xf32>
    %73 = tpu.matmul %72, %57, %cst_31 {dimension_numbers = #tpu.dot_dimension_numbers<[2], [1], [1], [2], [0, 0, 0, 1, 1, 2], [0], [0]>} : vector<4x8x8xbf16>, vector<4x8x8xbf16>, vector<4x8x8xf32> -> vector<4x8x8xf32>
    "tpu.trace_stop"() : () -> ()
    %74 = vector.extract_strided_slice %73 {offsets = [0, 0, 0], sizes = [1, 8, 8], strides = [1, 1, 1]} : vector<4x8x8xf32> to vector<1x8x8xf32>
    %75 = vector.shape_cast %74 : vector<1x8x8xf32> to vector<8x8xf32>
    %76 = vector.extract_strided_slice %73 {offsets = [1, 0, 0], sizes = [1, 8, 8], strides = [1, 1, 1]} : vector<4x8x8xf32> to vector<1x8x8xf32>
    %77 = vector.shape_cast %76 : vector<1x8x8xf32> to vector<8x8xf32>
    %78 = vector.extract_strided_slice %73 {offsets = [2, 0, 0], sizes = [1, 8, 8], strides = [1, 1, 1]} : vector<4x8x8xf32> to vector<1x8x8xf32>
    %79 = vector.shape_cast %78 : vector<1x8x8xf32> to vector<8x8xf32>
    %80 = vector.extract_strided_slice %73 {offsets = [3, 0, 0], sizes = [1, 8, 8], strides = [1, 1, 1]} : vector<4x8x8xf32> to vector<1x8x8xf32>
    %81 = vector.shape_cast %80 : vector<1x8x8xf32> to vector<8x8xf32>
    %82 = tpu.concatenate %75, %77, %79, %81 in 1 : vector<8x8xf32>, vector<8x8xf32>, vector<8x8xf32>, vector<8x8xf32> -> vector<8x32xf32>
    %83 = arith.truncf %82 : vector<8x32xf32> to vector<8x32xbf16>
    %cst_32 = arith.constant dense<0.000000e+00> : vector<8x32xf32>
    %84 = tpu.matmul %83, %24, %cst_32 {dimension_numbers = #tpu.dot_dimension_numbers<[1], [0], [0], [1], [0, 0, 1, 1], [], []>} : vector<8x32xbf16>, vector<32x32xbf16>, vector<8x32xf32> -> vector<8x32xf32>
    %85 = vector.broadcast %11 : vector<1x32xf32> to vector<8x32xf32>
    %86 = arith.addf %84, %85 : vector<8x32xf32>
    %87 = arith.extf %1 : vector<8x32xbf16> to vector<8x32xf32>
    %88 = arith.addf %86, %87 : vector<8x32xf32>
    %cst_33 = arith.constant dense<0.000000e+00> : vector<8xf32>
    %89 = vector.multi_reduction <add>, %88, %cst_33 [1] : vector<8x32xf32> to vector<8xf32>
    %90 = vector.shape_cast %89 : vector<8xf32> to vector<8x1xf32>
    %cst_34 = arith.constant 3.200000e+01 : f32
    %91 = vector.broadcast %cst_34 : f32 to vector<8x1xf32>
    %92 = arith.divf %90, %91 : vector<8x1xf32>
    %93 = vector.broadcast %92 : vector<8x1xf32> to vector<8x32xf32>
    %94 = arith.subf %88, %93 : vector<8x32xf32>
    %95 = arith.mulf %94, %94 : vector<8x32xf32>
    %cst_35 = arith.constant dense<0.000000e+00> : vector<8xf32>
    %96 = vector.multi_reduction <add>, %95, %cst_35 [1] : vector<8x32xf32> to vector<8xf32>
    %97 = vector.shape_cast %96 : vector<8xf32> to vector<8x1xf32>
    %cst_36 = arith.constant 3.200000e+01 : f32
    %98 = vector.broadcast %cst_36 : f32 to vector<8x1xf32>
    %99 = arith.divf %97, %98 : vector<8x1xf32>
    %100 = vector.broadcast %92 : vector<8x1xf32> to vector<8x32xf32>
    %101 = arith.subf %88, %100 : vector<8x32xf32>
    %cst_37 = arith.constant 9.99999974E-6 : f32
    %102 = vector.broadcast %cst_37 : f32 to vector<8x1xf32>
    %103 = arith.addf %99, %102 : vector<8x1xf32>
    %104 = math.rsqrt %103 : vector<8x1xf32>
    %105 = vector.broadcast %104 : vector<8x1xf32> to vector<8x32xf32>
    %106 = arith.mulf %101, %105 : vector<8x32xf32>
    %107 = vector.broadcast %12 : vector<1x32xf32> to vector<8x32xf32>
    %108 = arith.mulf %106, %107 : vector<8x32xf32>
    %109 = vector.broadcast %13 : vector<1x32xf32> to vector<8x32xf32>
    %110 = arith.addf %108, %109 : vector<8x32xf32>
    %111 = arith.truncf %110 : vector<8x32xf32> to vector<8x32xbf16>
    %c0_38 = arith.constant 0 : index
    %c0_39 = arith.constant 0 : index
    %112 = vector.load %arg10[%c0_38, %c0_39] : memref<32x32xbf16, #tpu.memory_space<vmem>>, vector<32x32xbf16>
    %c0_40 = arith.constant 0 : index
    %c0_41 = arith.constant 0 : index
    %113 = vector.load %arg11[%c0_40, %c0_41] : memref<32x32xbf16, #tpu.memory_space<vmem>>, vector<32x32xbf16>
    %c0_42 = arith.constant 0 : index
    %c0_43 = arith.constant 0 : index
    %114 = vector.load %arg12[%c0_42, %c0_43] : memref<32x32xbf16, #tpu.memory_space<vmem>>, vector<32x32xbf16>
    %c0_44 = arith.constant 0 : index
    %c0_45 = arith.constant 0 : index
    %115 = vector.load %arg13[%c0_44, %c0_45] : memref<32x32xbf16, #tpu.memory_space<vmem>>, vector<32x32xbf16>
    %cst_46 = arith.constant dense<0.000000e+00> : vector<8x32xf32>
    %116 = tpu.matmul %5, %112, %cst_46 {dimension_numbers = #tpu.dot_dimension_numbers<[1], [0], [0], [1], [0, 0, 1, 1], [], []>} : vector<8x32xbf16>, vector<32x32xbf16>, vector<8x32xf32> -> vector<8x32xf32>
    %cst_47 = arith.constant dense<0.000000e+00> : vector<8x32xf32>
    %117 = tpu.matmul %111, %113, %cst_47 {dimension_numbers = #tpu.dot_dimension_numbers<[1], [0], [0], [1], [0, 0, 1, 1], [], []>} : vector<8x32xbf16>, vector<32x32xbf16>, vector<8x32xf32> -> vector<8x32xf32>
    %cst_48 = arith.constant dense<0.000000e+00> : vector<8x32xf32>
    %118 = tpu.matmul %3, %114, %cst_48 {dimension_numbers = #tpu.dot_dimension_numbers<[1], [0], [0], [1], [0, 0, 1, 1], [], []>} : vector<8x32xbf16>, vector<32x32xbf16>, vector<8x32xf32> -> vector<8x32xf32>
    %119 = vector.extract_strided_slice %116 {offsets = [0, 0], sizes = [8, 8], strides = [1, 1]} : vector<8x32xf32> to vector<8x8xf32>
    %120 = vector.extract_strided_slice %116 {offsets = [0, 8], sizes = [8, 8], strides = [1, 1]} : vector<8x32xf32> to vector<8x8xf32>
    %121 = vector.extract_strided_slice %116 {offsets = [0, 16], sizes = [8, 8], strides = [1, 1]} : vector<8x32xf32> to vector<8x8xf32>
    %122 = vector.extract_strided_slice %116 {offsets = [0, 24], sizes = [8, 8], strides = [1, 1]} : vector<8x32xf32> to vector<8x8xf32>
    %123 = vector.shape_cast %119 : vector<8x8xf32> to vector<1x8x8xf32>
    %124 = vector.shape_cast %120 : vector<8x8xf32> to vector<1x8x8xf32>
    %125 = vector.shape_cast %121 : vector<8x8xf32> to vector<1x8x8xf32>
    %126 = vector.shape_cast %122 : vector<8x8xf32> to vector<1x8x8xf32>
    %127 = tpu.concatenate %123, %124, %125, %126 in 0 : vector<1x8x8xf32>, vector<1x8x8xf32>, vector<1x8x8xf32>, vector<1x8x8xf32> -> vector<4x8x8xf32>
    %128 = arith.truncf %127 : vector<4x8x8xf32> to vector<4x8x8xbf16>
    %129 = vector.extract_strided_slice %117 {offsets = [0, 0], sizes = [8, 8], strides = [1, 1]} : vector<8x32xf32> to vector<8x8xf32>
    %130 = vector.extract_strided_slice %117 {offsets = [0, 8], sizes = [8, 8], strides = [1, 1]} : vector<8x32xf32> to vector<8x8xf32>
    %131 = vector.extract_strided_slice %117 {offsets = [0, 16], sizes = [8, 8], strides = [1, 1]} : vector<8x32xf32> to vector<8x8xf32>
    %132 = vector.extract_strided_slice %117 {offsets = [0, 24], sizes = [8, 8], strides = [1, 1]} : vector<8x32xf32> to vector<8x8xf32>
    %133 = vector.shape_cast %129 : vector<8x8xf32> to vector<1x8x8xf32>
    %134 = vector.shape_cast %130 : vector<8x8xf32> to vector<1x8x8xf32>
    %135 = vector.shape_cast %131 : vector<8x8xf32> to vector<1x8x8xf32>
    %136 = vector.shape_cast %132 : vector<8x8xf32> to vector<1x8x8xf32>
    %137 = tpu.concatenate %133, %134, %135, %136 in 0 : vector<1x8x8xf32>, vector<1x8x8xf32>, vector<1x8x8xf32>, vector<1x8x8xf32> -> vector<4x8x8xf32>
    %138 = arith.truncf %137 : vector<4x8x8xf32> to vector<4x8x8xbf16>
    %139 = vector.extract_strided_slice %118 {offsets = [0, 0], sizes = [8, 8], strides = [1, 1]} : vector<8x32xf32> to vector<8x8xf32>
    %140 = vector.extract_strided_slice %118 {offsets = [0, 8], sizes = [8, 8], strides = [1, 1]} : vector<8x32xf32> to vector<8x8xf32>
    %141 = vector.extract_strided_slice %118 {offsets = [0, 16], sizes = [8, 8], strides = [1, 1]} : vector<8x32xf32> to vector<8x8xf32>
    %142 = vector.extract_strided_slice %118 {offsets = [0, 24], sizes = [8, 8], strides = [1, 1]} : vector<8x32xf32> to vector<8x8xf32>
    %143 = vector.shape_cast %139 : vector<8x8xf32> to vector<1x8x8xf32>
    %144 = vector.shape_cast %140 : vector<8x8xf32> to vector<1x8x8xf32>
    %145 = vector.shape_cast %141 : vector<8x8xf32> to vector<1x8x8xf32>
    %146 = vector.shape_cast %142 : vector<8x8xf32> to vector<1x8x8xf32>
    %147 = tpu.concatenate %143, %144, %145, %146 in 0 : vector<1x8x8xf32>, vector<1x8x8xf32>, vector<1x8x8xf32>, vector<1x8x8xf32> -> vector<4x8x8xf32>
    %148 = arith.truncf %147 : vector<4x8x8xf32> to vector<4x8x8xbf16>
    "tpu.trace_start"() <{level = 10 : i32, message = "hqd,hkd->hqk"}> : () -> ()
    %cst_49 = arith.constant dense<0.000000e+00> : vector<4x8x8xf32>
    %149 = tpu.matmul %128, %138, %cst_49 {dimension_numbers = #tpu.dot_dimension_numbers<[2], [2], [1], [1], [0, 0, 0, 1, 1, 1], [0], [0]>} : vector<4x8x8xbf16>, vector<4x8x8xbf16>, vector<4x8x8xf32> -> vector<4x8x8xf32>
    "tpu.trace_stop"() : () -> ()
    %150 = vector.shape_cast %7 : vector<8x8xf32> to vector<1x8x8xf32>
    %151 = vector.broadcast %150 : vector<1x8x8xf32> to vector<4x8x8xf32>
    %152 = arith.addf %149, %151 : vector<4x8x8xf32>
    %cst_50 = arith.constant dense<0xFF800000> : vector<4x8xf32>
    %153 = vector.multi_reduction <maximumf>, %152, %cst_50 [2] : vector<4x8x8xf32> to vector<4x8xf32>
    %154 = vector.shape_cast %153 : vector<4x8xf32> to vector<4x8x1xf32>
    %155 = vector.broadcast %154 : vector<4x8x1xf32> to vector<4x8x8xf32>
    %156 = arith.subf %152, %155 : vector<4x8x8xf32>
    %157 = math.exp %156 : vector<4x8x8xf32>
    %cst_51 = arith.constant dense<0.000000e+00> : vector<4x8xf32>
    %158 = vector.multi_reduction <add>, %157, %cst_51 [2] : vector<4x8x8xf32> to vector<4x8xf32>
    %159 = vector.shape_cast %158 : vector<4x8xf32> to vector<4x8x1xf32>
    %160 = tpu.reciprocal %159 {approx = true} : vector<4x8x1xf32> -> vector<4x8x1xf32>
    %161 = vector.broadcast %160 : vector<4x8x1xf32> to vector<4x8x8xf32>
    %162 = arith.mulf %157, %161 : vector<4x8x8xf32>
    %163 = arith.truncf %162 : vector<4x8x8xf32> to vector<4x8x8xbf16>
    "tpu.trace_start"() <{level = 10 : i32, message = "hqk,hkd->hqd"}> : () -> ()
    %cst_52 = arith.constant dense<0.000000e+00> : vector<4x8x8xf32>
    %164 = tpu.matmul %163, %148, %cst_52 {dimension_numbers = #tpu.dot_dimension_numbers<[2], [1], [1], [2], [0, 0, 0, 1, 1, 2], [0], [0]>} : vector<4x8x8xbf16>, vector<4x8x8xbf16>, vector<4x8x8xf32> -> vector<4x8x8xf32>
    "tpu.trace_stop"() : () -> ()
    %165 = vector.extract_strided_slice %164 {offsets = [0, 0, 0], sizes = [1, 8, 8], strides = [1, 1, 1]} : vector<4x8x8xf32> to vector<1x8x8xf32>
    %166 = vector.shape_cast %165 : vector<1x8x8xf32> to vector<8x8xf32>
    %167 = vector.extract_strided_slice %164 {offsets = [1, 0, 0], sizes = [1, 8, 8], strides = [1, 1, 1]} : vector<4x8x8xf32> to vector<1x8x8xf32>
    %168 = vector.shape_cast %167 : vector<1x8x8xf32> to vector<8x8xf32>
    %169 = vector.extract_strided_slice %164 {offsets = [2, 0, 0], sizes = [1, 8, 8], strides = [1, 1, 1]} : vector<4x8x8xf32> to vector<1x8x8xf32>
    %170 = vector.shape_cast %169 : vector<1x8x8xf32> to vector<8x8xf32>
    %171 = vector.extract_strided_slice %164 {offsets = [3, 0, 0], sizes = [1, 8, 8], strides = [1, 1, 1]} : vector<4x8x8xf32> to vector<1x8x8xf32>
    %172 = vector.shape_cast %171 : vector<1x8x8xf32> to vector<8x8xf32>
    %173 = tpu.concatenate %166, %168, %170, %172 in 1 : vector<8x8xf32>, vector<8x8xf32>, vector<8x8xf32>, vector<8x8xf32> -> vector<8x32xf32>
    %174 = arith.truncf %173 : vector<8x32xf32> to vector<8x32xbf16>
    %cst_53 = arith.constant dense<0.000000e+00> : vector<8x32xf32>
    %175 = tpu.matmul %174, %115, %cst_53 {dimension_numbers = #tpu.dot_dimension_numbers<[1], [0], [0], [1], [0, 0, 1, 1], [], []>} : vector<8x32xbf16>, vector<32x32xbf16>, vector<8x32xf32> -> vector<8x32xf32>
    %176 = vector.broadcast %14 : vector<1x32xf32> to vector<8x32xf32>
    %177 = arith.addf %175, %176 : vector<8x32xf32>
    %178 = arith.addf %177, %110 : vector<8x32xf32>
    %cst_54 = arith.constant dense<0.000000e+00> : vector<8xf32>
    %179 = vector.multi_reduction <add>, %178, %cst_54 [1] : vector<8x32xf32> to vector<8xf32>
    %180 = vector.shape_cast %179 : vector<8xf32> to vector<8x1xf32>
    %cst_55 = arith.constant 3.200000e+01 : f32
    %181 = vector.broadcast %cst_55 : f32 to vector<8x1xf32>
    %182 = arith.divf %180, %181 : vector<8x1xf32>
    %183 = vector.broadcast %182 : vector<8x1xf32> to vector<8x32xf32>
    %184 = arith.subf %178, %183 : vector<8x32xf32>
    %185 = arith.mulf %184, %184 : vector<8x32xf32>
    %cst_56 = arith.constant dense<0.000000e+00> : vector<8xf32>
    %186 = vector.multi_reduction <add>, %185, %cst_56 [1] : vector<8x32xf32> to vector<8xf32>
    %187 = vector.shape_cast %186 : vector<8xf32> to vector<8x1xf32>
    %cst_57 = arith.constant 3.200000e+01 : f32
    %188 = vector.broadcast %cst_57 : f32 to vector<8x1xf32>
    %189 = arith.divf %187, %188 : vector<8x1xf32>
    %190 = vector.broadcast %182 : vector<8x1xf32> to vector<8x32xf32>
    %191 = arith.subf %178, %190 : vector<8x32xf32>
    %cst_58 = arith.constant 9.99999974E-6 : f32
    %192 = vector.broadcast %cst_58 : f32 to vector<8x1xf32>
    %193 = arith.addf %189, %192 : vector<8x1xf32>
    %194 = math.rsqrt %193 : vector<8x1xf32>
    %195 = vector.broadcast %194 : vector<8x1xf32> to vector<8x32xf32>
    %196 = arith.mulf %191, %195 : vector<8x32xf32>
    %197 = vector.broadcast %15 : vector<1x32xf32> to vector<8x32xf32>
    %198 = arith.mulf %196, %197 : vector<8x32xf32>
    %199 = vector.broadcast %16 : vector<1x32xf32> to vector<8x32xf32>
    %200 = arith.addf %198, %199 : vector<8x32xf32>
    %201 = arith.truncf %200 : vector<8x32xf32> to vector<8x32xbf16>
    %c0_59 = arith.constant 0 : index
    %c0_60 = arith.constant 0 : index
    %202 = vector.load %arg14[%c0_59, %c0_60] : memref<32x128xbf16, #tpu.memory_space<vmem>>, vector<32x128xbf16>
    %cst_61 = arith.constant dense<0.000000e+00> : vector<8x128xf32>
    %203 = tpu.matmul %201, %202, %cst_61 {dimension_numbers = #tpu.dot_dimension_numbers<[1], [0], [0], [1], [0, 0, 1, 1], [], []>} : vector<8x32xbf16>, vector<32x128xbf16>, vector<8x128xf32> -> vector<8x128xf32>
    %204 = vector.broadcast %20 : vector<1x128xf32> to vector<8x128xf32>
    %205 = arith.addf %203, %204 : vector<8x128xf32>
    %cst_62 = arith.constant 0.000000e+00 : f32
    %206 = vector.broadcast %cst_62 : f32 to vector<8x128xf32>
    %207 = arith.maximumf %205, %206 : vector<8x128xf32>
    %208 = arith.truncf %207 : vector<8x128xf32> to vector<8x128xbf16>
    %c0_63 = arith.constant 0 : index
    %c0_64 = arith.constant 0 : index
    %209 = vector.load %arg15[%c0_63, %c0_64] : memref<128x32xbf16, #tpu.memory_space<vmem>>, vector<128x32xbf16>
    %cst_65 = arith.constant dense<0.000000e+00> : vector<8x32xf32>
    %210 = tpu.matmul %208, %209, %cst_65 {dimension_numbers = #tpu.dot_dimension_numbers<[1], [0], [0], [1], [0, 0, 1, 1], [], []>} : vector<8x128xbf16>, vector<128x32xbf16>, vector<8x32xf32> -> vector<8x32xf32>
    %211 = vector.broadcast %17 : vector<1x32xf32> to vector<8x32xf32>
    %212 = arith.addf %210, %211 : vector<8x32xf32>
    %213 = arith.addf %212, %200 : vector<8x32xf32>
    %cst_66 = arith.constant dense<0.000000e+00> : vector<8xf32>
    %214 = vector.multi_reduction <add>, %213, %cst_66 [1] : vector<8x32xf32> to vector<8xf32>
    %215 = vector.shape_cast %214 : vector<8xf32> to vector<8x1xf32>
    %cst_67 = arith.constant 3.200000e+01 : f32
    %216 = vector.broadcast %cst_67 : f32 to vector<8x1xf32>
    %217 = arith.divf %215, %216 : vector<8x1xf32>
    %218 = vector.broadcast %217 : vector<8x1xf32> to vector<8x32xf32>
    %219 = arith.subf %213, %218 : vector<8x32xf32>
    %220 = arith.mulf %219, %219 : vector<8x32xf32>
    %cst_68 = arith.constant dense<0.000000e+00> : vector<8xf32>
    %221 = vector.multi_reduction <add>, %220, %cst_68 [1] : vector<8x32xf32> to vector<8xf32>
    %222 = vector.shape_cast %221 : vector<8xf32> to vector<8x1xf32>
    %cst_69 = arith.constant 3.200000e+01 : f32
    %223 = vector.broadcast %cst_69 : f32 to vector<8x1xf32>
    %224 = arith.divf %222, %223 : vector<8x1xf32>
    %225 = vector.broadcast %217 : vector<8x1xf32> to vector<8x32xf32>
    %226 = arith.subf %213, %225 : vector<8x32xf32>
    %cst_70 = arith.constant 9.99999974E-6 : f32
    %227 = vector.broadcast %cst_70 : f32 to vector<8x1xf32>
    %228 = arith.addf %224, %227 : vector<8x1xf32>
    %229 = math.rsqrt %228 : vector<8x1xf32>
    %230 = vector.broadcast %229 : vector<8x1xf32> to vector<8x32xf32>
    %231 = arith.mulf %226, %230 : vector<8x32xf32>
    %232 = vector.broadcast %18 : vector<1x32xf32> to vector<8x32xf32>
    %233 = arith.mulf %231, %232 : vector<8x32xf32>
    %234 = vector.broadcast %19 : vector<1x32xf32> to vector<8x32xf32>
    %235 = arith.addf %233, %234 : vector<8x32xf32>
    %c0_71 = arith.constant 0 : index
    %c0_72 = arith.constant 0 : index
    %c0_73 = arith.constant 0 : index
    %236 = vector.load %arg18[%c0_71, %c0_72, %c0_73] : memref<1x8x32xf32, #tpu.memory_space<vmem>>, vector<1x8x32xf32>
    %237 = vector.shape_cast %236 : vector<1x8x32xf32> to vector<8x32xf32>
    %238 = vector.shape_cast %235 : vector<8x32xf32> to vector<1x8x32xf32>
    tpu.vector_store %arg18[%c0_71, %c0_72, %c0_73], %238 {strides = array<i32>} : memref<1x8x32xf32, #tpu.memory_space<vmem>>, vector<1x8x32xf32>,
    return
  }
  func.func @transform_0(%arg0: i32) -> (i32, i32, i32) {
    %c0_i32 = arith.constant 0 : i32
    %c0_i32_0 = arith.constant 0 : i32
    %c0_i32_1 = arith.constant 0 : i32
    return %arg0, %c0_i32, %c0_i32_0 : i32, i32, i32
  }
  func.func @transform_1(%arg0: i32) -> (i32, i32, i32) {
    %c0_i32 = arith.constant 0 : i32
    %c0_i32_0 = arith.constant 0 : i32
    %c0_i32_1 = arith.constant 0 : i32
    return %arg0, %c0_i32, %c0_i32_0 : i32, i32, i32
  }
  func.func @transform_2(%arg0: i32) -> (i32, i32, i32) {
    %c0_i32 = arith.constant 0 : i32
    %c0_i32_0 = arith.constant 0 : i32
    %c0_i32_1 = arith.constant 0 : i32
    return %arg0, %c0_i32, %c0_i32_0 : i32, i32, i32
  }
  func.func @transform_3(%arg0: i32) -> (i32, i32, i32) {
    %c0_i32 = arith.constant 0 : i32
    %c0_i32_0 = arith.constant 0 : i32
    %c0_i32_1 = arith.constant 0 : i32
    return %arg0, %c0_i32, %c0_i32_0 : i32, i32, i32
  }
  func.func @transform_4(%arg0: i32) -> (i32, i32, i32) {
    %c0_i32 = arith.constant 0 : i32
    %c0_i32_0 = arith.constant 0 : i32
    %c0_i32_1 = arith.constant 0 : i32
    return %arg0, %c0_i32, %c0_i32_0 : i32, i32, i32
  }
  func.func @transform_5(%arg0: i32) -> (i32, i32) {
    %c0_i32 = arith.constant 0 : i32
    %c0_i32_0 = arith.constant 0 : i32
    %c0_i32_1 = arith.constant 0 : i32
    return %c0_i32, %c0_i32_0 : i32, i32
  }
  func.func @transform_6(%arg0: i32) -> (i32, i32) {
    %c0_i32 = arith.constant 0 : i32
    %c0_i32_0 = arith.constant 0 : i32
    %c0_i32_1 = arith.constant 0 : i32
    return %c0_i32, %c0_i32_0 : i32, i32
  }
  func.func @transform_7(%arg0: i32) -> (i32, i32) {
    %c0_i32 = arith.constant 0 : i32
    %c0_i32_0 = arith.constant 0 : i32
    %c0_i32_1 = arith.constant 0 : i32
    return %c0_i32, %c0_i32_0 : i32, i32
  }
  func.func @transform_8(%arg0: i32) -> (i32, i32) {
    %c0_i32 = arith.constant 0 : i32
    %c0_i32_0 = arith.constant 0 : i32
    %c0_i32_1 = arith.constant 0 : i32
    return %c0_i32, %c0_i32_0 : i32, i32
  }
  func.func @transform_9(%arg0: i32) -> (i32, i32) {
    %c0_i32 = arith.constant 0 : i32
    %c0_i32_0 = arith.constant 0 : i32
    %c0_i32_1 = arith.constant 0 : i32
    return %c0_i32, %c0_i32_0 : i32, i32
  }
  func.func @transform_10(%arg0: i32) -> (i32, i32) {
    %c0_i32 = arith.constant 0 : i32
    %c0_i32_0 = arith.constant 0 : i32
    %c0_i32_1 = arith.constant 0 : i32
    return %c0_i32, %c0_i32_0 : i32, i32
  }
  func.func @transform_11(%arg0: i32) -> (i32, i32) {
    %c0_i32 = arith.constant 0 : i32
    %c0_i32_0 = arith.constant 0 : i32
    %c0_i32_1 = arith.constant 0 : i32
    return %c0_i32, %c0_i32_0 : i32, i32
  }
  func.func @transform_12(%arg0: i32) -> (i32, i32) {
    %c0_i32 = arith.constant 0 : i32
    %c0_i32_0 = arith.constant 0 : i32
    %c0_i32_1 = arith.constant 0 : i32
    return %c0_i32, %c0_i32_0 : i32, i32
  }
  func.func @transform_13(%arg0: i32) -> (i32, i32) {
    %c0_i32 = arith.constant 0 : i32
    %c0_i32_0 = arith.constant 0 : i32
    %c0_i32_1 = arith.constant 0 : i32
    return %c0_i32, %c0_i32_0 : i32, i32
  }
  func.func @transform_14(%arg0: i32) -> (i32, i32) {
    %c0_i32 = arith.constant 0 : i32
    %c0_i32_0 = arith.constant 0 : i32
    %c0_i32_1 = arith.constant 0 : i32
    return %c0_i32, %c0_i32_0 : i32, i32
  }
  func.func @transform_15(%arg0: i32) -> (i32, i32) {
    %c0_i32 = arith.constant 0 : i32
    %c0_i32_0 = arith.constant 0 : i32
    %c0_i32_1 = arith.constant 0 : i32
    return %c0_i32, %c0_i32_0 : i32, i32
  }
  func.func @transform_16(%arg0: i32) -> (i32, i32) {
    %c0_i32 = arith.constant 0 : i32
    %c0_i32_0 = arith.constant 0 : i32
    %c0_i32_1 = arith.constant 0 : i32
    return %c0_i32, %c0_i32_0 : i32, i32
  }
  func.func @transform_17(%arg0: i32) -> (i32, i32, i32) {
    %c0_i32 = arith.constant 0 : i32
    %c0_i32_0 = arith.constant 0 : i32
    %c0_i32_1 = arith.constant 0 : i32
    return %arg0, %c0_i32, %c0_i32_0 : i32, i32, i32
  }
}

</mosaic_0001>

<llo_original>
// kernel: tpu_custom_call.1
$region0: #{tpu_custom_call.1}
  #allocation0 [shape = 'u32[]', space=smem, size = 0x4, offset = 0x4, fixed_abs, tag = 'smem constant byte address 0x4 - core index']
  #allocation1 [shape = 'u32[144,128]{1,0:T(1,128)}', space=vmem, size = 0x12000, scoped, tag = 'internal scratch']
  %s0 = inlined_call_operand.hbm [shape: bf16[2,8,32], index: 0, kind: input, shape index: {}]
  %s1 = inlined_call_operand.hbm [shape: bf16[2,8,32], index: 1, kind: input, shape index: {}]
  %s2 = inlined_call_operand.hbm [shape: bf16[2,8,32], index: 2, kind: input, shape index: {}]
  %s3 = inlined_call_operand.vmem [shape: f32[2,8,8], index: 3, kind: input, shape index: {}]
  %s4 = inlined_call_operand.vmem [shape: f32[2,8,8], index: 4, kind: input, shape index: {}]
  %s5 = inlined_call_operand.vmem [shape: bf16[32,32], index: 5, kind: input, shape index: {}]
  %s6 = inlined_call_operand.vmem [shape: bf16[32,32], index: 6, kind: input, shape index: {}]
  %s7 = inlined_call_operand.vmem [shape: bf16[32,32], index: 7, kind: input, shape index: {}]
  %s8 = inlined_call_operand.hbm [shape: bf16[32,32], index: 8, kind: input, shape index: {}]
  %s9 = inlined_call_operand.hbm [shape: bf16[32,32], index: 9, kind: input, shape index: {}]
  %s10 = inlined_call_operand.hbm [shape: bf16[32,32], index: 10, kind: input, shape index: {}]
  %s11 = inlined_call_operand.hbm [shape: bf16[32,32], index: 11, kind: input, shape index: {}]
  %s12 = inlined_call_operand.hbm [shape: bf16[32,32], index: 12, kind: input, shape index: {}]
  %s13 = inlined_call_operand.hbm [shape: bf16[32,128], index: 13, kind: input, shape index: {}]
  %s14 = inlined_call_operand.vmem [shape: bf16[128,32], index: 14, kind: input, shape index: {}]
  %s15 = inlined_call_operand.vmem [shape: f32[1,128], index: 15, kind: input, shape index: {}]
  %s16 = inlined_call_operand.hbm [shape: f32[9,32], index: 16, kind: input, shape index: {}]
  %s17 = inlined_call_operand.hbm [shape: f32[2,8,32], index: 17, kind: output, shape index: {}]
  %s18 = sld [smem:[#allocation0]]
  $region141: #{tpu_custom_call.1} parent=0
    _
  %s20 = ssub.s32 1, %s18
  %s21 = scalar_select 0, %s20, %s18
  $region1: #{tpu_custom_call.1} parent=0
    #allocation2 [shape = 'u8[4096]{0}', space=vmem, size = 0x1000, scoped, tag = 'input window, operand 0']
    #allocation3 [shape = 's32[2]{0}', space=sflag, size = 0x8, scoped, tag = 'scoped memory for tpu_custom_call.1']
    #allocation4 [shape = 's32[2]{0}', space=sflag, size = 0x8, scoped, tag = 'scoped memory for tpu_custom_call.1']
    #allocation5 [shape = 'u8[4096]{0}', space=vmem, size = 0x1000, scoped, tag = 'input window, operand 1']
    #allocation6 [shape = 's32[2]{0}', space=sflag, size = 0x8, scoped, tag = 'scoped memory for tpu_custom_call.1']
    #allocation7 [shape = 'u8[4096]{0}', space=vmem, size = 0x1000, scoped, tag = 'input window, operand 2']
    #allocation8 [shape = 'u8[8192]{0}', space=vmem, size = 0x2000, scoped, tag = 'input window, operand 8, single buffered']
    #allocation9 [shape = 's32[1]{0}', space=sflag, size = 0x4, scoped, tag = 'scoped memory for tpu_custom_call.1']
    #allocation10 [shape = 'u8[8192]{0}', space=vmem, size = 0x2000, scoped, tag = 'input window, operand 9, single buffered']
    #allocation11 [shape = 'u8[8192]{0}', space=vmem, size = 0x2000, scoped, tag = 'input window, operand 10, single buffered']
    #allocation12 [shape = 's32[1]{0}', space=sflag, size = 0x4, scoped, tag = 'scoped memory for tpu_custom_call.1']
    #allocation13 [shape = 'u8[8192]{0}', space=vmem, size = 0x2000, scoped, tag = 'input window, operand 11, single buffered']
    #allocation14 [shape = 'u8[8192]{0}', space=vmem, size = 0x2000, scoped, tag = 'input window, operand 12, single buffered']
    #allocation15 [shape = 's32[1]{0}', space=sflag, size = 0x4, scoped, tag = 'scoped memory for tpu_custom_call.1']
    #allocation16 [shape = 'u8[8192]{0}', space=vmem, size = 0x2000, scoped, tag = 'input window, operand 13, single buffered']
    #allocation17 [shape = 'u8[8192]{0}', space=vmem, size = 0x2000, scoped, tag = 'input window, operand 16, single buffered']
    #allocation18 [shape = 's32[1]{0}', space=sflag, size = 0x4, scoped, tag = 'scoped memory for tpu_custom_call.1']
    #allocation19 [shape = 'u8[8192]{0}', space=vmem, size = 0x2000, scoped, tag = 'output window, operand 0']
    %22 = vsyncpa [#allocation3], 0
    %s23 = scalar_lea.sflag [#allocation3], 1
    %24 = vsyncpa %s23, 0
    %25 = vsyncpa [#allocation6], 0
    %s26 = scalar_lea.sflag [#allocation6], 1
    %27 = vsyncpa %s26, 0
    %28 = vsyncpa [#allocation9], 0
    %29 = vsyncpa [#allocation12], 0
    %30 = vsyncpa [#allocation15], 0
    %31 = vsyncpa [#allocation18], 0
    %32 = vsyncpa [#allocation4], 0
    %s33 = scalar_lea.sflag [#allocation4], 1
    %34 = vsyncpa %s33, 0
    loop: start=0, step=1, limit=4
    $region2: #{tpu_custom_call.1} parent=1 // loop_pre_header
      _
    $region3: #{tpu_custom_call.1} parent=1 // loop_header
      %s36 = sphi 0, %s40
      %p37 = scmp.ge.s32.totalorder %s36, 4
      %s46 = sphi 0, %s48
      %s49 = sphi 0, %s46
      %s50 = sphi 0, %s49
      %s66 = sphi 0, %s50
      %s72 = sphi 0, %s74
      %s75 = sphi 0, %s72
      %s76 = sphi 0, %s75
      %s92 = sphi 0, %s76
      %s98 = sphi 0, %s100
      %s101 = sphi 0, %s98
      %s102 = sphi 0, %s101
      %s118 = sphi 0, %s102
      %s124 = sphi 0, %s126
      %s127 = sphi 0, %s124
      %s128 = sphi 0, %s127
      %s144 = sphi 0, %s128
      %s150 = sphi 0, %s152
      %s153 = sphi 0, %s150
      %s154 = sphi 0, %s153
      %s170 = sphi 0, %s154
      %s174 = sphi 0, %s174
      %s176 = sphi 0, %s174
      %s177 = sphi 0, %s176
      %s191 = sphi 0, %s177
      %s195 = sphi 0, %s195
      %s197 = sphi 0, %s195
      %s198 = sphi 0, %s197
      %s212 = sphi 0, %s198
      %s216 = sphi 0, %s216
      %s218 = sphi 0, %s216
      %s219 = sphi 0, %s218
      %s233 = sphi 0, %s219
      %s237 = sphi 0, %s237
      %s239 = sphi 0, %s237
      %s240 = sphi 0, %s239
      %s254 = sphi 0, %s240
      %s258 = sphi 0, %s258
      %s260 = sphi 0, %s258
      %s261 = sphi 0, %s260
      %s275 = sphi 0, %s261
      %s279 = sphi 0, %s279
      %s281 = sphi 0, %s279
      %s282 = sphi 0, %s281
      %s296 = sphi 0, %s282
      %s300 = sphi 0, %s300
      %s302 = sphi 0, %s300
      %s303 = sphi 0, %s302
      %s317 = sphi 0, %s303
      %s321 = sphi 0, %s321
      %s323 = sphi 0, %s321
      %s324 = sphi 0, %s323
      %s338 = sphi 0, %s324
      %s342 = sphi 0, %s342
      %s344 = sphi 0, %s342
      %s345 = sphi 0, %s344
      %s359 = sphi 0, %s345
      %s363 = sphi 0, %s363
      %s365 = sphi 0, %s363
      %s366 = sphi 0, %s365
      %s380 = sphi 0, %s366
      %s384 = sphi 0, %s384
      %s386 = sphi 0, %s384
      %s387 = sphi 0, %s386
      %s401 = sphi 0, %s387
      %s405 = sphi 0, %s405
      %s407 = sphi 0, %s405
      %s408 = sphi 0, %s407
      %s422 = sphi 0, %s408
      %s428 = sphi 0, %s430
      %s431 = sphi 0, %s428
      %s432 = sphi 0, %s431
      %s448 = sphi 0, %s432
    $region4: #{tpu_custom_call.1} parent=1 // loop_header_branch
      %39 = sbr.rel (%p37) target = $region8
    $region5: #{tpu_custom_call.1} parent=1 // loop_body
      %s41 = ssub.s32 %s36, 1
      %s42 = ssub.s32 %s36, 2
      %s43 = sadd.s32 %s36, 1
      %s44 = ssub.s32 %s36, %s43
      %p45 = scmp.eq.s32.totalorder %s44, 0
      %s47 = sadd.s32 %s46, 1
      %s48 = scalar_select %p45, %s46, %s47
      %p51 = pneg %p45
      %p52 = scmp.eq.s32.totalorder %s36, 1
      %p53 = por %p51, %p52
      %p54 = scmp.ne.s32.totalorder %s46, %s49
      %p55 = scmp.eq.s32.totalorder %s36, 0
      %p56 = por %p54, %p55
      %p57 = scmp.ne.s32.totalorder %s46, %s49
      %p58 = scmp.eq.s32.totalorder %s41, 1
      %p59 = por %p57, %p58
      %p60 = scmp.ne.s32.totalorder %s49, %s50
      %p61 = scmp.eq.s32.totalorder %s41, 0
      %p62 = por %p60, %p61
      %p63 = scmp.ne.s32.totalorder %s49, %s50
      %p64 = scmp.eq.s32.totalorder %s42, 1
      %p65 = por %p63, %p64
      %p67 = scmp.ne.s32.totalorder %s50, %s66
      %p68 = scmp.eq.s32.totalorder %s42, 0
      %p69 = por %p67, %p68
      %s70 = ssub.s32 %s36, %s43
      %p71 = scmp.eq.s32.totalorder %s70, 0
      %s73 = sadd.s32 %s72, 1
      %s74 = scalar_select %p71, %s72, %s73
      %p77 = pneg %p71
      %p78 = scmp.eq.s32.totalorder %s36, 1
      %p79 = por %p77, %p78
      %p80 = scmp.ne.s32.totalorder %s72, %s75
      %p81 = scmp.eq.s32.totalorder %s36, 0
      %p82 = por %p80, %p81
      %p83 = scmp.ne.s32.totalorder %s72, %s75
      %p84 = scmp.eq.s32.totalorder %s41, 1
      %p85 = por %p83, %p84
      %p86 = scmp.ne.s32.totalorder %s75, %s76
      %p87 = scmp.eq.s32.totalorder %s41, 0
      %p88 = por %p86, %p87
      %p89 = scmp.ne.s32.totalorder %s75, %s76
      %p90 = scmp.eq.s32.totalorder %s42, 1
      %p91 = por %p89, %p90
      %p93 = scmp.ne.s32.totalorder %s76, %s92
      %p94 = scmp.eq.s32.totalorder %s42, 0
      %p95 = por %p93, %p94
      %s96 = ssub.s32 %s36, %s43
      %p97 = scmp.eq.s32.totalorder %s96, 0
      %s99 = sadd.s32 %s98, 1
      %s100 = scalar_select %p97, %s98, %s99
      %p103 = pneg %p97
      %p104 = scmp.eq.s32.totalorder %s36, 1
      %p105 = por %p103, %p104
      %p106 = scmp.ne.s32.totalorder %s98, %s101
      %p107 = scmp.eq.s32.totalorder %s36, 0
      %p108 = por %p106, %p107
      %p109 = scmp.ne.s32.totalorder %s98, %s101
      %p110 = scmp.eq.s32.totalorder %s41, 1
      %p111 = por %p109, %p110
      %p112 = scmp.ne.s32.totalorder %s101, %s102
      %p113 = scmp.eq.s32.totalorder %s41, 0
      %p114 = por %p112, %p113
      %p115 = scmp.ne.s32.totalorder %s101, %s102
      %p116 = scmp.eq.s32.totalorder %s42, 1
      %p117 = por %p115, %p116
      %p119 = scmp.ne.s32.totalorder %s102, %s118
      %p120 = scmp.eq.s32.totalorder %s42, 0
      %p121 = por %p119, %p120
      %s122 = ssub.s32 %s36, %s43
      %p123 = scmp.eq.s32.totalorder %s122, 0
      %s125 = sadd.s32 %s124, 1
      %s126 = scalar_select %p123, %s124, %s125
      %p129 = pneg %p123
      %p130 = scmp.eq.s32.totalorder %s36, 1
      %p131 = por %p129, %p130
      %p132 = scmp.ne.s32.totalorder %s124, %s127
      %p133 = scmp.eq.s32.totalorder %s36, 0
      %p134 = por %p132, %p133
      %p135 = scmp.ne.s32.totalorder %s124, %s127
      %p136 = scmp.eq.s32.totalorder %s41, 1
      %p137 = por %p135, %p136
      %p138 = scmp.ne.s32.totalorder %s127, %s128
      %p139 = scmp.eq.s32.totalorder %s41, 0
      %p140 = por %p138, %p139
      %p141 = scmp.ne.s32.totalorder %s127, %s128
      %p142 = scmp.eq.s32.totalorder %s42, 1
      %p143 = por %p141, %p142
      %p145 = scmp.ne.s32.totalorder %s128, %s144
      %p146 = scmp.eq.s32.totalorder %s42, 0
      %p147 = por %p145, %p146
      %s148 = ssub.s32 %s36, %s43
      %p149 = scmp.eq.s32.totalorder %s148, 0
      %s151 = sadd.s32 %s150, 1
      %s152 = scalar_select %p149, %s150, %s151
      %p155 = pneg %p149
      %p156 = scmp.eq.s32.totalorder %s36, 1
      %p157 = por %p155, %p156
      %p158 = scmp.ne.s32.totalorder %s150, %s153
      %p159 = scmp.eq.s32.totalorder %s36, 0
      %p160 = por %p158, %p159
      %p161 = scmp.ne.s32.totalorder %s150, %s153
      %p162 = scmp.eq.s32.totalorder %s41, 1
      %p163 = por %p161, %p162
      %p164 = scmp.ne.s32.totalorder %s153, %s154
      %p165 = scmp.eq.s32.totalorder %s41, 0
      %p166 = por %p164, %p165
      %p167 = scmp.ne.s32.totalorder %s153, %s154
      %p168 = scmp.eq.s32.totalorder %s42, 1
      %p169 = por %p167, %p168
      %p171 = scmp.ne.s32.totalorder %s154, %s170
      %p172 = scmp.eq.s32.totalorder %s42, 0
      %p173 = por %p171, %p172
      %s175 = sadd.s32 %s174, 1
      %p178 = scmp.eq.s32.totalorder %s36, 1
      %p179 = scmp.ne.s32.totalorder %s174, %s176
      %p180 = scmp.eq.s32.totalorder %s36, 0
      %p181 = por %p179, %p180
      %p182 = scmp.ne.s32.totalorder %s174, %s176
      %p183 = scmp.eq.s32.totalorder %s41, 1
      %p184 = por %p182, %p183
      %p185 = scmp.ne.s32.totalorder %s176, %s177
      %p186 = scmp.eq.s32.totalorder %s41, 0
      %p187 = por %p185, %p186
      %p188 = scmp.ne.s32.totalorder %s176, %s177
      %p189 = scmp.eq.s32.totalorder %s42, 1
      %p190 = por %p188, %p189
      %p192 = scmp.ne.s32.totalorder %s177, %s191
      %p193 = scmp.eq.s32.totalorder %s42, 0
      %p194 = por %p192, %p193
      %s196 = sadd.s32 %s195, 1
      %p199 = scmp.eq.s32.totalorder %s36, 1
      %p200 = scmp.ne.s32.totalorder %s195, %s197
      %p201 = scmp.eq.s32.totalorder %s36, 0
      %p202 = por %p200, %p201
      %p203 = scmp.ne.s32.totalorder %s195, %s197
      %p204 = scmp.eq.s32.totalorder %s41, 1
      %p205 = por %p203, %p204
      %p206 = scmp.ne.s32.totalorder %s197, %s198
      %p207 = scmp.eq.s32.totalorder %s41, 0
      %p208 = por %p206, %p207
      %p209 = scmp.ne.s32.totalorder %s197, %s198
      %p210 = scmp.eq.s32.totalorder %s42, 1
      %p211 = por %p209, %p210
      %p213 = scmp.ne.s32.totalorder %s198, %s212
      %p214 = scmp.eq.s32.totalorder %s42, 0
      %p215 = por %p213, %p214
      %s217 = sadd.s32 %s216, 1
      %p220 = scmp.eq.s32.totalorder %s36, 1
      %p221 = scmp.ne.s32.totalorder %s216, %s218
      %p222 = scmp.eq.s32.totalorder %s36, 0
      %p223 = por %p221, %p222
      %p224 = scmp.ne.s32.totalorder %s216, %s218
      %p225 = scmp.eq.s32.totalorder %s41, 1
      %p226 = por %p224, %p225
      %p227 = scmp.ne.s32.totalorder %s218, %s219
      %p228 = scmp.eq.s32.totalorder %s41, 0
      %p229 = por %p227, %p228
      %p230 = scmp.ne.s32.totalorder %s218, %s219
      %p231 = scmp.eq.s32.totalorder %s42, 1
      %p232 = por %p230, %p231
      %p234 = scmp.ne.s32.totalorder %s219, %s233
      %p235 = scmp.eq.s32.totalorder %s42, 0
      %p236 = por %p234, %p235
      %s238 = sadd.s32 %s237, 1
      %p241 = scmp.eq.s32.totalorder %s36, 1
      %p242 = scmp.ne.s32.totalorder %s237, %s239
      %p243 = scmp.eq.s32.totalorder %s36, 0
      %p244 = por %p242, %p243
      %p245 = scmp.ne.s32.totalorder %s237, %s239
      %p246 = scmp.eq.s32.totalorder %s41, 1
      %p247 = por %p245, %p246
      %p248 = scmp.ne.s32.totalorder %s239, %s240
      %p249 = scmp.eq.s32.totalorder %s41, 0
      %p250 = por %p248, %p249
      %p251 = scmp.ne.s32.totalorder %s239, %s240
      %p252 = scmp.eq.s32.totalorder %s42, 1
      %p253 = por %p251, %p252
      %p255 = scmp.ne.s32.totalorder %s240, %s254
      %p256 = scmp.eq.s32.totalorder %s42, 0
      %p257 = por %p255, %p256
      %s259 = sadd.s32 %s258, 1
      %p262 = scmp.eq.s32.totalorder %s36, 1
      %p263 = scmp.ne.s32.totalorder %s258, %s260
      %p264 = scmp.eq.s32.totalorder %s36, 0
      %p265 = por %p263, %p264
      %p266 = scmp.ne.s32.totalorder %s258, %s260
      %p267 = scmp.eq.s32.totalorder %s41, 1
      %p268 = por %p266, %p267
      %p269 = scmp.ne.s32.totalorder %s260, %s261
      %p270 = scmp.eq.s32.totalorder %s41, 0
      %p271 = por %p269, %p270
      %p272 = scmp.ne.s32.totalorder %s260, %s261
      %p273 = scmp.eq.s32.totalorder %s42, 1
      %p274 = por %p272, %p273
      %p276 = scmp.ne.s32.totalorder %s261, %s275
      %p277 = scmp.eq.s32.totalorder %s42, 0
      %p278 = por %p276, %p277
      %s280 = sadd.s32 %s279, 1
      %p283 = scmp.eq.s32.totalorder %s36, 1
      %p284 = scmp.ne.s32.totalorder %s279, %s281
      %p285 = scmp.eq.s32.totalorder %s36, 0
      %p286 = por %p284, %p285
      %p287 = scmp.ne.s32.totalorder %s279, %s281
      %p288 = scmp.eq.s32.totalorder %s41, 1
      %p289 = por %p287, %p288
      %p290 = scmp.ne.s32.totalorder %s281, %s282
      %p291 = scmp.eq.s32.totalorder %s41, 0
      %p292 = por %p290, %p291
      %p293 = scmp.ne.s32.totalorder %s281, %s282
      %p294 = scmp.eq.s32.totalorder %s42, 1
      %p295 = por %p293, %p294
      %p297 = scmp.ne.s32.totalorder %s282, %s296
      %p298 = scmp.eq.s32.totalorder %s42, 0
      %p299 = por %p297, %p298
      %s301 = sadd.s32 %s300, 1
      %p304 = scmp.eq.s32.totalorder %s36, 1
      %p305 = scmp.ne.s32.totalorder %s300, %s302
      %p306 = scmp.eq.s32.totalorder %s36, 0
      %p307 = por %p305, %p306
      %p308 = scmp.ne.s32.totalorder %s300, %s302
      %p309 = scmp.eq.s32.totalorder %s41, 1
      %p310 = por %p308, %p309
      %p311 = scmp.ne.s32.totalorder %s302, %s303
      %p312 = scmp.eq.s32.totalorder %s41, 0
      %p313 = por %p311, %p312
      %p314 = scmp.ne.s32.totalorder %s302, %s303
      %p315 = scmp.eq.s32.totalorder %s42, 1
      %p316 = por %p314, %p315
      %p318 = scmp.ne.s32.totalorder %s303, %s317
      %p319 = scmp.eq.s32.totalorder %s42, 0
      %p320 = por %p318, %p319
      %s322 = sadd.s32 %s321, 1
      %p325 = scmp.eq.s32.totalorder %s36, 1
      %p326 = scmp.ne.s32.totalorder %s321, %s323
      %p327 = scmp.eq.s32.totalorder %s36, 0
      %p328 = por %p326, %p327
      %p329 = scmp.ne.s32.totalorder %s321, %s323
      %p330 = scmp.eq.s32.totalorder %s41, 1
      %p331 = por %p329, %p330
      %p332 = scmp.ne.s32.totalorder %s323, %s324
      %p333 = scmp.eq.s32.totalorder %s41, 0
      %p334 = por %p332, %p333
      %p335 = scmp.ne.s32.totalorder %s323, %s324
      %p336 = scmp.eq.s32.totalorder %s42, 1
      %p337 = por %p335, %p336
      %p339 = scmp.ne.s32.totalorder %s324, %s338
      %p340 = scmp.eq.s32.totalorder %s42, 0
      %p341 = por %p339, %p340
      %s343 = sadd.s32 %s342, 1
      %p346 = scmp.eq.s32.totalorder %s36, 1
      %p347 = scmp.ne.s32.totalorder %s342, %s344
      %p348 = scmp.eq.s32.totalorder %s36, 0
      %p349 = por %p347, %p348
      %p350 = scmp.ne.s32.totalorder %s342, %s344
      %p351 = scmp.eq.s32.totalorder %s41, 1
      %p352 = por %p350, %p351
      %p353 = scmp.ne.s32.totalorder %s344, %s345
      %p354 = scmp.eq.s32.totalorder %s41, 0
      %p355 = por %p353, %p354
      %p356 = scmp.ne.s32.totalorder %s344, %s345
      %p357 = scmp.eq.s32.totalorder %s42, 1
      %p358 = por %p356, %p357
      %p360 = scmp.ne.s32.totalorder %s345, %s359
      %p361 = scmp.eq.s32.totalorder %s42, 0
      %p362 = por %p360, %p361
      %s364 = sadd.s32 %s363, 1
      %p367 = scmp.eq.s32.totalorder %s36, 1
      %p368 = scmp.ne.s32.totalorder %s363, %s365
      %p369 = scmp.eq.s32.totalorder %s36, 0
      %p370 = por %p368, %p369
      %p371 = scmp.ne.s32.totalorder %s363, %s365
      %p372 = scmp.eq.s32.totalorder %s41, 1
      %p373 = por %p371, %p372
      %p374 = scmp.ne.s32.totalorder %s365, %s366
      %p375 = scmp.eq.s32.totalorder %s41, 0
      %p376 = por %p374, %p375
      %p377 = scmp.ne.s32.totalorder %s365, %s366
      %p378 = scmp.eq.s32.totalorder %s42, 1
      %p379 = por %p377, %p378
      %p381 = scmp.ne.s32.totalorder %s366, %s380
      %p382 = scmp.eq.s32.totalorder %s42, 0
      %p383 = por %p381, %p382
      %s385 = sadd.s32 %s384, 1
      %p388 = scmp.eq.s32.totalorder %s36, 1
      %p389 = scmp.ne.s32.totalorder %s384, %s386
      %p390 = scmp.eq.s32.totalorder %s36, 0
      %p391 = por %p389, %p390
      %p392 = scmp.ne.s32.totalorder %s384, %s386
      %p393 = scmp.eq.s32.totalorder %s41, 1
      %p394 = por %p392, %p393
      %p395 = scmp.ne.s32.totalorder %s386, %s387
      %p396 = scmp.eq.s32.totalorder %s41, 0
      %p397 = por %p395, %p396
      %p398 = scmp.ne.s32.totalorder %s386, %s387
      %p399 = scmp.eq.s32.totalorder %s42, 1
      %p400 = por %p398, %p399
      %p402 = scmp.ne.s32.totalorder %s387, %s401
      %p403 = scmp.eq.s32.totalorder %s42, 0
      %p404 = por %p402, %p403
      %s406 = sadd.s32 %s405, 1
      %p409 = scmp.eq.s32.totalorder %s36, 1
      %p410 = scmp.ne.s32.totalorder %s405, %s407
      %p411 = scmp.eq.s32.totalorder %s36, 0
      %p412 = por %p410, %p411
      %p413 = scmp.ne.s32.totalorder %s405, %s407
      %p414 = scmp.eq.s32.totalorder %s41, 1
      %p415 = por %p413, %p414
      %p416 = scmp.ne.s32.totalorder %s407, %s408
      %p417 = scmp.eq.s32.totalorder %s41, 0
      %p418 = por %p416, %p417
      %p419 = scmp.ne.s32.totalorder %s407, %s408
      %p420 = scmp.eq.s32.totalorder %s42, 1
      %p421 = por %p419, %p420
      %p423 = scmp.ne.s32.totalorder %s408, %s422
      %p424 = scmp.eq.s32.totalorder %s42, 0
      %p425 = por %p423, %p424
      %s426 = ssub.s32 %s36, %s43
      %p427 = scmp.eq.s32.totalorder %s426, 0
      %s429 = sadd.s32 %s428, 1
      %s430 = scalar_select %p427, %s428, %s429
      %p433 = pneg %p427
      %p434 = scmp.eq.s32.totalorder %s36, 1
      %p435 = por %p433, %p434
      %p436 = scmp.ne.s32.totalorder %s428, %s431
      %p437 = scmp.eq.s32.totalorder %s36, 0
      %p438 = por %p436, %p437
      %p439 = scmp.ne.s32.totalorder %s428, %s431
      %p440 = scmp.eq.s32.totalorder %s41, 1
      %p441 = por %p439, %p440
      %p442 = scmp.ne.s32.totalorder %s431, %s432
      %p443 = scmp.eq.s32.totalorder %s41, 0
      %p444 = por %p442, %p443
      %p445 = scmp.ne.s32.totalorder %s431, %s432
      %p446 = scmp.eq.s32.totalorder %s42, 1
      %p447 = por %p445, %p446
      %p449 = scmp.ne.s32.totalorder %s432, %s448
      %p450 = scmp.eq.s32.totalorder %s42, 0
      %p451 = por %p449, %p450
      %p452 = scmp.le.s32.totalorder 1, %s36
      %p453 = scmp.lt.s32.totalorder %s36, 3
      %p454 = pnand %p452, %p453
      %p455 = pneg %p454
      // Predicated region
      $region9: #{tpu_custom_call.1} parent=5 // pred_check
        _
      $region10: #{tpu_custom_call.1} parent=5 // pred_check_branch
        %457 = sbr.rel (%p454) target = $region12
      $region11: #{tpu_custom_call.1} parent=5 // pred_region
        %s458 = ssub.s32 %s36, 1
        // Predicated region
        $region13: #{tpu_custom_call.1} parent=11 // pred_check
          %p459 = pneg %p187
        $region14: #{tpu_custom_call.1} parent=11 // pred_check_branch
          %461 = sbr.rel (%p459) target = $region16
        $region15: #{tpu_custom_call.1} parent=11 // pred_region
          _
        $region16: #{tpu_custom_call.1} parent=11 // pred_fallthru
          _
        // Predicated region
        $region17: #{tpu_custom_call.1} parent=11 // pred_check
          %p462 = pneg %p208
        $region18: #{tpu_custom_call.1} parent=11 // pred_check_branch
          %464 = sbr.rel (%p462) target = $region20
        $region19: #{tpu_custom_call.1} parent=11 // pred_region
          _
        $region20: #{tpu_custom_call.1} parent=11 // pred_fallthru
          _
        // Predicated region
        $region21: #{tpu_custom_call.1} parent=11 // pred_check
          %p465 = pneg %p229
        $region22: #{tpu_custom_call.1} parent=11 // pred_check_branch
          %467 = sbr.rel (%p465) target = $region24
        $region23: #{tpu_custom_call.1} parent=11 // pred_region
          _
        $region24: #{tpu_custom_call.1} parent=11 // pred_fallthru
          _
        // Predicated region
        $region25: #{tpu_custom_call.1} parent=11 // pred_check
          %p468 = pneg %p250
        $region26: #{tpu_custom_call.1} parent=11 // pred_check_branch
          %470 = sbr.rel (%p468) target = $region28
        $region27: #{tpu_custom_call.1} parent=11 // pred_region
          %s472 = ssub.s32 256, 256
          %473 = vsyncadd [#allocation9], %s472
          %s474 = sshll.u32 [#allocation8], 4
          %s475 = int_to_ptr.vmem [resolvable:$true] %s474
          %480 = dma.hbm_to_vmem [thread:$0]  %s8, 256, %s475, [#allocation9], 64, 64, 4
        $region28: #{tpu_custom_call.1} parent=11 // pred_fallthru
          _
        // Predicated region
        $region29: #{tpu_custom_call.1} parent=11 // pred_check
          %p481 = pneg %p271
        $region30: #{tpu_custom_call.1} parent=11 // pred_check_branch
          %483 = sbr.rel (%p481) target = $region32
        $region31: #{tpu_custom_call.1} parent=11 // pred_region
          %s485 = ssub.s32 256, 256
          %486 = vsyncadd [#allocation9], %s485
          %s487 = sshll.u32 [#allocation10], 4
          %s488 = int_to_ptr.vmem [resolvable:$true] %s487
          %493 = dma.hbm_to_vmem [thread:$0]  %s9, 256, %s488, [#allocation9], 64, 64, 4
        $region32: #{tpu_custom_call.1} parent=11 // pred_fallthru
          _
        // Predicated region
        $region33: #{tpu_custom_call.1} parent=11 // pred_check
          %p494 = pneg %p292
        $region34: #{tpu_custom_call.1} parent=11 // pred_check_branch
          %496 = sbr.rel (%p494) target = $region36
        $region35: #{tpu_custom_call.1} parent=11 // pred_region
          %s498 = ssub.s32 256, 256
          %499 = vsyncadd [#allocation12], %s498
          %s500 = sshll.u32 [#allocation11], 4
          %s501 = int_to_ptr.vmem [resolvable:$true] %s500
          %506 = dma.hbm_to_vmem [thread:$0]  %s10, 256, %s501, [#allocation12], 64, 64, 4
        $region36: #{tpu_custom_call.1} parent=11 // pred_fallthru
          _
        // Predicated region
        $region37: #{tpu_custom_call.1} parent=11 // pred_check
          %p507 = pneg %p313
        $region38: #{tpu_custom_call.1} parent=11 // pred_check_branch
          %509 = sbr.rel (%p507) target = $region40
        $region39: #{tpu_custom_call.1} parent=11 // pred_region
          %s511 = ssub.s32 256, 256
          %512 = vsyncadd [#allocation12], %s511
          %s513 = sshll.u32 [#allocation13], 4
          %s514 = int_to_ptr.vmem [resolvable:$true] %s513
          %519 = dma.hbm_to_vmem [thread:$0]  %s11, 256, %s514, [#allocation12], 64, 64, 4
        $region40: #{tpu_custom_call.1} parent=11 // pred_fallthru
          _
        // Predicated region
        $region41: #{tpu_custom_call.1} parent=11 // pred_check
          %p520 = pneg %p334
        $region42: #{tpu_custom_call.1} parent=11 // pred_check_branch
          %522 = sbr.rel (%p520) target = $region44
        $region43: #{tpu_custom_call.1} parent=11 // pred_region
          %s524 = ssub.s32 256, 256
          %525 = vsyncadd [#allocation15], %s524
          %s526 = sshll.u32 [#allocation14], 4
          %s527 = int_to_ptr.vmem [resolvable:$true] %s526
          %532 = dma.hbm_to_vmem [thread:$0]  %s12, 256, %s527, [#allocation15], 64, 64, 4
        $region44: #{tpu_custom_call.1} parent=11 // pred_fallthru
          _
        // Predicated region
        $region45: #{tpu_custom_call.1} parent=11 // pred_check
          %p533 = pneg %p355
        $region46: #{tpu_custom_call.1} parent=11 // pred_check_branch
          %535 = sbr.rel (%p533) target = $region48
        $region47: #{tpu_custom_call.1} parent=11 // pred_region
          %s537 = ssub.s32 256, 256
          %538 = vsyncadd [#allocation15], %s537
          %s539 = sshll.u32 [#allocation16], 4
          %s540 = int_to_ptr.vmem [resolvable:$true] %s539
          %545 = dma.hbm_to_vmem [thread:$0]  %s13, 256, %s540, [#allocation15], 64, 64, 4
        $region48: #{tpu_custom_call.1} parent=11 // pred_fallthru
          _
        // Predicated region
        $region49: #{tpu_custom_call.1} parent=11 // pred_check
          %p546 = pneg %p376
        $region50: #{tpu_custom_call.1} parent=11 // pred_check_branch
          %548 = sbr.rel (%p546) target = $region52
        $region51: #{tpu_custom_call.1} parent=11 // pred_region
          _
        $region52: #{tpu_custom_call.1} parent=11 // pred_fallthru
          _
        // Predicated region
        $region53: #{tpu_custom_call.1} parent=11 // pred_check
          %p549 = pneg %p397
        $region54: #{tpu_custom_call.1} parent=11 // pred_check_branch
          %551 = sbr.rel (%p549) target = $region56
        $region55: #{tpu_custom_call.1} parent=11 // pred_region
          _
        $region56: #{tpu_custom_call.1} parent=11 // pred_fallthru
          _
        // Predicated region
        $region57: #{tpu_custom_call.1} parent=11 // pred_check
          %p552 = pneg %p418
        $region58: #{tpu_custom_call.1} parent=11 // pred_check_branch
          %554 = sbr.rel (%p552) target = $region60
        $region59: #{tpu_custom_call.1} parent=11 // pred_region
          %s556 = ssub.s32 256, 256
          %557 = vsyncadd [#allocation18], %s556
          %s558 = sshll.u32 [#allocation17], 4
          %s559 = int_to_ptr.vmem [resolvable:$true] %s558
          %564 = dma.hbm_to_vmem [thread:$0]  %s16, 256, %s559, [#allocation18], 128, 128, 8
        $region60: #{tpu_custom_call.1} parent=11 // pred_fallthru
          _
      $region12: #{tpu_custom_call.1} parent=5 // pred_fallthru
        _
      %p565 = scmp.lt.s32.totalorder %s36, 2
      // Predicated region
      $region61: #{tpu_custom_call.1} parent=5 // pred_check
        %p566 = pneg %p565
      $region62: #{tpu_custom_call.1} parent=5 // pred_check_branch
        %568 = sbr.rel (%p566) target = $region64
      $region63: #{tpu_custom_call.1} parent=5 // pred_region
        // Predicated region
        $region65: #{tpu_custom_call.1} parent=63 // pred_check
          %p569 = pneg %p56
        $region66: #{tpu_custom_call.1} parent=63 // pred_check_branch
          %571 = sbr.rel (%p569) target = $region68
        $region67: #{tpu_custom_call.1} parent=63 // pred_region
          %s572 = sand.u32 %s46, 1
          %s573 = scalar_lea.sflag [#allocation3], %s572
          %s574 = sand.u32 %s46, 1
          %s575 = smul.addr %s574, 4
          %s576 = scalar_lea.vmem [#allocation2], %s575
          %s578 = ssub.s32 64, 64
          %579 = vsyncadd %s573, %s578
          %s580 = smul.addr %s36, 64
          %s581 = scalar_lea.hbm %s0, %s580
          %s583 = sshll.u32 %s576, 4
          %s584 = int_to_ptr.vmem [resolvable:$true] %s583
          %586 = dma.hbm_to_vmem [thread:$0]  %s581, 64, %s584, %s573
        $region68: #{tpu_custom_call.1} parent=63 // pred_fallthru
          _
        // Predicated region
        $region69: #{tpu_custom_call.1} parent=63 // pred_check
          %p587 = pneg %p82
        $region70: #{tpu_custom_call.1} parent=63 // pred_check_branch
          %589 = sbr.rel (%p587) target = $region72
        $region71: #{tpu_custom_call.1} parent=63 // pred_region
          %s590 = sand.u32 %s36, 1
          %s591 = scalar_lea.sflag [#allocation6], %s590
          %s592 = sand.u32 %s72, 1
          %s593 = smul.addr %s592, 4
          %s594 = scalar_lea.vmem [#allocation5], %s593
          %s596 = ssub.s32 64, 64
          %597 = vsyncadd %s591, %s596
          %s598 = smul.addr %s36, 64
          %s599 = scalar_lea.hbm %s1, %s598
          %s601 = sshll.u32 %s594, 4
          %s602 = int_to_ptr.vmem [resolvable:$true] %s601
          %604 = dma.hbm_to_vmem [thread:$0]  %s599, 64, %s602, %s591
        $region72: #{tpu_custom_call.1} parent=63 // pred_fallthru
          _
        // Predicated region
        $region73: #{tpu_custom_call.1} parent=63 // pred_check
          %p605 = pneg %p108
        $region74: #{tpu_custom_call.1} parent=63 // pred_check_branch
          %607 = sbr.rel (%p605) target = $region76
        $region75: #{tpu_custom_call.1} parent=63 // pred_region
          %s608 = sand.u32 %s36, 1
          %s609 = scalar_lea.sflag [#allocation6], %s608
          %s610 = sand.u32 %s98, 1
          %s611 = smul.addr %s610, 4
          %s612 = scalar_lea.vmem [#allocation7], %s611
          %s614 = ssub.s32 64, 64
          %615 = vsyncadd %s609, %s614
          %s616 = smul.addr %s36, 64
          %s617 = scalar_lea.hbm %s2, %s616
          %s619 = sshll.u32 %s612, 4
          %s620 = int_to_ptr.vmem [resolvable:$true] %s619
          %622 = dma.hbm_to_vmem [thread:$0]  %s617, 64, %s620, %s609
        $region76: #{tpu_custom_call.1} parent=63 // pred_fallthru
          _
        // Predicated region
        $region77: #{tpu_custom_call.1} parent=63 // pred_check
          %p623 = pneg %p134
        $region78: #{tpu_custom_call.1} parent=63 // pred_check_branch
          %625 = sbr.rel (%p623) target = $region80
        $region79: #{tpu_custom_call.1} parent=63 // pred_region
          %p626 = scmp.lt.s32.totalorder %s36, 1
          %s627 = scalar_select %p626, %s36, 1
          %s628 = smul.addr %s627, 8
          %s629 = scalar_lea.vmem %s3, %s628
        $region80: #{tpu_custom_call.1} parent=63 // pred_fallthru
          _
        // Predicated region
        $region81: #{tpu_custom_call.1} parent=63 // pred_check
          %p630 = pneg %p160
        $region82: #{tpu_custom_call.1} parent=63 // pred_check_branch
          %632 = sbr.rel (%p630) target = $region84
        $region83: #{tpu_custom_call.1} parent=63 // pred_region
          %p633 = scmp.lt.s32.totalorder %s36, 1
          %s634 = scalar_select %p633, %s36, 1
          %s635 = smul.addr %s634, 8
          %s636 = scalar_lea.vmem %s4, %s635
        $region84: #{tpu_custom_call.1} parent=63 // pred_fallthru
          _
      $region64: #{tpu_custom_call.1} parent=5 // pred_fallthru
        _
      %p637 = scmp.le.s32.totalorder 1, %s36
      %p638 = scmp.lt.s32.totalorder %s36, 3
      %p639 = pnand %p637, %p638
      %p640 = pneg %p639
      // Predicated region
      $region85: #{tpu_custom_call.1} parent=5 // pred_check
        _
      $region86: #{tpu_custom_call.1} parent=5 // pred_check_branch
        %642 = sbr.rel (%p639) target = $region88
      $region87: #{tpu_custom_call.1} parent=5 // pred_region
        %s643 = ssub.s32 %s36, 1
        %s644 = sand.u32 %s49, 1
        %s645 = scalar_lea.sflag [#allocation3], %s644
        %s646 = sand.u32 %s49, 1
        %s647 = smul.addr %s646, 4
        %s648 = scalar_lea.vmem [#allocation2], %s647
        // Predicated region
        $region89: #{tpu_custom_call.1} parent=87 // pred_check
          %p649 = pneg %p62
        $region90: #{tpu_custom_call.1} parent=87 // pred_check_branch
          %651 = sbr.rel (%p649) target = $region92
        $region91: #{tpu_custom_call.1} parent=87 // pred_region
          %652 = dma.done %s645, 64
        $region92: #{tpu_custom_call.1} parent=87 // pred_fallthru
          _
        %s653 = sand.u32 %s41, 1
        %s654 = scalar_lea.sflag [#allocation6], %s653
        %s655 = sand.u32 %s75, 1
        %s656 = smul.addr %s655, 4
        %s657 = scalar_lea.vmem [#allocation5], %s656
        // Predicated region
        $region93: #{tpu_custom_call.1} parent=87 // pred_check
          %p658 = pneg %p88
        $region94: #{tpu_custom_call.1} parent=87 // pred_check_branch
          %660 = sbr.rel (%p658) target = $region96
        $region95: #{tpu_custom_call.1} parent=87 // pred_region
          %661 = dma.done %s654, 64
        $region96: #{tpu_custom_call.1} parent=87 // pred_fallthru
          _
        %s662 = sand.u32 %s41, 1
        %s663 = scalar_lea.sflag [#allocation6], %s662
        %s664 = sand.u32 %s101, 1
        %s665 = smul.addr %s664, 4
        %s666 = scalar_lea.vmem [#allocation7], %s665
        // Predicated region
        $region97: #{tpu_custom_call.1} parent=87 // pred_check
          %p667 = pneg %p114
        $region98: #{tpu_custom_call.1} parent=87 // pred_check_branch
          %669 = sbr.rel (%p667) target = $region100
        $region99: #{tpu_custom_call.1} parent=87 // pred_region
          %670 = dma.done %s663, 64
        $region100: #{tpu_custom_call.1} parent=87 // pred_fallthru
          _
        // Predicated region
        $region101: #{tpu_custom_call.1} parent=87 // pred_check
          %p671 = pneg %p250
        $region102: #{tpu_custom_call.1} parent=87 // pred_check_branch
          %673 = sbr.rel (%p671) target = $region104
        $region103: #{tpu_custom_call.1} parent=87 // pred_region
          %674 = dma.done [#allocation9], 256
        $region104: #{tpu_custom_call.1} parent=87 // pred_fallthru
          _
        // Predicated region
        $region105: #{tpu_custom_call.1} parent=87 // pred_check
          %p675 = pneg %p271
        $region106: #{tpu_custom_call.1} parent=87 // pred_check_branch
          %677 = sbr.rel (%p675) target = $region108
        $region107: #{tpu_custom_call.1} parent=87 // pred_region
          %678 = dma.done [#allocation9], 256
        $region108: #{tpu_custom_call.1} parent=87 // pred_fallthru
          _
        // Predicated region
        $region109: #{tpu_custom_call.1} parent=87 // pred_check
          %p679 = pneg %p292
        $region110: #{tpu_custom_call.1} parent=87 // pred_check_branch
          %681 = sbr.rel (%p679) target = $region112
        $region111: #{tpu_custom_call.1} parent=87 // pred_region
          %682 = dma.done [#allocation12], 256
        $region112: #{tpu_custom_call.1} parent=87 // pred_fallthru
          _
        // Predicated region
        $region113: #{tpu_custom_call.1} parent=87 // pred_check
          %p683 = pneg %p313
        $region114: #{tpu_custom_call.1} parent=87 // pred_check_branch
          %685 = sbr.rel (%p683) target = $region116
        $region115: #{tpu_custom_call.1} parent=87 // pred_region
          %686 = dma.done [#allocation12], 256
        $region116: #{tpu_custom_call.1} parent=87 // pred_fallthru
          _
        // Predicated region
        $region117: #{tpu_custom_call.1} parent=87 // pred_check
          %p687 = pneg %p334
        $region118: #{tpu_custom_call.1} parent=87 // pred_check_branch
          %689 = sbr.rel (%p687) target = $region120
        $region119: #{tpu_custom_call.1} parent=87 // pred_region
          %690 = dma.done [#allocation15], 256
        $region120: #{tpu_custom_call.1} parent=87 // pred_fallthru
          _
        // Predicated region
        $region121: #{tpu_custom_call.1} parent=87 // pred_check
          %p691 = pneg %p355
        $region122: #{tpu_custom_call.1} parent=87 // pred_check_branch
          %693 = sbr.rel (%p691) target = $region124
        $region123: #{tpu_custom_call.1} parent=87 // pred_region
          %694 = dma.done [#allocation15], 256
        $region124: #{tpu_custom_call.1} parent=87 // pred_fallthru
          _
        // Predicated region
        $region125: #{tpu_custom_call.1} parent=87 // pred_check
          %p695 = pneg %p418
        $region126: #{tpu_custom_call.1} parent=87 // pred_check_branch
          %697 = sbr.rel (%p695) target = $region128
        $region127: #{tpu_custom_call.1} parent=87 // pred_region
          %698 = dma.done [#allocation18], 256
        $region128: #{tpu_custom_call.1} parent=87 // pred_fallthru
          _
        %s699 = sand.u32 %s49, 1
        %s700 = scalar_lea.sflag [#allocation3], %s699
        %s701 = sand.u32 %s49, 1
        %s702 = smul.addr %s701, 4
        %s703 = scalar_lea.vmem [#allocation2], %s702
        %p704 = pneg %p62
        %p705 = pneg %p59
        %s706 = sand.u32 %s41, 1
        %s707 = scalar_lea.sflag [#allocation6], %s706
        %s708 = sand.u32 %s75, 1
        %s709 = smul.addr %s708, 4
        %s710 = scalar_lea.vmem [#allocation5], %s709
        %p711 = pneg %p88
        %p712 = pneg %p85
        %s713 = sand.u32 %s41, 1
        %s714 = scalar_lea.sflag [#allocation6], %s713
        %s715 = sand.u32 %s101, 1
        %s716 = smul.addr %s715, 4
        %s717 = scalar_lea.vmem [#allocation7], %s716
        %p718 = pneg %p114
        %p719 = pneg %p111
        %p720 = scmp.lt.s32.totalorder %s41, 1
        %s721 = scalar_select %p720, %s41, 1
        %s722 = smul.addr %s721, 8
        %s723 = scalar_lea.vmem %s3, %s722
        %p724 = pneg %p140
        %p725 = pneg %p137
        %p726 = scmp.lt.s32.totalorder %s41, 1
        %s727 = scalar_select %p726, %s41, 1
        %s728 = smul.addr %s727, 8
        %s729 = scalar_lea.vmem %s4, %s728
        %p730 = pneg %p166
        %p731 = pneg %p163
        %p732 = pneg %p187
        %p733 = pneg %p184
        %p734 = pneg %p208
        %p735 = pneg %p205
        %p736 = pneg %p229
        %p737 = pneg %p226
        %p738 = pneg %p250
        %p739 = pneg %p247
        %p740 = pneg %p271
        %p741 = pneg %p268
        %p742 = pneg %p292
        %p743 = pneg %p289
        %p744 = pneg %p313
        %p745 = pneg %p310
        %p746 = pneg %p334
        %p747 = pneg %p331
        %p748 = pneg %p355
        %p749 = pneg %p352
        %p750 = pneg %p376
        %p751 = pneg %p373
        %p752 = pneg %p397
        %p753 = pneg %p394
        %p754 = pneg %p418
        %p755 = pneg %p415
        %p756 = pneg %p444
        %p757 = pneg %p441
        %s758 = sand.u32 %s431, 1
        %s759 = scalar_lea.sflag [#allocation4], %s758
        %s760 = sand.u32 %s431, 1
        %s761 = smul.addr %s760, 8
        %s762 = scalar_lea.vmem [#allocation19], %s761
        %p763 = scmp.lt.s32.totalorder %s41, 1
        %s764 = scalar_select %p763, %s41, 1
        %s765 = smul.addr %s764, 8
        %s766 = scalar_lea.vmem %s3, %s765
        %p767 = scmp.lt.s32.totalorder %s41, 1
        %s768 = scalar_select %p767, %s41, 1
        %s769 = smul.addr %s768, 8
        %s770 = scalar_lea.vmem %s4, %s769
        %v772 = vld [vmem:[%s648] sm:$0xf]
        %v773 = vld [vmem:[%s657] sm:$0xf]
        %v774 = vld [vmem:[%s666] sm:$0xf]
        %v775 = vld [vmem:[%s766] sm:$0xff]
        %v776 = vld [vmem:[%s770] sm:$0xff]
        %v777 = vld [vmem:[#allocation17] sm:$0xff]
        %v778 = vld [vmem:[#allocation17 + $0x8] sm:$0x1]
        %v779 = vld [vmem:[%s15] sm:$0x1]
        %v780 = vld [vmem:[%s5] sm:$0xf]
        %v781 = vld [vmem:[%s5 + $0x4] sm:$0xf]
        %v782 = vld [vmem:[%s5 + $0x8] sm:$0xf]
        %v783 = vld [vmem:[%s5 + $0xc] sm:$0xf]
        %v784 = vld [vmem:[%s6] sm:$0xf]
        %v785 = vld [vmem:[%s6 + $0x4] sm:$0xf]
        %v786 = vld [vmem:[%s6 + $0x8] sm:$0xf]
        %v787 = vld [vmem:[%s6 + $0xc] sm:$0xf]
        %v788 = vld [vmem:[%s7] sm:$0xf]
        %v789 = vld [vmem:[%s7 + $0x4] sm:$0xf]
        %v790 = vld [vmem:[%s7 + $0x8] sm:$0xf]
        %v791 = vld [vmem:[%s7 + $0xc] sm:$0xf]
        %v792 = vld [vmem:[#allocation8] sm:$0xf]
        %v793 = vld [vmem:[#allocation8 + $0x4] sm:$0xf]
        %v794 = vld [vmem:[#allocation8 + $0x8] sm:$0xf]
        %v795 = vld [vmem:[#allocation8 + $0xc] sm:$0xf]
        %v800 = vunpack.c.l.b16 %v780
        %v801 = vunpack.c.l.b16 %v781
        %v802 = vunpack.c.l.b16 %v782
        %v803 = vunpack.c.l.b16 %v783
        %v804 = vpack.c.b16 %v801, %v800
        %v805 = vpack.c.b16 %v803, %v802
        %vm808 = vcmask 261120
        %v810 = vsel %vm808, %v772, 0
        %812 = vmatprep.subr.bf16.mxu0 0
        %813 = vmatpush1.bf16.msra.mxu0 0
        %814 = vmatprep.subr.bf16.mxu0 0
        %815 = vmatpush1.bf16.msra.mxu0 0
        %816 = vmatprep.subr.bf16.mxu0 0
        %817 = vmatpush1.bf16.msra.mxu0 0
        %818 = vmatprep.subr.bf16.mxu0 0
        %819 = vmatpush1.bf16.msra.mxu0 0
        %820 = vmatprep.subr.bf16.mxu0 0
        %821 = vmatpush1.bf16.msra.mxu0 0
        %822 = vmatprep.subr.bf16.mxu0 0
        %823 = vmatpush1.bf16.msra.mxu0 0
        %824 = vmatprep.subr.bf16.mxu0 0
        %825 = vmatpush1.bf16.msra.mxu0 %v805
        %826 = vmatprep.subr.bf16.mxu0 0
        %827 = vmatpush1.bf16.msra.mxu0 %v804
        %828 = vmatprep.subr.bf16.mxu0 0
        %829 = vmatpush2.bf16.msra.mxu0 0
        %830 = vmatprep.subr.bf16.mxu0 0
        %831 = vmatpush2.bf16.msra.mxu0 0
        %832 = vmatprep.subr.bf16.mxu0 0
        %833 = vmatpush2.bf16.msra.mxu0 0
        %834 = vmatprep.subr.bf16.mxu0 0
        %835 = vmatpush2.bf16.msra.mxu0 0
        %836 = vmatprep.subr.bf16.mxu0 0
        %837 = vmatpush2.bf16.msra.mxu0 0
        %838 = vmatprep.subr.bf16.mxu0 0
        %839 = vmatpush2.bf16.msra.mxu0 0
        %840 = vmatprep.subr.bf16.mxu0 0
        %841 = vmatpush2.bf16.msra.mxu0 0
        %842 = vmatprep.subr.bf16.mxu0 0
        %843 = vmatpush2.bf16.msra.mxu0 0
        %844 = vmatprep.mubr.bf16.mxu0 0
        %845 = vmatmul.mubr.bf16.gmra.mxu0 %v810
        %v846 = vpop.f32.mrf.mxu0
        %v847 = vadd.f32 0.0, %v846
        %v848 = vpop.f32.mrf.mxu0
        %v849 = vpop.f32.mrf.mxu0
        %v850 = vpop.f32.mrf.mxu0
        %851 = vdwg.mxu0
        %v856 = vunpack.c.l.b16 %v784
        %v857 = vunpack.c.l.b16 %v785
        %v858 = vunpack.c.l.b16 %v786
        %v859 = vunpack.c.l.b16 %v787
        %v860 = vpack.c.b16 %v857, %v856
        %v861 = vpack.c.b16 %v859, %v858
        %864 = vmatprep.subr.bf16.mxu0 0
        %865 = vmatpush1.bf16.msra.mxu0 0
        %866 = vmatprep.subr.bf16.mxu0 0
        %867 = vmatpush1.bf16.msra.mxu0 0
        %868 = vmatprep.subr.bf16.mxu0 0
        %869 = vmatpush1.bf16.msra.mxu0 0
        %870 = vmatprep.subr.bf16.mxu0 0
        %871 = vmatpush1.bf16.msra.mxu0 0
        %872 = vmatprep.subr.bf16.mxu0 0
        %873 = vmatpush1.bf16.msra.mxu0 0
        %874 = vmatprep.subr.bf16.mxu0 0
        %875 = vmatpush1.bf16.msra.mxu0 0
        %876 = vmatprep.subr.bf16.mxu0 0
        %877 = vmatpush1.bf16.msra.mxu0 %v861
        %878 = vmatprep.subr.bf16.mxu0 0
        %879 = vmatpush1.bf16.msra.mxu0 %v860
        %880 = vmatprep.subr.bf16.mxu0 0
        %881 = vmatpush2.bf16.msra.mxu0 0
        %882 = vmatprep.subr.bf16.mxu0 0
        %883 = vmatpush2.bf16.msra.mxu0 0
        %884 = vmatprep.subr.bf16.mxu0 0
        %885 = vmatpush2.bf16.msra.mxu0 0
        %886 = vmatprep.subr.bf16.mxu0 0
        %887 = vmatpush2.bf16.msra.mxu0 0
        %888 = vmatprep.subr.bf16.mxu0 0
        %889 = vmatpush2.bf16.msra.mxu0 0
        %890 = vmatprep.subr.bf16.mxu0 0
        %891 = vmatpush2.bf16.msra.mxu0 0
        %892 = vmatprep.subr.bf16.mxu0 0
        %893 = vmatpush2.bf16.msra.mxu0 0
        %894 = vmatprep.subr.bf16.mxu0 0
        %895 = vmatpush2.bf16.msra.mxu0 0
        %896 = vmatprep.mubr.bf16.mxu0 0
        %897 = vmatmul.mubr.bf16.gmra.mxu0 %v810
        %v898 = vpop.f32.mrf.mxu0
        %v899 = vadd.f32 0.0, %v898
        %v900 = vpop.f32.mrf.mxu0
        %v901 = vpop.f32.mrf.mxu0
        %v902 = vpop.f32.mrf.mxu0
        %903 = vdwg.mxu0
        %v908 = vunpack.c.l.b16 %v788
        %v909 = vunpack.c.l.b16 %v789
        %v910 = vunpack.c.l.b16 %v790
        %v911 = vunpack.c.l.b16 %v791
        %v912 = vpack.c.b16 %v909, %v908
        %v913 = vpack.c.b16 %v911, %v910
        %916 = vmatprep.subr.bf16.mxu0 0
        %917 = vmatpush1.bf16.msra.mxu0 0
        %918 = vmatprep.subr.bf16.mxu0 0
        %919 = vmatpush1.bf16.msra.mxu0 0
        %920 = vmatprep.subr.bf16.mxu0 0
        %921 = vmatpush1.bf16.msra.mxu0 0
        %922 = vmatprep.subr.bf16.mxu0 0
        %923 = vmatpush1.bf16.msra.mxu0 0
        %924 = vmatprep.subr.bf16.mxu0 0
        %925 = vmatpush1.bf16.msra.mxu0 0
        %926 = vmatprep.subr.bf16.mxu0 0
        %927 = vmatpush1.bf16.msra.mxu0 0
        %928 = vmatprep.subr.bf16.mxu0 0
        %929 = vmatpush1.bf16.msra.mxu0 %v913
        %930 = vmatprep.subr.bf16.mxu0 0
        %931 = vmatpush1.bf16.msra.mxu0 %v912
        %932 = vmatprep.subr.bf16.mxu0 0
        %933 = vmatpush2.bf16.msra.mxu0 0
        %934 = vmatprep.subr.bf16.mxu0 0
        %935 = vmatpush2.bf16.msra.mxu0 0
        %936 = vmatprep.subr.bf16.mxu0 0
        %937 = vmatpush2.bf16.msra.mxu0 0
        %938 = vmatprep.subr.bf16.mxu0 0
        %939 = vmatpush2.bf16.msra.mxu0 0
        %940 = vmatprep.subr.bf16.mxu0 0
        %941 = vmatpush2.bf16.msra.mxu0 0
        %942 = vmatprep.subr.bf16.mxu0 0
        %943 = vmatpush2.bf16.msra.mxu0 0
        %944 = vmatprep.subr.bf16.mxu0 0
        %945 = vmatpush2.bf16.msra.mxu0 0
        %946 = vmatprep.subr.bf16.mxu0 0
        %947 = vmatpush2.bf16.msra.mxu0 0
        %948 = vmatprep.mubr.bf16.mxu0 0
        %949 = vmatmul.mubr.bf16.gmra.mxu0 %v810
        %v950 = vpop.f32.mrf.mxu0
        %v951 = vadd.f32 0.0, %v950
        %v952 = vpop.f32.mrf.mxu0
        %v953 = vpop.f32.mrf.mxu0
        %v954 = vpop.f32.mrf.mxu0
        %955 = vdwg.mxu0
        %957 = vrot.lane.b32.xlu0 %v847, 120
        %v958 = vpop.permute.xlu0 %957
        %960 = vrot.lane.b32.xlu0 %v847, 112
        %v961 = vpop.permute.xlu0 %960
        %963 = vrot.lane.b32.xlu0 %v847, 104
        %v964 = vpop.permute.xlu0 %963
        %v966 = vpack.c.bf16 %v847, %v847
        %v967 = vpack.c.bf16 %v958, %v958
        %v968 = vpack.c.bf16 %v961, %v961
        %v969 = vpack.c.bf16 %v964, %v964
        %971 = vrot.lane.b32.xlu0 %v899, 120
        %v972 = vpop.permute.xlu0 %971
        %974 = vrot.lane.b32.xlu0 %v899, 112
        %v975 = vpop.permute.xlu0 %974
        %977 = vrot.lane.b32.xlu0 %v899, 104
        %v978 = vpop.permute.xlu0 %977
        %v980 = vpack.c.bf16 %v899, %v899
        %v981 = vpack.c.bf16 %v972, %v972
        %v982 = vpack.c.bf16 %v975, %v975
        %v983 = vpack.c.bf16 %v978, %v978
        %985 = vrot.lane.b32.xlu0 %v951, 120
        %v986 = vpop.permute.xlu0 %985
        %988 = vrot.lane.b32.xlu0 %v951, 112
        %v989 = vpop.permute.xlu0 %988
        %991 = vrot.lane.b32.xlu0 %v951, 104
        %v992 = vpop.permute.xlu0 %991
        %v994 = vpack.c.bf16 %v951, %v951
        %v995 = vpack.c.bf16 %v986, %v986
        %v996 = vpack.c.bf16 %v989, %v989
        %v997 = vpack.c.bf16 %v992, %v992
        %vm998 = vcmask 64512
        %v1000 = vsel %vm998, %v966, 0
        %v1003 = vsel %vm998, %v980, 0
        %1005 = vmatprep.subr.bf16.mxu0 0
        %1006 = vmatpush1.bf16.xpose.msra.mxu0 0
        %1007 = vmatprep.subr.bf16.mxu0 0
        %1008 = vmatpush1.bf16.xpose.msra.mxu0 0
        %1009 = vmatprep.subr.bf16.mxu0 0
        %1010 = vmatpush1.bf16.xpose.msra.mxu0 0
        %1011 = vmatprep.subr.bf16.mxu0 0
        %1012 = vmatpush1.bf16.xpose.msra.mxu0 0
        %1013 = vmatprep.subr.bf16.mxu0 0
        %1014 = vmatpush1.bf16.xpose.msra.mxu0 0
        %1015 = vmatprep.subr.bf16.mxu0 0
        %1016 = vmatpush1.bf16.xpose.msra.mxu0 0
        %1017 = vmatprep.subr.bf16.mxu0 0
        %1018 = vmatpush1.bf16.xpose.msra.mxu0 0
        %1019 = vmatprep.subr.bf16.mxu0 0
        %1020 = vmatpush1.bf16.xpose.msra.mxu0 %v1003
        %1021 = vmatprep.subr.bf16.mxu0 0
        %1022 = vmatpush2.bf16.xpose.msra.mxu0 0
        %1023 = vmatprep.subr.bf16.mxu0 0
        %1024 = vmatpush2.bf16.xpose.msra.mxu0 0
        %1025 = vmatprep.subr.bf16.mxu0 0
        %1026 = vmatpush2.bf16.xpose.msra.mxu0 0
        %1027 = vmatprep.subr.bf16.mxu0 0
        %1028 = vmatpush2.bf16.xpose.msra.mxu0 0
        %1029 = vmatprep.subr.bf16.mxu0 0
        %1030 = vmatpush2.bf16.xpose.msra.mxu0 0
        %1031 = vmatprep.subr.bf16.mxu0 0
        %1032 = vmatpush2.bf16.xpose.msra.mxu0 0
        %1033 = vmatprep.subr.bf16.mxu0 0
        %1034 = vmatpush2.bf16.xpose.msra.mxu0 0
        %1035 = vmatprep.subr.bf16.mxu0 0
        %1036 = vmatpush2.bf16.xpose.msra.mxu0 0
        %1037 = vmatprep.mubr.bf16.mxu0 0
        %1038 = vmatmul.mubr.bf16.gmra.mxu0 %v1000
        %v1039 = vpop.f32.mrf.mxu0
        %v1040 = vadd.f32 %v776, %v1039
        %v1041 = vpop.f32.mrf.mxu0
        %v1042 = vpop.f32.mrf.mxu0
        %v1043 = vpop.f32.mrf.mxu0
        %1044 = vdwg.mxu0
        %v1046 = vsel %vm998, %v967, 0
        %v1049 = vsel %vm998, %v981, 0
        %1051 = vmatprep.subr.bf16.mxu0 0
        %1052 = vmatpush1.bf16.xpose.msra.mxu0 0
        %1053 = vmatprep.subr.bf16.mxu0 0
        %1054 = vmatpush1.bf16.xpose.msra.mxu0 0
        %1055 = vmatprep.subr.bf16.mxu0 0
        %1056 = vmatpush1.bf16.xpose.msra.mxu0 0
        %1057 = vmatprep.subr.bf16.mxu0 0
        %1058 = vmatpush1.bf16.xpose.msra.mxu0 0
        %1059 = vmatprep.subr.bf16.mxu0 0
        %1060 = vmatpush1.bf16.xpose.msra.mxu0 0
        %1061 = vmatprep.subr.bf16.mxu0 0
        %1062 = vmatpush1.bf16.xpose.msra.mxu0 0
        %1063 = vmatprep.subr.bf16.mxu0 0
        %1064 = vmatpush1.bf16.xpose.msra.mxu0 0
        %1065 = vmatprep.subr.bf16.mxu0 0
        %1066 = vmatpush1.bf16.xpose.msra.mxu0 %v1049
        %1067 = vmatprep.subr.bf16.mxu0 0
        %1068 = vmatpush2.bf16.xpose.msra.mxu0 0
        %1069 = vmatprep.subr.bf16.mxu0 0
        %1070 = vmatpush2.bf16.xpose.msra.mxu0 0
        %1071 = vmatprep.subr.bf16.mxu0 0
        %1072 = vmatpush2.bf16.xpose.msra.mxu0 0
        %1073 = vmatprep.subr.bf16.mxu0 0
        %1074 = vmatpush2.bf16.xpose.msra.mxu0 0
        %1075 = vmatprep.subr.bf16.mxu0 0
        %1076 = vmatpush2.bf16.xpose.msra.mxu0 0
        %1077 = vmatprep.subr.bf16.mxu0 0
        %1078 = vmatpush2.bf16.xpose.msra.mxu0 0
        %1079 = vmatprep.subr.bf16.mxu0 0
        %1080 = vmatpush2.bf16.xpose.msra.mxu0 0
        %1081 = vmatprep.subr.bf16.mxu0 0
        %1082 = vmatpush2.bf16.xpose.msra.mxu0 0
        %1083 = vmatprep.mubr.bf16.mxu0 0
        %1084 = vmatmul.mubr.bf16.gmra.mxu0 %v1046
        %v1085 = vpop.f32.mrf.mxu0
        %v1086 = vadd.f32 %v776, %v1085
        %v1087 = vpop.f32.mrf.mxu0
        %v1088 = vpop.f32.mrf.mxu0
        %v1089 = vpop.f32.mrf.mxu0
        %1090 = vdwg.mxu0
        %v1092 = vsel %vm998, %v968, 0
        %v1095 = vsel %vm998, %v982, 0
        %1097 = vmatprep.subr.bf16.mxu0 0
        %1098 = vmatpush1.bf16.xpose.msra.mxu0 0
        %1099 = vmatprep.subr.bf16.mxu0 0
        %1100 = vmatpush1.bf16.xpose.msra.mxu0 0
        %1101 = vmatprep.subr.bf16.mxu0 0
        %1102 = vmatpush1.bf16.xpose.msra.mxu0 0
        %1103 = vmatprep.subr.bf16.mxu0 0
        %1104 = vmatpush1.bf16.xpose.msra.mxu0 0
        %1105 = vmatprep.subr.bf16.mxu0 0
        %1106 = vmatpush1.bf16.xpose.msra.mxu0 0
        %1107 = vmatprep.subr.bf16.mxu0 0
        %1108 = vmatpush1.bf16.xpose.msra.mxu0 0
        %1109 = vmatprep.subr.bf16.mxu0 0
        %1110 = vmatpush1.bf16.xpose.msra.mxu0 0
        %1111 = vmatprep.subr.bf16.mxu0 0
        %1112 = vmatpush1.bf16.xpose.msra.mxu0 %v1095
        %1113 = vmatprep.subr.bf16.mxu0 0
        %1114 = vmatpush2.bf16.xpose.msra.mxu0 0
        %1115 = vmatprep.subr.bf16.mxu0 0
        %1116 = vmatpush2.bf16.xpose.msra.mxu0 0
        %1117 = vmatprep.subr.bf16.mxu0 0
        %1118 = vmatpush2.bf16.xpose.msra.mxu0 0
        %1119 = vmatprep.subr.bf16.mxu0 0
        %1120 = vmatpush2.bf16.xpose.msra.mxu0 0
        %1121 = vmatprep.subr.bf16.mxu0 0
        %1122 = vmatpush2.bf16.xpose.msra.mxu0 0
        %1123 = vmatprep.subr.bf16.mxu0 0
        %1124 = vmatpush2.bf16.xpose.msra.mxu0 0
        %1125 = vmatprep.subr.bf16.mxu0 0
        %1126 = vmatpush2.bf16.xpose.msra.mxu0 0
        %1127 = vmatprep.subr.bf16.mxu0 0
        %1128 = vmatpush2.bf16.xpose.msra.mxu0 0
        %1129 = vmatprep.mubr.bf16.mxu0 0
        %1130 = vmatmul.mubr.bf16.gmra.mxu0 %v1092
        %v1131 = vpop.f32.mrf.mxu0
        %v1132 = vadd.f32 %v776, %v1131
        %v1133 = vpop.f32.mrf.mxu0
        %v1134 = vpop.f32.mrf.mxu0
        %v1135 = vpop.f32.mrf.mxu0
        %1136 = vdwg.mxu0
        %v1138 = vsel %vm998, %v969, 0
        %v1141 = vsel %vm998, %v983, 0
        %1143 = vmatprep.subr.bf16.mxu0 0
        %1144 = vmatpush1.bf16.xpose.msra.mxu0 0
        %1145 = vmatprep.subr.bf16.mxu0 0
        %1146 = vmatpush1.bf16.xpose.msra.mxu0 0
        %1147 = vmatprep.subr.bf16.mxu0 0
        %1148 = vmatpush1.bf16.xpose.msra.mxu0 0
        %1149 = vmatprep.subr.bf16.mxu0 0
        %1150 = vmatpush1.bf16.xpose.msra.mxu0 0
        %1151 = vmatprep.subr.bf16.mxu0 0
        %1152 = vmatpush1.bf16.xpose.msra.mxu0 0
        %1153 = vmatprep.subr.bf16.mxu0 0
        %1154 = vmatpush1.bf16.xpose.msra.mxu0 0
        %1155 = vmatprep.subr.bf16.mxu0 0
        %1156 = vmatpush1.bf16.xpose.msra.mxu0 0
        %1157 = vmatprep.subr.bf16.mxu0 0
        %1158 = vmatpush1.bf16.xpose.msra.mxu0 %v1141
        %1159 = vmatprep.subr.bf16.mxu0 0
        %1160 = vmatpush2.bf16.xpose.msra.mxu0 0
        %1161 = vmatprep.subr.bf16.mxu0 0
        %1162 = vmatpush2.bf16.xpose.msra.mxu0 0
        %1163 = vmatprep.subr.bf16.mxu0 0
        %1164 = vmatpush2.bf16.xpose.msra.mxu0 0
        %1165 = vmatprep.subr.bf16.mxu0 0
        %1166 = vmatpush2.bf16.xpose.msra.mxu0 0
        %1167 = vmatprep.subr.bf16.mxu0 0
        %1168 = vmatpush2.bf16.xpose.msra.mxu0 0
        %1169 = vmatprep.subr.bf16.mxu0 0
        %1170 = vmatpush2.bf16.xpose.msra.mxu0 0
        %1171 = vmatprep.subr.bf16.mxu0 0
        %1172 = vmatpush2.bf16.xpose.msra.mxu0 0
        %1173 = vmatprep.subr.bf16.mxu0 0
        %1174 = vmatpush2.bf16.xpose.msra.mxu0 0
        %1175 = vmatprep.mubr.bf16.mxu0 0
        %1176 = vmatmul.mubr.bf16.gmra.mxu0 %v1138
        %v1177 = vpop.f32.mrf.mxu0
        %v1178 = vadd.f32 %v776, %v1177
        %v1179 = vpop.f32.mrf.mxu0
        %v1180 = vpop.f32.mrf.mxu0
        %v1181 = vpop.f32.mrf.mxu0
        %1182 = vdwg.mxu0
        %v1183 = vsel %vm998, %v1040, -inf
        %1184 = vmax.xlane.f32.xlu0 %v1183
        %v1185 = vpop.xlane.xlu0 %1184
        %v1186 = vsel %vm998, %v1086, -inf
        %1187 = vmax.xlane.f32.xlu0 %v1186
        %v1188 = vpop.xlane.xlu0 %1187
        %v1189 = vsel %vm998, %v1132, -inf
        %1190 = vmax.xlane.f32.xlu0 %v1189
        %v1191 = vpop.xlane.xlu0 %1190
        %v1192 = vsel %vm998, %v1178, -inf
        %1193 = vmax.xlane.f32.xlu0 %v1192
        %v1194 = vpop.xlane.xlu0 %1193
        %v1195 = vsub.f32 %v1040, %v1185
        %v1196 = vsub.f32 %v1086, %v1188
        %v1197 = vsub.f32 %v1132, %v1191
        %v1198 = vsub.f32 %v1178, %v1194
        %v1199 = vmul.f32 %v1195, 1.442695
        %v1200 = vpow.pop %v1199
        %v1201 = vmul.f32 %v1196, 1.442695
        %v1202 = vpow.pop %v1201
        %v1203 = vmul.f32 %v1197, 1.442695
        %v1204 = vpow.pop %v1203
        %v1205 = vmul.f32 %v1198, 1.442695
        %v1206 = vpow.pop %v1205
        %v1207 = vsel %vm998, %v1200, 0.0
        %1208 = vadd.xlane.f32.xlu0 %v1207
        %v1209 = vpop.xlane.xlu0 %1208
        %v1210 = vsel %vm998, %v1202, 0.0
        %1211 = vadd.xlane.f32.xlu0 %v1210
        %v1212 = vpop.xlane.xlu0 %1211
        %v1213 = vsel %vm998, %v1204, 0.0
        %1214 = vadd.xlane.f32.xlu0 %v1213
        %v1215 = vpop.xlane.xlu0 %1214
        %v1216 = vsel %vm998, %v1206, 0.0
        %1217 = vadd.xlane.f32.xlu0 %v1216
        %v1218 = vpop.xlane.xlu0 %1217
        %v1219 = vrcp.pop %v1209
        %v1220 = vrcp.pop %v1212
        %v1221 = vrcp.pop %v1215
        %v1222 = vrcp.pop %v1218
        %v1223 = vmul.f32 %v1200, %v1219
        %v1224 = vmul.f32 %v1202, %v1220
        %v1225 = vmul.f32 %v1204, %v1221
        %v1226 = vmul.f32 %v1206, %v1222
        %v1227 = vpack.c.bf16 %v1223, %v1223
        %v1228 = vpack.c.bf16 %v1224, %v1224
        %v1229 = vpack.c.bf16 %v1225, %v1225
        %v1230 = vpack.c.bf16 %v1226, %v1226
        %v1232 = vsel %vm998, %v1227, 0
        %vm1234 = vcmask 1043456
        %v1236 = vsel %vm1234, %v994, 0
        %1238 = vmatprep.subr.bf16.mxu0 0
        %1239 = vmatpush1.bf16.msra.mxu0 0
        %1240 = vmatprep.subr.bf16.mxu0 0
        %1241 = vmatpush1.bf16.msra.mxu0 0
        %1242 = vmatprep.subr.bf16.mxu0 0
        %1243 = vmatpush1.bf16.msra.mxu0 0
        %1244 = vmatprep.subr.bf16.mxu0 0
        %1245 = vmatpush1.bf16.msra.mxu0 0
        %1246 = vmatprep.subr.bf16.mxu0 0
        %1247 = vmatpush1.bf16.msra.mxu0 0
        %1248 = vmatprep.subr.bf16.mxu0 0
        %1249 = vmatpush1.bf16.msra.mxu0 0
        %1250 = vmatprep.subr.bf16.mxu0 0
        %1251 = vmatpush1.bf16.msra.mxu0 0
        %1252 = vmatprep.subr.bf16.mxu0 0
        %1253 = vmatpush1.bf16.msra.mxu0 %v1236
        %1254 = vmatprep.subr.bf16.mxu0 0
        %1255 = vmatpush2.bf16.msra.mxu0 0
        %1256 = vmatprep.subr.bf16.mxu0 0
        %1257 = vmatpush2.bf16.msra.mxu0 0
        %1258 = vmatprep.subr.bf16.mxu0 0
        %1259 = vmatpush2.bf16.msra.mxu0 0
        %1260 = vmatprep.subr.bf16.mxu0 0
        %1261 = vmatpush2.bf16.msra.mxu0 0
        %1262 = vmatprep.subr.bf16.mxu0 0
        %1263 = vmatpush2.bf16.msra.mxu0 0
        %1264 = vmatprep.subr.bf16.mxu0 0
        %1265 = vmatpush2.bf16.msra.mxu0 0
        %1266 = vmatprep.subr.bf16.mxu0 0
        %1267 = vmatpush2.bf16.msra.mxu0 0
        %1268 = vmatprep.subr.bf16.mxu0 0
        %1269 = vmatpush2.bf16.msra.mxu0 0
        %1270 = vmatprep.mubr.bf16.mxu0 0
        %1271 = vmatmul.mubr.bf16.gmra.mxu0 %v1232
        %v1272 = vpop.f32.mrf.mxu0
        %v1273 = vadd.f32 0.0, %v1272
        %v1274 = vpop.f32.mrf.mxu0
        %v1275 = vpop.f32.mrf.mxu0
        %v1276 = vpop.f32.mrf.mxu0
        %1277 = vdwg.mxu0
        %v1279 = vsel %vm998, %v1228, 0
        %v1282 = vsel %vm1234, %v995, 0
        %1284 = vmatprep.subr.bf16.mxu0 0
        %1285 = vmatpush1.bf16.msra.mxu0 0
        %1286 = vmatprep.subr.bf16.mxu0 0
        %1287 = vmatpush1.bf16.msra.mxu0 0
        %1288 = vmatprep.subr.bf16.mxu0 0
        %1289 = vmatpush1.bf16.msra.mxu0 0
        %1290 = vmatprep.subr.bf16.mxu0 0
        %1291 = vmatpush1.bf16.msra.mxu0 0
        %1292 = vmatprep.subr.bf16.mxu0 0
        %1293 = vmatpush1.bf16.msra.mxu0 0
        %1294 = vmatprep.subr.bf16.mxu0 0
        %1295 = vmatpush1.bf16.msra.mxu0 0
        %1296 = vmatprep.subr.bf16.mxu0 0
        %1297 = vmatpush1.bf16.msra.mxu0 0
        %1298 = vmatprep.subr.bf16.mxu0 0
        %1299 = vmatpush1.bf16.msra.mxu0 %v1282
        %1300 = vmatprep.subr.bf16.mxu0 0
        %1301 = vmatpush2.bf16.msra.mxu0 0
        %1302 = vmatprep.subr.bf16.mxu0 0
        %1303 = vmatpush2.bf16.msra.mxu0 0
        %1304 = vmatprep.subr.bf16.mxu0 0
        %1305 = vmatpush2.bf16.msra.mxu0 0
        %1306 = vmatprep.subr.bf16.mxu0 0
        %1307 = vmatpush2.bf16.msra.mxu0 0
        %1308 = vmatprep.subr.bf16.mxu0 0
        %1309 = vmatpush2.bf16.msra.mxu0 0
        %1310 = vmatprep.subr.bf16.mxu0 0
        %1311 = vmatpush2.bf16.msra.mxu0 0
        %1312 = vmatprep.subr.bf16.mxu0 0
        %1313 = vmatpush2.bf16.msra.mxu0 0
        %1314 = vmatprep.subr.bf16.mxu0 0
        %1315 = vmatpush2.bf16.msra.mxu0 0
        %1316 = vmatprep.mubr.bf16.mxu0 0
        %1317 = vmatmul.mubr.bf16.gmra.mxu0 %v1279
        %v1318 = vpop.f32.mrf.mxu0
        %v1319 = vadd.f32 0.0, %v1318
        %v1320 = vpop.f32.mrf.mxu0
        %v1321 = vpop.f32.mrf.mxu0
        %v1322 = vpop.f32.mrf.mxu0
        %1323 = vdwg.mxu0
        %v1325 = vsel %vm998, %v1229, 0
        %v1328 = vsel %vm1234, %v996, 0
        %1330 = vmatprep.subr.bf16.mxu0 0
        %1331 = vmatpush1.bf16.msra.mxu0 0
        %1332 = vmatprep.subr.bf16.mxu0 0
        %1333 = vmatpush1.bf16.msra.mxu0 0
        %1334 = vmatprep.subr.bf16.mxu0 0
        %1335 = vmatpush1.bf16.msra.mxu0 0
        %1336 = vmatprep.subr.bf16.mxu0 0
        %1337 = vmatpush1.bf16.msra.mxu0 0
        %1338 = vmatprep.subr.bf16.mxu0 0
        %1339 = vmatpush1.bf16.msra.mxu0 0
        %1340 = vmatprep.subr.bf16.mxu0 0
        %1341 = vmatpush1.bf16.msra.mxu0 0
        %1342 = vmatprep.subr.bf16.mxu0 0
        %1343 = vmatpush1.bf16.msra.mxu0 0
        %1344 = vmatprep.subr.bf16.mxu0 0
        %1345 = vmatpush1.bf16.msra.mxu0 %v1328
        %1346 = vmatprep.subr.bf16.mxu0 0
        %1347 = vmatpush2.bf16.msra.mxu0 0
        %1348 = vmatprep.subr.bf16.mxu0 0
        %1349 = vmatpush2.bf16.msra.mxu0 0
        %1350 = vmatprep.subr.bf16.mxu0 0
        %1351 = vmatpush2.bf16.msra.mxu0 0
        %1352 = vmatprep.subr.bf16.mxu0 0
        %1353 = vmatpush2.bf16.msra.mxu0 0
        %1354 = vmatprep.subr.bf16.mxu0 0
        %1355 = vmatpush2.bf16.msra.mxu0 0
        %1356 = vmatprep.subr.bf16.mxu0 0
        %1357 = vmatpush2.bf16.msra.mxu0 0
        %1358 = vmatprep.subr.bf16.mxu0 0
        %1359 = vmatpush2.bf16.msra.mxu0 0
        %1360 = vmatprep.subr.bf16.mxu0 0
        %1361 = vmatpush2.bf16.msra.mxu0 0
        %1362 = vmatprep.mubr.bf16.mxu0 0
        %1363 = vmatmul.mubr.bf16.gmra.mxu0 %v1325
        %v1364 = vpop.f32.mrf.mxu0
        %v1365 = vadd.f32 0.0, %v1364
        %v1366 = vpop.f32.mrf.mxu0
        %v1367 = vpop.f32.mrf.mxu0
        %v1368 = vpop.f32.mrf.mxu0
        %1369 = vdwg.mxu0
        %v1371 = vsel %vm998, %v1230, 0
        %v1374 = vsel %vm1234, %v997, 0
        %1376 = vmatprep.subr.bf16.mxu0 0
        %1377 = vmatpush1.bf16.msra.mxu0 0
        %1378 = vmatprep.subr.bf16.mxu0 0
        %1379 = vmatpush1.bf16.msra.mxu0 0
        %1380 = vmatprep.subr.bf16.mxu0 0
        %1381 = vmatpush1.bf16.msra.mxu0 0
        %1382 = vmatprep.subr.bf16.mxu0 0
        %1383 = vmatpush1.bf16.msra.mxu0 0
        %1384 = vmatprep.subr.bf16.mxu0 0
        %1385 = vmatpush1.bf16.msra.mxu0 0
        %1386 = vmatprep.subr.bf16.mxu0 0
        %1387 = vmatpush1.bf16.msra.mxu0 0
        %1388 = vmatprep.subr.bf16.mxu0 0
        %1389 = vmatpush1.bf16.msra.mxu0 0
        %1390 = vmatprep.subr.bf16.mxu0 0
        %1391 = vmatpush1.bf16.msra.mxu0 %v1374
        %1392 = vmatprep.subr.bf16.mxu0 0
        %1393 = vmatpush2.bf16.msra.mxu0 0
        %1394 = vmatprep.subr.bf16.mxu0 0
        %1395 = vmatpush2.bf16.msra.mxu0 0
        %1396 = vmatprep.subr.bf16.mxu0 0
        %1397 = vmatpush2.bf16.msra.mxu0 0
        %1398 = vmatprep.subr.bf16.mxu0 0
        %1399 = vmatpush2.bf16.msra.mxu0 0
        %1400 = vmatprep.subr.bf16.mxu0 0
        %1401 = vmatpush2.bf16.msra.mxu0 0
        %1402 = vmatprep.subr.bf16.mxu0 0
        %1403 = vmatpush2.bf16.msra.mxu0 0
        %1404 = vmatprep.subr.bf16.mxu0 0
        %1405 = vmatpush2.bf16.msra.mxu0 0
        %1406 = vmatprep.subr.bf16.mxu0 0
        %1407 = vmatpush2.bf16.msra.mxu0 0
        %1408 = vmatprep.mubr.bf16.mxu0 0
        %1409 = vmatmul.mubr.bf16.gmra.mxu0 %v1371
        %v1410 = vpop.f32.mrf.mxu0
        %v1411 = vadd.f32 0.0, %v1410
        %v1412 = vpop.f32.mrf.mxu0
        %v1413 = vpop.f32.mrf.mxu0
        %v1414 = vpop.f32.mrf.mxu0
        %1415 = vdwg.mxu0
        %1417 = vrot.lane.b32.xlu0 %v1319, 8
        %v1418 = vpop.permute.xlu0 %1417
        %1421 = vrot.lane.b32.xlu0 %v1365, 16
        %v1422 = vpop.permute.xlu0 %1421
        %1425 = vrot.lane.b32.xlu0 %v1411, 24
        %v1426 = vpop.permute.xlu0 %1425
        %v1428 = vsel %vm998, %v1273, %v1418
        %vm1429 = vcmask 130048
        %v1430 = vsel %vm1429, %v1428, %v1422
        %vm1431 = vcmask 195584
        %v1432 = vsel %vm1431, %v1430, %v1426
        %v1433 = vpack.c.bf16 %v1432, %v1432
        %v1434 = vlaneseq
        %v1435 = vshrl.u32 %v1434, 7
        %v1436 = vsub.s32 0, %v1435
        %v1437 = vrot.slane %v777, %v1436
        %v1442 = vunpack.c.l.b16 %v792
        %v1443 = vunpack.c.l.b16 %v793
        %v1444 = vunpack.c.l.b16 %v794
        %v1445 = vunpack.c.l.b16 %v795
        %v1446 = vpack.c.b16 %v1443, %v1442
        %v1447 = vpack.c.b16 %v1445, %v1444
        %v1451 = vsel %vm808, %v1433, 0
        %1453 = vmatprep.subr.bf16.mxu0 0
        %1454 = vmatpush1.bf16.msra.mxu0 0
        %1455 = vmatprep.subr.bf16.mxu0 0
        %1456 = vmatpush1.bf16.msra.mxu0 0
        %1457 = vmatprep.subr.bf16.mxu0 0
        %1458 = vmatpush1.bf16.msra.mxu0 0
        %1459 = vmatprep.subr.bf16.mxu0 0
        %1460 = vmatpush1.bf16.msra.mxu0 0
        %1461 = vmatprep.subr.bf16.mxu0 0
        %1462 = vmatpush1.bf16.msra.mxu0 0
        %1463 = vmatprep.subr.bf16.mxu0 0
        %1464 = vmatpush1.bf16.msra.mxu0 0
        %1465 = vmatprep.subr.bf16.mxu0 0
        %1466 = vmatpush1.bf16.msra.mxu0 %v1447
        %1467 = vmatprep.subr.bf16.mxu0 0
        %1468 = vmatpush1.bf16.msra.mxu0 %v1446
        %1469 = vmatprep.subr.bf16.mxu0 0
        %1470 = vmatpush2.bf16.msra.mxu0 0
        %1471 = vmatprep.subr.bf16.mxu0 0
        %1472 = vmatpush2.bf16.msra.mxu0 0
        %1473 = vmatprep.subr.bf16.mxu0 0
        %1474 = vmatpush2.bf16.msra.mxu0 0
        %1475 = vmatprep.subr.bf16.mxu0 0
        %1476 = vmatpush2.bf16.msra.mxu0 0
        %1477 = vmatprep.subr.bf16.mxu0 0
        %1478 = vmatpush2.bf16.msra.mxu0 0
        %1479 = vmatprep.subr.bf16.mxu0 0
        %1480 = vmatpush2.bf16.msra.mxu0 0
        %1481 = vmatprep.subr.bf16.mxu0 0
        %1482 = vmatpush2.bf16.msra.mxu0 0
        %1483 = vmatprep.subr.bf16.mxu0 0
        %1484 = vmatpush2.bf16.msra.mxu0 0
        %1485 = vmatprep.mubr.bf16.mxu0 0
        %1486 = vmatmul.mubr.bf16.gmra.mxu0 %v1451
        %v1487 = vpop.f32.mrf.mxu0
        %v1488 = vadd.f32 %v1437, %v1487
        %v1489 = vpop.f32.mrf.mxu0
        %v1490 = vpop.f32.mrf.mxu0
        %v1491 = vpop.f32.mrf.mxu0
        %1492 = vdwg.mxu0
        %v1493 = vunpack.c.l.bf16 %v772
        %v1494 = vadd.f32 %v1488, %v1493
        %v1495 = vsel %vm808, %v1494, 0.0
        %1496 = vadd.xlane.f32.xlu0 %v1495
        %v1497 = vpop.xlane.xlu0 %1496
        %v1498 = vrcp.pop 32.0
        %v1499 = vmul.f32 %v1497, %v1498
        %v1500 = vsub.f32 %v1494, %v1499
        %v1501 = vmul.f32 %v1500, %v1500
        %v1502 = vsel %vm808, %v1501, 0.0
        %1503 = vadd.xlane.f32.xlu0 %v1502
        %v1504 = vpop.xlane.xlu0 %1503
        %v1505 = vmul.f32 %v1504, %v1498
        %v1506 = vadd.f32 %v1505, 1e-05
        %v1507 = vrsqrt.pop %v1506
        %v1508 = vmul.f32 %v1500, %v1507
        %v1509 = vlaneseq
        %v1510 = vshrl.u32 %v1509, 7
        %v1511 = vsub.s32 1, %v1510
        %v1512 = vrot.slane %v777, %v1511
        %v1513 = vmul.f32 %v1508, %v1512
        %v1514 = vlaneseq
        %v1515 = vshrl.u32 %v1514, 7
        %v1516 = vsub.s32 2, %v1515
        %v1517 = vrot.slane %v777, %v1516
        %v1518 = vadd.f32 %v1513, %v1517
        %v1519 = vpack.c.bf16 %v1518, %v1518
        %v1520 = vld [vmem:[#allocation10] sm:$0xf]
        %v1521 = vld [vmem:[#allocation10 + $0x4] sm:$0xf]
        %v1522 = vld [vmem:[#allocation10 + $0x8] sm:$0xf]
        %v1523 = vld [vmem:[#allocation10 + $0xc] sm:$0xf]
        %v1524 = vld [vmem:[#allocation11] sm:$0xf]
        %v1525 = vld [vmem:[#allocation11 + $0x4] sm:$0xf]
        %v1526 = vld [vmem:[#allocation11 + $0x8] sm:$0xf]
        %v1527 = vld [vmem:[#allocation11 + $0xc] sm:$0xf]
        %v1528 = vld [vmem:[#allocation13] sm:$0xf]
        %v1529 = vld [vmem:[#allocation13 + $0x4] sm:$0xf]
        %v1530 = vld [vmem:[#allocation13 + $0x8] sm:$0xf]
        %v1531 = vld [vmem:[#allocation13 + $0xc] sm:$0xf]
        %v1532 = vld [vmem:[#allocation14] sm:$0xf]
        %v1533 = vld [vmem:[#allocation14 + $0x4] sm:$0xf]
        %v1534 = vld [vmem:[#allocation14 + $0x8] sm:$0xf]
        %v1535 = vld [vmem:[#allocation14 + $0xc] sm:$0xf]
        %v1540 = vunpack.c.l.b16 %v1520
        %v1541 = vunpack.c.l.b16 %v1521
        %v1542 = vunpack.c.l.b16 %v1522
        %v1543 = vunpack.c.l.b16 %v1523
        %v1544 = vpack.c.b16 %v1541, %v1540
        %v1545 = vpack.c.b16 %v1543, %v1542
        %v1549 = vsel %vm808, %v774, 0
        %1551 = vmatprep.subr.bf16.mxu0 0
        %1552 = vmatpush1.bf16.msra.mxu0 0
        %1553 = vmatprep.subr.bf16.mxu0 0
        %1554 = vmatpush1.bf16.msra.mxu0 0
        %1555 = vmatprep.subr.bf16.mxu0 0
        %1556 = vmatpush1.bf16.msra.mxu0 0
        %1557 = vmatprep.subr.bf16.mxu0 0
        %1558 = vmatpush1.bf16.msra.mxu0 0
        %1559 = vmatprep.subr.bf16.mxu0 0
        %1560 = vmatpush1.bf16.msra.mxu0 0
        %1561 = vmatprep.subr.bf16.mxu0 0
        %1562 = vmatpush1.bf16.msra.mxu0 0
        %1563 = vmatprep.subr.bf16.mxu0 0
        %1564 = vmatpush1.bf16.msra.mxu0 %v1545
        %1565 = vmatprep.subr.bf16.mxu0 0
        %1566 = vmatpush1.bf16.msra.mxu0 %v1544
        %1567 = vmatprep.subr.bf16.mxu0 0
        %1568 = vmatpush2.bf16.msra.mxu0 0
        %1569 = vmatprep.subr.bf16.mxu0 0
        %1570 = vmatpush2.bf16.msra.mxu0 0
        %1571 = vmatprep.subr.bf16.mxu0 0
        %1572 = vmatpush2.bf16.msra.mxu0 0
        %1573 = vmatprep.subr.bf16.mxu0 0
        %1574 = vmatpush2.bf16.msra.mxu0 0
        %1575 = vmatprep.subr.bf16.mxu0 0
        %1576 = vmatpush2.bf16.msra.mxu0 0
        %1577 = vmatprep.subr.bf16.mxu0 0
        %1578 = vmatpush2.bf16.msra.mxu0 0
        %1579 = vmatprep.subr.bf16.mxu0 0
        %1580 = vmatpush2.bf16.msra.mxu0 0
        %1581 = vmatprep.subr.bf16.mxu0 0
        %1582 = vmatpush2.bf16.msra.mxu0 0
        %1583 = vmatprep.mubr.bf16.mxu0 0
        %1584 = vmatmul.mubr.bf16.gmra.mxu0 %v1549
        %v1585 = vpop.f32.mrf.mxu0
        %v1586 = vadd.f32 0.0, %v1585
        %v1587 = vpop.f32.mrf.mxu0
        %v1588 = vpop.f32.mrf.mxu0
        %v1589 = vpop.f32.mrf.mxu0
        %1590 = vdwg.mxu0
        %v1595 = vunpack.c.l.b16 %v1524
        %v1596 = vunpack.c.l.b16 %v1525
        %v1597 = vunpack.c.l.b16 %v1526
        %v1598 = vunpack.c.l.b16 %v1527
        %v1599 = vpack.c.b16 %v1596, %v1595
        %v1600 = vpack.c.b16 %v1598, %v1597
        %v1604 = vsel %vm808, %v1519, 0
        %1606 = vmatprep.subr.bf16.mxu0 0
        %1607 = vmatpush1.bf16.msra.mxu0 0
        %1608 = vmatprep.subr.bf16.mxu0 0
        %1609 = vmatpush1.bf16.msra.mxu0 0
        %1610 = vmatprep.subr.bf16.mxu0 0
        %1611 = vmatpush1.bf16.msra.mxu0 0
        %1612 = vmatprep.subr.bf16.mxu0 0
        %1613 = vmatpush1.bf16.msra.mxu0 0
        %1614 = vmatprep.subr.bf16.mxu0 0
        %1615 = vmatpush1.bf16.msra.mxu0 0
        %1616 = vmatprep.subr.bf16.mxu0 0
        %1617 = vmatpush1.bf16.msra.mxu0 0
        %1618 = vmatprep.subr.bf16.mxu0 0
        %1619 = vmatpush1.bf16.msra.mxu0 %v1600
        %1620 = vmatprep.subr.bf16.mxu0 0
        %1621 = vmatpush1.bf16.msra.mxu0 %v1599
        %1622 = vmatprep.subr.bf16.mxu0 0
        %1623 = vmatpush2.bf16.msra.mxu0 0
        %1624 = vmatprep.subr.bf16.mxu0 0
        %1625 = vmatpush2.bf16.msra.mxu0 0
        %1626 = vmatprep.subr.bf16.mxu0 0
        %1627 = vmatpush2.bf16.msra.mxu0 0
        %1628 = vmatprep.subr.bf16.mxu0 0
        %1629 = vmatpush2.bf16.msra.mxu0 0
        %1630 = vmatprep.subr.bf16.mxu0 0
        %1631 = vmatpush2.bf16.msra.mxu0 0
        %1632 = vmatprep.subr.bf16.mxu0 0
        %1633 = vmatpush2.bf16.msra.mxu0 0
        %1634 = vmatprep.subr.bf16.mxu0 0
        %1635 = vmatpush2.bf16.msra.mxu0 0
        %1636 = vmatprep.subr.bf16.mxu0 0
        %1637 = vmatpush2.bf16.msra.mxu0 0
        %1638 = vmatprep.mubr.bf16.mxu0 0
        %1639 = vmatmul.mubr.bf16.gmra.mxu0 %v1604
        %v1640 = vpop.f32.mrf.mxu0
        %v1641 = vadd.f32 0.0, %v1640
        %v1642 = vpop.f32.mrf.mxu0
        %v1643 = vpop.f32.mrf.mxu0
        %v1644 = vpop.f32.mrf.mxu0
        %1645 = vdwg.mxu0
        %v1650 = vunpack.c.l.b16 %v1528
        %v1651 = vunpack.c.l.b16 %v1529
        %v1652 = vunpack.c.l.b16 %v1530
        %v1653 = vunpack.c.l.b16 %v1531
        %v1654 = vpack.c.b16 %v1651, %v1650
        %v1655 = vpack.c.b16 %v1653, %v1652
        %v1659 = vsel %vm808, %v773, 0
        %1661 = vmatprep.subr.bf16.mxu0 0
        %1662 = vmatpush1.bf16.msra.mxu0 0
        %1663 = vmatprep.subr.bf16.mxu0 0
        %1664 = vmatpush1.bf16.msra.mxu0 0
        %1665 = vmatprep.subr.bf16.mxu0 0
        %1666 = vmatpush1.bf16.msra.mxu0 0
        %1667 = vmatprep.subr.bf16.mxu0 0
        %1668 = vmatpush1.bf16.msra.mxu0 0
        %1669 = vmatprep.subr.bf16.mxu0 0
        %1670 = vmatpush1.bf16.msra.mxu0 0
        %1671 = vmatprep.subr.bf16.mxu0 0
        %1672 = vmatpush1.bf16.msra.mxu0 0
        %1673 = vmatprep.subr.bf16.mxu0 0
        %1674 = vmatpush1.bf16.msra.mxu0 %v1655
        %1675 = vmatprep.subr.bf16.mxu0 0
        %1676 = vmatpush1.bf16.msra.mxu0 %v1654
        %1677 = vmatprep.subr.bf16.mxu0 0
        %1678 = vmatpush2.bf16.msra.mxu0 0
        %1679 = vmatprep.subr.bf16.mxu0 0
        %1680 = vmatpush2.bf16.msra.mxu0 0
        %1681 = vmatprep.subr.bf16.mxu0 0
        %1682 = vmatpush2.bf16.msra.mxu0 0
        %1683 = vmatprep.subr.bf16.mxu0 0
        %1684 = vmatpush2.bf16.msra.mxu0 0
        %1685 = vmatprep.subr.bf16.mxu0 0
        %1686 = vmatpush2.bf16.msra.mxu0 0
        %1687 = vmatprep.subr.bf16.mxu0 0
        %1688 = vmatpush2.bf16.msra.mxu0 0
        %1689 = vmatprep.subr.bf16.mxu0 0
        %1690 = vmatpush2.bf16.msra.mxu0 0
        %1691 = vmatprep.subr.bf16.mxu0 0
        %1692 = vmatpush2.bf16.msra.mxu0 0
        %1693 = vmatprep.mubr.bf16.mxu0 0
        %1694 = vmatmul.mubr.bf16.gmra.mxu0 %v1659
        %v1695 = vpop.f32.mrf.mxu0
        %v1696 = vadd.f32 0.0, %v1695
        %v1697 = vpop.f32.mrf.mxu0
        %v1698 = vpop.f32.mrf.mxu0
        %v1699 = vpop.f32.mrf.mxu0
        %1700 = vdwg.mxu0
        %1702 = vrot.lane.b32.xlu0 %v1586, 120
        %v1703 = vpop.permute.xlu0 %1702
        %1705 = vrot.lane.b32.xlu0 %v1586, 112
        %v1706 = vpop.permute.xlu0 %1705
        %1708 = vrot.lane.b32.xlu0 %v1586, 104
        %v1709 = vpop.permute.xlu0 %1708
        %v1711 = vpack.c.bf16 %v1586, %v1586
        %v1712 = vpack.c.bf16 %v1703, %v1703
        %v1713 = vpack.c.bf16 %v1706, %v1706
        %v1714 = vpack.c.bf16 %v1709, %v1709
        %1716 = vrot.lane.b32.xlu0 %v1641, 120
        %v1717 = vpop.permute.xlu0 %1716
        %1719 = vrot.lane.b32.xlu0 %v1641, 112
        %v1720 = vpop.permute.xlu0 %1719
        %1722 = vrot.lane.b32.xlu0 %v1641, 104
        %v1723 = vpop.permute.xlu0 %1722
        %v1725 = vpack.c.bf16 %v1641, %v1641
        %v1726 = vpack.c.bf16 %v1717, %v1717
        %v1727 = vpack.c.bf16 %v1720, %v1720
        %v1728 = vpack.c.bf16 %v1723, %v1723
        %1730 = vrot.lane.b32.xlu0 %v1696, 120
        %v1731 = vpop.permute.xlu0 %1730
        %1733 = vrot.lane.b32.xlu0 %v1696, 112
        %v1734 = vpop.permute.xlu0 %1733
        %1736 = vrot.lane.b32.xlu0 %v1696, 104
        %v1737 = vpop.permute.xlu0 %1736
        %v1739 = vpack.c.bf16 %v1696, %v1696
        %v1740 = vpack.c.bf16 %v1731, %v1731
        %v1741 = vpack.c.bf16 %v1734, %v1734
        %v1742 = vpack.c.bf16 %v1737, %v1737
        %v1744 = vsel %vm998, %v1711, 0
        %v1747 = vsel %vm998, %v1725, 0
        %1749 = vmatprep.subr.bf16.mxu0 0
        %1750 = vmatpush1.bf16.xpose.msra.mxu0 0
        %1751 = vmatprep.subr.bf16.mxu0 0
        %1752 = vmatpush1.bf16.xpose.msra.mxu0 0
        %1753 = vmatprep.subr.bf16.mxu0 0
        %1754 = vmatpush1.bf16.xpose.msra.mxu0 0
        %1755 = vmatprep.subr.bf16.mxu0 0
        %1756 = vmatpush1.bf16.xpose.msra.mxu0 0
        %1757 = vmatprep.subr.bf16.mxu0 0
        %1758 = vmatpush1.bf16.xpose.msra.mxu0 0
        %1759 = vmatprep.subr.bf16.mxu0 0
        %1760 = vmatpush1.bf16.xpose.msra.mxu0 0
        %1761 = vmatprep.subr.bf16.mxu0 0
        %1762 = vmatpush1.bf16.xpose.msra.mxu0 0
        %1763 = vmatprep.subr.bf16.mxu0 0
        %1764 = vmatpush1.bf16.xpose.msra.mxu0 %v1747
        %1765 = vmatprep.subr.bf16.mxu0 0
        %1766 = vmatpush2.bf16.xpose.msra.mxu0 0
        %1767 = vmatprep.subr.bf16.mxu0 0
        %1768 = vmatpush2.bf16.xpose.msra.mxu0 0
        %1769 = vmatprep.subr.bf16.mxu0 0
        %1770 = vmatpush2.bf16.xpose.msra.mxu0 0
        %1771 = vmatprep.subr.bf16.mxu0 0
        %1772 = vmatpush2.bf16.xpose.msra.mxu0 0
        %1773 = vmatprep.subr.bf16.mxu0 0
        %1774 = vmatpush2.bf16.xpose.msra.mxu0 0
        %1775 = vmatprep.subr.bf16.mxu0 0
        %1776 = vmatpush2.bf16.xpose.msra.mxu0 0
        %1777 = vmatprep.subr.bf16.mxu0 0
        %1778 = vmatpush2.bf16.xpose.msra.mxu0 0
        %1779 = vmatprep.subr.bf16.mxu0 0
        %1780 = vmatpush2.bf16.xpose.msra.mxu0 0
        %1781 = vmatprep.mubr.bf16.mxu0 0
        %1782 = vmatmul.mubr.bf16.gmra.mxu0 %v1744
        %v1783 = vpop.f32.mrf.mxu0
        %v1784 = vadd.f32 %v775, %v1783
        %v1785 = vpop.f32.mrf.mxu0
        %v1786 = vpop.f32.mrf.mxu0
        %v1787 = vpop.f32.mrf.mxu0
        %1788 = vdwg.mxu0
        %v1790 = vsel %vm998, %v1712, 0
        %v1793 = vsel %vm998, %v1726, 0
        %1795 = vmatprep.subr.bf16.mxu0 0
        %1796 = vmatpush1.bf16.xpose.msra.mxu0 0
        %1797 = vmatprep.subr.bf16.mxu0 0
        %1798 = vmatpush1.bf16.xpose.msra.mxu0 0
        %1799 = vmatprep.subr.bf16.mxu0 0
        %1800 = vmatpush1.bf16.xpose.msra.mxu0 0
        %1801 = vmatprep.subr.bf16.mxu0 0
        %1802 = vmatpush1.bf16.xpose.msra.mxu0 0
        %1803 = vmatprep.subr.bf16.mxu0 0
        %1804 = vmatpush1.bf16.xpose.msra.mxu0 0
        %1805 = vmatprep.subr.bf16.mxu0 0
        %1806 = vmatpush1.bf16.xpose.msra.mxu0 0
        %1807 = vmatprep.subr.bf16.mxu0 0
        %1808 = vmatpush1.bf16.xpose.msra.mxu0 0
        %1809 = vmatprep.subr.bf16.mxu0 0
        %1810 = vmatpush1.bf16.xpose.msra.mxu0 %v1793
        %1811 = vmatprep.subr.bf16.mxu0 0
        %1812 = vmatpush2.bf16.xpose.msra.mxu0 0
        %1813 = vmatprep.subr.bf16.mxu0 0
        %1814 = vmatpush2.bf16.xpose.msra.mxu0 0
        %1815 = vmatprep.subr.bf16.mxu0 0
        %1816 = vmatpush2.bf16.xpose.msra.mxu0 0
        %1817 = vmatprep.subr.bf16.mxu0 0
        %1818 = vmatpush2.bf16.xpose.msra.mxu0 0
        %1819 = vmatprep.subr.bf16.mxu0 0
        %1820 = vmatpush2.bf16.xpose.msra.mxu0 0
        %1821 = vmatprep.subr.bf16.mxu0 0
        %1822 = vmatpush2.bf16.xpose.msra.mxu0 0
        %1823 = vmatprep.subr.bf16.mxu0 0
        %1824 = vmatpush2.bf16.xpose.msra.mxu0 0
        %1825 = vmatprep.subr.bf16.mxu0 0
        %1826 = vmatpush2.bf16.xpose.msra.mxu0 0
        %1827 = vmatprep.mubr.bf16.mxu0 0
        %1828 = vmatmul.mubr.bf16.gmra.mxu0 %v1790
        %v1829 = vpop.f32.mrf.mxu0
        %v1830 = vadd.f32 %v775, %v1829
        %v1831 = vpop.f32.mrf.mxu0
        %v1832 = vpop.f32.mrf.mxu0
        %v1833 = vpop.f32.mrf.mxu0
        %1834 = vdwg.mxu0
        %v1836 = vsel %vm998, %v1713, 0
        %v1839 = vsel %vm998, %v1727, 0
        %1841 = vmatprep.subr.bf16.mxu0 0
        %1842 = vmatpush1.bf16.xpose.msra.mxu0 0
        %1843 = vmatprep.subr.bf16.mxu0 0
        %1844 = vmatpush1.bf16.xpose.msra.mxu0 0
        %1845 = vmatprep.subr.bf16.mxu0 0
        %1846 = vmatpush1.bf16.xpose.msra.mxu0 0
        %1847 = vmatprep.subr.bf16.mxu0 0
        %1848 = vmatpush1.bf16.xpose.msra.mxu0 0
        %1849 = vmatprep.subr.bf16.mxu0 0
        %1850 = vmatpush1.bf16.xpose.msra.mxu0 0
        %1851 = vmatprep.subr.bf16.mxu0 0
        %1852 = vmatpush1.bf16.xpose.msra.mxu0 0
        %1853 = vmatprep.subr.bf16.mxu0 0
        %1854 = vmatpush1.bf16.xpose.msra.mxu0 0
        %1855 = vmatprep.subr.bf16.mxu0 0
        %1856 = vmatpush1.bf16.xpose.msra.mxu0 %v1839
        %1857 = vmatprep.subr.bf16.mxu0 0
        %1858 = vmatpush2.bf16.xpose.msra.mxu0 0
        %1859 = vmatprep.subr.bf16.mxu0 0
        %1860 = vmatpush2.bf16.xpose.msra.mxu0 0
        %1861 = vmatprep.subr.bf16.mxu0 0
        %1862 = vmatpush2.bf16.xpose.msra.mxu0 0
        %1863 = vmatprep.subr.bf16.mxu0 0
        %1864 = vmatpush2.bf16.xpose.msra.mxu0 0
        %1865 = vmatprep.subr.bf16.mxu0 0
        %1866 = vmatpush2.bf16.xpose.msra.mxu0 0
        %1867 = vmatprep.subr.bf16.mxu0 0
        %1868 = vmatpush2.bf16.xpose.msra.mxu0 0
        %1869 = vmatprep.subr.bf16.mxu0 0
        %1870 = vmatpush2.bf16.xpose.msra.mxu0 0
        %1871 = vmatprep.subr.bf16.mxu0 0
        %1872 = vmatpush2.bf16.xpose.msra.mxu0 0
        %1873 = vmatprep.mubr.bf16.mxu0 0
        %1874 = vmatmul.mubr.bf16.gmra.mxu0 %v1836
        %v1875 = vpop.f32.mrf.mxu0
        %v1876 = vadd.f32 %v775, %v1875
        %v1877 = vpop.f32.mrf.mxu0
        %v1878 = vpop.f32.mrf.mxu0
        %v1879 = vpop.f32.mrf.mxu0
        %1880 = vdwg.mxu0
        %v1882 = vsel %vm998, %v1714, 0
        %v1885 = vsel %vm998, %v1728, 0
        %1887 = vmatprep.subr.bf16.mxu0 0
        %1888 = vmatpush1.bf16.xpose.msra.mxu0 0
        %1889 = vmatprep.subr.bf16.mxu0 0
        %1890 = vmatpush1.bf16.xpose.msra.mxu0 0
        %1891 = vmatprep.subr.bf16.mxu0 0
        %1892 = vmatpush1.bf16.xpose.msra.mxu0 0
        %1893 = vmatprep.subr.bf16.mxu0 0
        %1894 = vmatpush1.bf16.xpose.msra.mxu0 0
        %1895 = vmatprep.subr.bf16.mxu0 0
        %1896 = vmatpush1.bf16.xpose.msra.mxu0 0
        %1897 = vmatprep.subr.bf16.mxu0 0
        %1898 = vmatpush1.bf16.xpose.msra.mxu0 0
        %1899 = vmatprep.subr.bf16.mxu0 0
        %1900 = vmatpush1.bf16.xpose.msra.mxu0 0
        %1901 = vmatprep.subr.bf16.mxu0 0
        %1902 = vmatpush1.bf16.xpose.msra.mxu0 %v1885
        %1903 = vmatprep.subr.bf16.mxu0 0
        %1904 = vmatpush2.bf16.xpose.msra.mxu0 0
        %1905 = vmatprep.subr.bf16.mxu0 0
        %1906 = vmatpush2.bf16.xpose.msra.mxu0 0
        %1907 = vmatprep.subr.bf16.mxu0 0
        %1908 = vmatpush2.bf16.xpose.msra.mxu0 0
        %1909 = vmatprep.subr.bf16.mxu0 0
        %1910 = vmatpush2.bf16.xpose.msra.mxu0 0
        %1911 = vmatprep.subr.bf16.mxu0 0
        %1912 = vmatpush2.bf16.xpose.msra.mxu0 0
        %1913 = vmatprep.subr.bf16.mxu0 0
        %1914 = vmatpush2.bf16.xpose.msra.mxu0 0
        %1915 = vmatprep.subr.bf16.mxu0 0
        %1916 = vmatpush2.bf16.xpose.msra.mxu0 0
        %1917 = vmatprep.subr.bf16.mxu0 0
        %1918 = vmatpush2.bf16.xpose.msra.mxu0 0
        %1919 = vmatprep.mubr.bf16.mxu0 0
        %1920 = vmatmul.mubr.bf16.gmra.mxu0 %v1882
        %v1921 = vpop.f32.mrf.mxu0
        %v1922 = vadd.f32 %v775, %v1921
        %v1923 = vpop.f32.mrf.mxu0
        %v1924 = vpop.f32.mrf.mxu0
        %v1925 = vpop.f32.mrf.mxu0
        %1926 = vdwg.mxu0
        %v1927 = vsel %vm998, %v1784, -inf
        %1928 = vmax.xlane.f32.xlu0 %v1927
        %v1929 = vpop.xlane.xlu0 %1928
        %v1930 = vsel %vm998, %v1830, -inf
        %1931 = vmax.xlane.f32.xlu0 %v1930
        %v1932 = vpop.xlane.xlu0 %1931
        %v1933 = vsel %vm998, %v1876, -inf
        %1934 = vmax.xlane.f32.xlu0 %v1933
        %v1935 = vpop.xlane.xlu0 %1934
        %v1936 = vsel %vm998, %v1922, -inf
        %1937 = vmax.xlane.f32.xlu0 %v1936
        %v1938 = vpop.xlane.xlu0 %1937
        %v1939 = vsub.f32 %v1784, %v1929
        %v1940 = vsub.f32 %v1830, %v1932
        %v1941 = vsub.f32 %v1876, %v1935
        %v1942 = vsub.f32 %v1922, %v1938
        %v1943 = vmul.f32 %v1939, 1.442695
        %v1944 = vpow.pop %v1943
        %v1945 = vmul.f32 %v1940, 1.442695
        %v1946 = vpow.pop %v1945
        %v1947 = vmul.f32 %v1941, 1.442695
        %v1948 = vpow.pop %v1947
        %v1949 = vmul.f32 %v1942, 1.442695
        %v1950 = vpow.pop %v1949
        %v1951 = vsel %vm998, %v1944, 0.0
        %1952 = vadd.xlane.f32.xlu0 %v1951
        %v1953 = vpop.xlane.xlu0 %1952
        %v1954 = vsel %vm998, %v1946, 0.0
        %1955 = vadd.xlane.f32.xlu0 %v1954
        %v1956 = vpop.xlane.xlu0 %1955
        %v1957 = vsel %vm998, %v1948, 0.0
        %1958 = vadd.xlane.f32.xlu0 %v1957
        %v1959 = vpop.xlane.xlu0 %1958
        %v1960 = vsel %vm998, %v1950, 0.0
        %1961 = vadd.xlane.f32.xlu0 %v1960
        %v1962 = vpop.xlane.xlu0 %1961
        %v1963 = vrcp.pop %v1953
        %v1964 = vrcp.pop %v1956
        %v1965 = vrcp.pop %v1959
        %v1966 = vrcp.pop %v1962
        %v1967 = vmul.f32 %v1944, %v1963
        %v1968 = vmul.f32 %v1946, %v1964
        %v1969 = vmul.f32 %v1948, %v1965
        %v1970 = vmul.f32 %v1950, %v1966
        %v1971 = vpack.c.bf16 %v1967, %v1967
        %v1972 = vpack.c.bf16 %v1968, %v1968
        %v1973 = vpack.c.bf16 %v1969, %v1969
        %v1974 = vpack.c.bf16 %v1970, %v1970
        %v1976 = vsel %vm998, %v1971, 0
        %v1979 = vsel %vm1234, %v1739, 0
        %1981 = vmatprep.subr.bf16.mxu0 0
        %1982 = vmatpush1.bf16.msra.mxu0 0
        %1983 = vmatprep.subr.bf16.mxu0 0
        %1984 = vmatpush1.bf16.msra.mxu0 0
        %1985 = vmatprep.subr.bf16.mxu0 0
        %1986 = vmatpush1.bf16.msra.mxu0 0
        %1987 = vmatprep.subr.bf16.mxu0 0
        %1988 = vmatpush1.bf16.msra.mxu0 0
        %1989 = vmatprep.subr.bf16.mxu0 0
        %1990 = vmatpush1.bf16.msra.mxu0 0
        %1991 = vmatprep.subr.bf16.mxu0 0
        %1992 = vmatpush1.bf16.msra.mxu0 0
        %1993 = vmatprep.subr.bf16.mxu0 0
        %1994 = vmatpush1.bf16.msra.mxu0 0
        %1995 = vmatprep.subr.bf16.mxu0 0
        %1996 = vmatpush1.bf16.msra.mxu0 %v1979
        %1997 = vmatprep.subr.bf16.mxu0 0
        %1998 = vmatpush2.bf16.msra.mxu0 0
        %1999 = vmatprep.subr.bf16.mxu0 0
        %2000 = vmatpush2.bf16.msra.mxu0 0
        %2001 = vmatprep.subr.bf16.mxu0 0
        %2002 = vmatpush2.bf16.msra.mxu0 0
        %2003 = vmatprep.subr.bf16.mxu0 0
        %2004 = vmatpush2.bf16.msra.mxu0 0
        %2005 = vmatprep.subr.bf16.mxu0 0
        %2006 = vmatpush2.bf16.msra.mxu0 0
        %2007 = vmatprep.subr.bf16.mxu0 0
        %2008 = vmatpush2.bf16.msra.mxu0 0
        %2009 = vmatprep.subr.bf16.mxu0 0
        %2010 = vmatpush2.bf16.msra.mxu0 0
        %2011 = vmatprep.subr.bf16.mxu0 0
        %2012 = vmatpush2.bf16.msra.mxu0 0
        %2013 = vmatprep.mubr.bf16.mxu0 0
        %2014 = vmatmul.mubr.bf16.gmra.mxu0 %v1976
        %v2015 = vpop.f32.mrf.mxu0
        %v2016 = vadd.f32 0.0, %v2015
        %v2017 = vpop.f32.mrf.mxu0
        %v2018 = vpop.f32.mrf.mxu0
        %v2019 = vpop.f32.mrf.mxu0
        %2020 = vdwg.mxu0
        %v2022 = vsel %vm998, %v1972, 0
        %v2025 = vsel %vm1234, %v1740, 0
        %2027 = vmatprep.subr.bf16.mxu0 0
        %2028 = vmatpush1.bf16.msra.mxu0 0
        %2029 = vmatprep.subr.bf16.mxu0 0
        %2030 = vmatpush1.bf16.msra.mxu0 0
        %2031 = vmatprep.subr.bf16.mxu0 0
        %2032 = vmatpush1.bf16.msra.mxu0 0
        %2033 = vmatprep.subr.bf16.mxu0 0
        %2034 = vmatpush1.bf16.msra.mxu0 0
        %2035 = vmatprep.subr.bf16.mxu0 0
        %2036 = vmatpush1.bf16.msra.mxu0 0
        %2037 = vmatprep.subr.bf16.mxu0 0
        %2038 = vmatpush1.bf16.msra.mxu0 0
        %2039 = vmatprep.subr.bf16.mxu0 0
        %2040 = vmatpush1.bf16.msra.mxu0 0
        %2041 = vmatprep.subr.bf16.mxu0 0
        %2042 = vmatpush1.bf16.msra.mxu0 %v2025
        %2043 = vmatprep.subr.bf16.mxu0 0
        %2044 = vmatpush2.bf16.msra.mxu0 0
        %2045 = vmatprep.subr.bf16.mxu0 0
        %2046 = vmatpush2.bf16.msra.mxu0 0
        %2047 = vmatprep.subr.bf16.mxu0 0
        %2048 = vmatpush2.bf16.msra.mxu0 0
        %2049 = vmatprep.subr.bf16.mxu0 0
        %2050 = vmatpush2.bf16.msra.mxu0 0
        %2051 = vmatprep.subr.bf16.mxu0 0
        %2052 = vmatpush2.bf16.msra.mxu0 0
        %2053 = vmatprep.subr.bf16.mxu0 0
        %2054 = vmatpush2.bf16.msra.mxu0 0
        %2055 = vmatprep.subr.bf16.mxu0 0
        %2056 = vmatpush2.bf16.msra.mxu0 0
        %2057 = vmatprep.subr.bf16.mxu0 0
        %2058 = vmatpush2.bf16.msra.mxu0 0
        %2059 = vmatprep.mubr.bf16.mxu0 0
        %2060 = vmatmul.mubr.bf16.gmra.mxu0 %v2022
        %v2061 = vpop.f32.mrf.mxu0
        %v2062 = vadd.f32 0.0, %v2061
        %v2063 = vpop.f32.mrf.mxu0
        %v2064 = vpop.f32.mrf.mxu0
        %v2065 = vpop.f32.mrf.mxu0
        %2066 = vdwg.mxu0
        %v2068 = vsel %vm998, %v1973, 0
        %v2071 = vsel %vm1234, %v1741, 0
        %2073 = vmatprep.subr.bf16.mxu0 0
        %2074 = vmatpush1.bf16.msra.mxu0 0
        %2075 = vmatprep.subr.bf16.mxu0 0
        %2076 = vmatpush1.bf16.msra.mxu0 0
        %2077 = vmatprep.subr.bf16.mxu0 0
        %2078 = vmatpush1.bf16.msra.mxu0 0
        %2079 = vmatprep.subr.bf16.mxu0 0
        %2080 = vmatpush1.bf16.msra.mxu0 0
        %2081 = vmatprep.subr.bf16.mxu0 0
        %2082 = vmatpush1.bf16.msra.mxu0 0
        %2083 = vmatprep.subr.bf16.mxu0 0
        %2084 = vmatpush1.bf16.msra.mxu0 0
        %2085 = vmatprep.subr.bf16.mxu0 0
        %2086 = vmatpush1.bf16.msra.mxu0 0
        %2087 = vmatprep.subr.bf16.mxu0 0
        %2088 = vmatpush1.bf16.msra.mxu0 %v2071
        %2089 = vmatprep.subr.bf16.mxu0 0
        %2090 = vmatpush2.bf16.msra.mxu0 0
        %2091 = vmatprep.subr.bf16.mxu0 0
        %2092 = vmatpush2.bf16.msra.mxu0 0
        %2093 = vmatprep.subr.bf16.mxu0 0
        %2094 = vmatpush2.bf16.msra.mxu0 0
        %2095 = vmatprep.subr.bf16.mxu0 0
        %2096 = vmatpush2.bf16.msra.mxu0 0
        %2097 = vmatprep.subr.bf16.mxu0 0
        %2098 = vmatpush2.bf16.msra.mxu0 0
        %2099 = vmatprep.subr.bf16.mxu0 0
        %2100 = vmatpush2.bf16.msra.mxu0 0
        %2101 = vmatprep.subr.bf16.mxu0 0
        %2102 = vmatpush2.bf16.msra.mxu0 0
        %2103 = vmatprep.subr.bf16.mxu0 0
        %2104 = vmatpush2.bf16.msra.mxu0 0
        %2105 = vmatprep.mubr.bf16.mxu0 0
        %2106 = vmatmul.mubr.bf16.gmra.mxu0 %v2068
        %v2107 = vpop.f32.mrf.mxu0
        %v2108 = vadd.f32 0.0, %v2107
        %v2109 = vpop.f32.mrf.mxu0
        %v2110 = vpop.f32.mrf.mxu0
        %v2111 = vpop.f32.mrf.mxu0
        %2112 = vdwg.mxu0
        %v2114 = vsel %vm998, %v1974, 0
        %v2117 = vsel %vm1234, %v1742, 0
        %2119 = vmatprep.subr.bf16.mxu0 0
        %2120 = vmatpush1.bf16.msra.mxu0 0
        %2121 = vmatprep.subr.bf16.mxu0 0
        %2122 = vmatpush1.bf16.msra.mxu0 0
        %2123 = vmatprep.subr.bf16.mxu0 0
        %2124 = vmatpush1.bf16.msra.mxu0 0
        %2125 = vmatprep.subr.bf16.mxu0 0
        %2126 = vmatpush1.bf16.msra.mxu0 0
        %2127 = vmatprep.subr.bf16.mxu0 0
        %2128 = vmatpush1.bf16.msra.mxu0 0
        %2129 = vmatprep.subr.bf16.mxu0 0
        %2130 = vmatpush1.bf16.msra.mxu0 0
        %2131 = vmatprep.subr.bf16.mxu0 0
        %2132 = vmatpush1.bf16.msra.mxu0 0
        %2133 = vmatprep.subr.bf16.mxu0 0
        %2134 = vmatpush1.bf16.msra.mxu0 %v2117
        %2135 = vmatprep.subr.bf16.mxu0 0
        %2136 = vmatpush2.bf16.msra.mxu0 0
        %2137 = vmatprep.subr.bf16.mxu0 0
        %2138 = vmatpush2.bf16.msra.mxu0 0
        %2139 = vmatprep.subr.bf16.mxu0 0
        %2140 = vmatpush2.bf16.msra.mxu0 0
        %2141 = vmatprep.subr.bf16.mxu0 0
        %2142 = vmatpush2.bf16.msra.mxu0 0
        %2143 = vmatprep.subr.bf16.mxu0 0
        %2144 = vmatpush2.bf16.msra.mxu0 0
        %2145 = vmatprep.subr.bf16.mxu0 0
        %2146 = vmatpush2.bf16.msra.mxu0 0
        %2147 = vmatprep.subr.bf16.mxu0 0
        %2148 = vmatpush2.bf16.msra.mxu0 0
        %2149 = vmatprep.subr.bf16.mxu0 0
        %2150 = vmatpush2.bf16.msra.mxu0 0
        %2151 = vmatprep.mubr.bf16.mxu0 0
        %2152 = vmatmul.mubr.bf16.gmra.mxu0 %v2114
        %v2153 = vpop.f32.mrf.mxu0
        %v2154 = vadd.f32 0.0, %v2153
        %v2155 = vpop.f32.mrf.mxu0
        %v2156 = vpop.f32.mrf.mxu0
        %v2157 = vpop.f32.mrf.mxu0
        %2158 = vdwg.mxu0
        %2160 = vrot.lane.b32.xlu0 %v2062, 8
        %v2161 = vpop.permute.xlu0 %2160
        %2164 = vrot.lane.b32.xlu0 %v2108, 16
        %v2165 = vpop.permute.xlu0 %2164
        %2168 = vrot.lane.b32.xlu0 %v2154, 24
        %v2169 = vpop.permute.xlu0 %2168
        %v2171 = vsel %vm998, %v2016, %v2161
        %v2172 = vsel %vm1429, %v2171, %v2165
        %v2173 = vsel %vm1431, %v2172, %v2169
        %v2174 = vpack.c.bf16 %v2173, %v2173
        %v2175 = vlaneseq
        %v2176 = vshrl.u32 %v2175, 7
        %v2177 = vsub.s32 3, %v2176
        %v2178 = vrot.slane %v777, %v2177
        %v2183 = vunpack.c.l.b16 %v1532
        %v2184 = vunpack.c.l.b16 %v1533
        %v2185 = vunpack.c.l.b16 %v1534
        %v2186 = vunpack.c.l.b16 %v1535
        %v2187 = vpack.c.b16 %v2184, %v2183
        %v2188 = vpack.c.b16 %v2186, %v2185
        %v2192 = vsel %vm808, %v2174, 0
        %2194 = vmatprep.subr.bf16.mxu0 0
        %2195 = vmatpush1.bf16.msra.mxu0 0
        %2196 = vmatprep.subr.bf16.mxu0 0
        %2197 = vmatpush1.bf16.msra.mxu0 0
        %2198 = vmatprep.subr.bf16.mxu0 0
        %2199 = vmatpush1.bf16.msra.mxu0 0
        %2200 = vmatprep.subr.bf16.mxu0 0
        %2201 = vmatpush1.bf16.msra.mxu0 0
        %2202 = vmatprep.subr.bf16.mxu0 0
        %2203 = vmatpush1.bf16.msra.mxu0 0
        %2204 = vmatprep.subr.bf16.mxu0 0
        %2205 = vmatpush1.bf16.msra.mxu0 0
        %2206 = vmatprep.subr.bf16.mxu0 0
        %2207 = vmatpush1.bf16.msra.mxu0 %v2188
        %2208 = vmatprep.subr.bf16.mxu0 0
        %2209 = vmatpush1.bf16.msra.mxu0 %v2187
        %2210 = vmatprep.subr.bf16.mxu0 0
        %2211 = vmatpush2.bf16.msra.mxu0 0
        %2212 = vmatprep.subr.bf16.mxu0 0
        %2213 = vmatpush2.bf16.msra.mxu0 0
        %2214 = vmatprep.subr.bf16.mxu0 0
        %2215 = vmatpush2.bf16.msra.mxu0 0
        %2216 = vmatprep.subr.bf16.mxu0 0
        %2217 = vmatpush2.bf16.msra.mxu0 0
        %2218 = vmatprep.subr.bf16.mxu0 0
        %2219 = vmatpush2.bf16.msra.mxu0 0
        %2220 = vmatprep.subr.bf16.mxu0 0
        %2221 = vmatpush2.bf16.msra.mxu0 0
        %2222 = vmatprep.subr.bf16.mxu0 0
        %2223 = vmatpush2.bf16.msra.mxu0 0
        %2224 = vmatprep.subr.bf16.mxu0 0
        %2225 = vmatpush2.bf16.msra.mxu0 0
        %2226 = vmatprep.mubr.bf16.mxu0 0
        %2227 = vmatmul.mubr.bf16.gmra.mxu0 %v2192
        %v2228 = vpop.f32.mrf.mxu0
        %v2229 = vadd.f32 %v2178, %v2228
        %v2230 = vpop.f32.mrf.mxu0
        %v2231 = vpop.f32.mrf.mxu0
        %v2232 = vpop.f32.mrf.mxu0
        %2233 = vdwg.mxu0
        %v2234 = vadd.f32 %v2229, %v1518
        %v2235 = vsel %vm808, %v2234, 0.0
        %2236 = vadd.xlane.f32.xlu0 %v2235
        %v2237 = vpop.xlane.xlu0 %2236
        %v2238 = vmul.f32 %v2237, %v1498
        %v2239 = vsub.f32 %v2234, %v2238
        %v2240 = vmul.f32 %v2239, %v2239
        %v2241 = vsel %vm808, %v2240, 0.0
        %2242 = vadd.xlane.f32.xlu0 %v2241
        %v2243 = vpop.xlane.xlu0 %2242
        %v2244 = vmul.f32 %v2243, %v1498
        %v2245 = vadd.f32 %v2244, 1e-05
        %v2246 = vrsqrt.pop %v2245
        %v2247 = vmul.f32 %v2239, %v2246
        %v2248 = vlaneseq
        %v2249 = vshrl.u32 %v2248, 7
        %v2250 = vsub.s32 4, %v2249
        %v2251 = vrot.slane %v777, %v2250
        %v2252 = vmul.f32 %v2247, %v2251
        %v2253 = vlaneseq
        %v2254 = vshrl.u32 %v2253, 7
        %v2255 = vsub.s32 5, %v2254
        %v2256 = vrot.slane %v777, %v2255
        %v2257 = vadd.f32 %v2252, %v2256
        %v2258 = vpack.c.bf16 %v2257, %v2257
        %v2259 = vld [vmem:[#allocation16] sm:$0xf]
        %v2260 = vld [vmem:[#allocation16 + $0x4] sm:$0xf]
        %v2261 = vld [vmem:[#allocation16 + $0x8] sm:$0xf]
        %v2262 = vld [vmem:[#allocation16 + $0xc] sm:$0xf]
        %v2264 = vlaneseq
        %v2265 = vshrl.u32 %v2264, 7
        %v2266 = vsub.s32 0, %v2265
        %v2267 = vrot.slane %v779, %v2266
        %v2273 = vunpack.c.l.b16 %v2259
        %v2274 = vunpack.c.l.b16 %v2260
        %v2275 = vunpack.c.l.b16 %v2261
        %v2276 = vunpack.c.l.b16 %v2262
        %v2277 = vpack.c.b16 %v2274, %v2273
        %v2278 = vpack.c.b16 %v2276, %v2275
        %v2282 = vsel %vm808, %v2258, 0
        %2284 = vmatprep.subr.bf16.mxu0 0
        %2285 = vmatpush1.bf16.msra.mxu0 0
        %2286 = vmatprep.subr.bf16.mxu0 0
        %2287 = vmatpush1.bf16.msra.mxu0 0
        %2288 = vmatprep.subr.bf16.mxu0 0
        %2289 = vmatpush1.bf16.msra.mxu0 0
        %2290 = vmatprep.subr.bf16.mxu0 0
        %2291 = vmatpush1.bf16.msra.mxu0 0
        %2292 = vmatprep.subr.bf16.mxu0 0
        %2293 = vmatpush1.bf16.msra.mxu0 0
        %2294 = vmatprep.subr.bf16.mxu0 0
        %2295 = vmatpush1.bf16.msra.mxu0 0
        %2296 = vmatprep.subr.bf16.mxu0 0
        %2297 = vmatpush1.bf16.msra.mxu0 %v2278
        %2298 = vmatprep.subr.bf16.mxu0 0
        %2299 = vmatpush1.bf16.msra.mxu0 %v2277
        %2300 = vmatprep.subr.bf16.mxu0 0
        %2301 = vmatpush2.bf16.msra.mxu0 0
        %2302 = vmatprep.subr.bf16.mxu0 0
        %2303 = vmatpush2.bf16.msra.mxu0 0
        %2304 = vmatprep.subr.bf16.mxu0 0
        %2305 = vmatpush2.bf16.msra.mxu0 0
        %2306 = vmatprep.subr.bf16.mxu0 0
        %2307 = vmatpush2.bf16.msra.mxu0 0
        %2308 = vmatprep.subr.bf16.mxu0 0
        %2309 = vmatpush2.bf16.msra.mxu0 0
        %2310 = vmatprep.subr.bf16.mxu0 0
        %2311 = vmatpush2.bf16.msra.mxu0 0
        %2312 = vmatprep.subr.bf16.mxu0 0
        %2313 = vmatpush2.bf16.msra.mxu0 0
        %2314 = vmatprep.subr.bf16.mxu0 0
        %2315 = vmatpush2.bf16.msra.mxu0 0
        %2316 = vmatprep.mubr.bf16.mxu0 0
        %2317 = vmatmul.mubr.bf16.gmra.mxu0 %v2282
        %v2318 = vpop.f32.mrf.mxu0
        %v2319 = vadd.f32 %v2267, %v2318
        %v2320 = vpop.f32.mrf.mxu0
        %v2321 = vpop.f32.mrf.mxu0
        %v2322 = vpop.f32.mrf.mxu0
        %2323 = vdwg.mxu0
        %v2324 = vmax.f32 %v2319, 0.0
        %v2325 = vpack.c.bf16 %v2324, %v2324
        %v2326 = vld [vmem:[%s14] sm:$0xf]
        %v2327 = vld [vmem:[%s14 + $0x4] sm:$0xf]
        %v2328 = vld [vmem:[%s14 + $0x8] sm:$0xf]
        %v2329 = vld [vmem:[%s14 + $0xc] sm:$0xf]
        %v2330 = vld [vmem:[%s14 + $0x10] sm:$0xf]
        %v2331 = vld [vmem:[%s14 + $0x14] sm:$0xf]
        %v2332 = vld [vmem:[%s14 + $0x18] sm:$0xf]
        %v2333 = vld [vmem:[%s14 + $0x1c] sm:$0xf]
        %v2334 = vld [vmem:[%s14 + $0x20] sm:$0xf]
        %v2335 = vld [vmem:[%s14 + $0x24] sm:$0xf]
        %v2336 = vld [vmem:[%s14 + $0x28] sm:$0xf]
        %v2337 = vld [vmem:[%s14 + $0x2c] sm:$0xf]
        %v2338 = vld [vmem:[%s14 + $0x30] sm:$0xf]
        %v2339 = vld [vmem:[%s14 + $0x34] sm:$0xf]
        %v2340 = vld [vmem:[%s14 + $0x38] sm:$0xf]
        %v2341 = vld [vmem:[%s14 + $0x3c] sm:$0xf]
        %v2342 = vlaneseq
        %v2343 = vshrl.u32 %v2342, 7
        %v2344 = vsub.s32 6, %v2343
        %v2345 = vrot.slane %v777, %v2344
        %v2362 = vunpack.c.l.b16 %v2326
        %v2363 = vunpack.c.l.b16 %v2327
        %v2364 = vunpack.c.l.b16 %v2328
        %v2365 = vunpack.c.l.b16 %v2329
        %v2366 = vunpack.c.l.b16 %v2330
        %v2367 = vunpack.c.l.b16 %v2331
        %v2368 = vunpack.c.l.b16 %v2332
        %v2369 = vunpack.c.l.b16 %v2333
        %v2370 = vunpack.c.l.b16 %v2334
        %v2371 = vunpack.c.l.b16 %v2335
        %v2372 = vunpack.c.l.b16 %v2336
        %v2373 = vunpack.c.l.b16 %v2337
        %v2374 = vunpack.c.l.b16 %v2338
        %v2375 = vunpack.c.l.b16 %v2339
        %v2376 = vunpack.c.l.b16 %v2340
        %v2377 = vunpack.c.l.b16 %v2341
        %v2378 = vpack.c.b16 %v2363, %v2362
        %v2379 = vpack.c.b16 %v2365, %v2364
        %v2380 = vpack.c.b16 %v2367, %v2366
        %v2381 = vpack.c.b16 %v2369, %v2368
        %v2382 = vpack.c.b16 %v2371, %v2370
        %v2383 = vpack.c.b16 %v2373, %v2372
        %v2384 = vpack.c.b16 %v2375, %v2374
        %v2385 = vpack.c.b16 %v2377, %v2376
        %2394 = vmatprep.subr.bf16.mxu0 0
        %2395 = vmatpush1.bf16.msra.mxu0 %v2385
        %2396 = vmatprep.subr.bf16.mxu0 0
        %2397 = vmatpush1.bf16.msra.mxu0 %v2384
        %2398 = vmatprep.subr.bf16.mxu0 0
        %2399 = vmatpush1.bf16.msra.mxu0 %v2383
        %2400 = vmatprep.subr.bf16.mxu0 0
        %2401 = vmatpush1.bf16.msra.mxu0 %v2382
        %2402 = vmatprep.subr.bf16.mxu0 0
        %2403 = vmatpush1.bf16.msra.mxu0 %v2381
        %2404 = vmatprep.subr.bf16.mxu0 0
        %2405 = vmatpush1.bf16.msra.mxu0 %v2380
        %2406 = vmatprep.subr.bf16.mxu0 0
        %2407 = vmatpush1.bf16.msra.mxu0 %v2379
        %2408 = vmatprep.subr.bf16.mxu0 0
        %2409 = vmatpush1.bf16.msra.mxu0 %v2378
        %2410 = vmatprep.subr.bf16.mxu0 0
        %2411 = vmatpush2.bf16.msra.mxu0 0
        %2412 = vmatprep.subr.bf16.mxu0 0
        %2413 = vmatpush2.bf16.msra.mxu0 0
        %2414 = vmatprep.subr.bf16.mxu0 0
        %2415 = vmatpush2.bf16.msra.mxu0 0
        %2416 = vmatprep.subr.bf16.mxu0 0
        %2417 = vmatpush2.bf16.msra.mxu0 0
        %2418 = vmatprep.subr.bf16.mxu0 0
        %2419 = vmatpush2.bf16.msra.mxu0 0
        %2420 = vmatprep.subr.bf16.mxu0 0
        %2421 = vmatpush2.bf16.msra.mxu0 0
        %2422 = vmatprep.subr.bf16.mxu0 0
        %2423 = vmatpush2.bf16.msra.mxu0 0
        %2424 = vmatprep.subr.bf16.mxu0 0
        %2425 = vmatpush2.bf16.msra.mxu0 0
        %2426 = vmatprep.mubr.bf16.mxu0 0
        %2427 = vmatmul.mubr.bf16.gmra.mxu0 %v2325
        %v2428 = vpop.f32.mrf.mxu0
        %v2429 = vadd.f32 %v2345, %v2428
        %v2430 = vpop.f32.mrf.mxu0
        %v2431 = vpop.f32.mrf.mxu0
        %v2432 = vpop.f32.mrf.mxu0
        %2433 = vdwg.mxu0
        %v2434 = vadd.f32 %v2429, %v2257
        %v2435 = vsel %vm808, %v2434, 0.0
        %2436 = vadd.xlane.f32.xlu0 %v2435
        %v2437 = vpop.xlane.xlu0 %2436
        %v2438 = vmul.f32 %v2437, %v1498
        %v2439 = vsub.f32 %v2434, %v2438
        %v2440 = vmul.f32 %v2439, %v2439
        %v2441 = vsel %vm808, %v2440, 0.0
        %2442 = vadd.xlane.f32.xlu0 %v2441
        %v2443 = vpop.xlane.xlu0 %2442
        %v2444 = vmul.f32 %v2443, %v1498
        %v2445 = vadd.f32 %v2444, 1e-05
        %v2446 = vrsqrt.pop %v2445
        %v2447 = vmul.f32 %v2439, %v2446
        %v2448 = vlaneseq
        %v2449 = vshrl.u32 %v2448, 7
        %v2450 = vsub.s32 7, %v2449
        %v2451 = vrot.slane %v777, %v2450
        %v2452 = vmul.f32 %v2447, %v2451
        %v2453 = vlaneseq
        %v2454 = vshrl.u32 %v2453, 7
        %v2455 = vsub.s32 0, %v2454
        %v2456 = vrot.slane %v778, %v2455
        %v2457 = vadd.f32 %v2452, %v2456
        %2458 = vst.msk [vmem:[%s762] sm:$0xff] %vm808, %v2457
        %s2459 = sand.u32 %s431, 1
        %s2460 = scalar_lea.sflag [#allocation4], %s2459
        %s2461 = sand.u32 %s431, 1
        %s2462 = smul.addr %s2461, 8
        %s2463 = scalar_lea.vmem [#allocation19], %s2462
        // Predicated region
        $region129: #{tpu_custom_call.1} parent=87 // pred_check
          %p2464 = pneg %p441
        $region130: #{tpu_custom_call.1} parent=87 // pred_check_branch
          %2466 = sbr.rel (%p2464) target = $region132
        $region131: #{tpu_custom_call.1} parent=87 // pred_region
          %s2468 = ssub.s32 128, 128
          %2469 = vsyncadd %s2460, %s2468
          %s2470 = smul.addr %s41, 128
          %s2471 = scalar_lea.hbm %s17, %s2470
          %s2473 = sshll.u32 %s2463, 4
          %s2474 = int_to_ptr.vmem [resolvable:$true] %s2473
          %2476 = dma.vmem_to_hbm [thread:$0]  %s2474, 128, %s2471, %s2460
        $region132: #{tpu_custom_call.1} parent=87 // pred_fallthru
          _
      $region88: #{tpu_custom_call.1} parent=5 // pred_fallthru
        _
      %p2477 = scmp.le.s32.totalorder 2, %s36
      // Predicated region
      $region133: #{tpu_custom_call.1} parent=5 // pred_check
        %p2478 = pneg %p2477
      $region134: #{tpu_custom_call.1} parent=5 // pred_check_branch
        %2480 = sbr.rel (%p2478) target = $region136
      $region135: #{tpu_custom_call.1} parent=5 // pred_region
        %s2481 = ssub.s32 %s36, 2
        // Predicated region
        $region137: #{tpu_custom_call.1} parent=135 // pred_check
          %p2482 = pneg %p447
        $region138: #{tpu_custom_call.1} parent=135 // pred_check_branch
          %2484 = sbr.rel (%p2482) target = $region140
        $region139: #{tpu_custom_call.1} parent=135 // pred_region
          %s2485 = sand.u32 %s432, 1
          %s2486 = scalar_lea.sflag [#allocation4], %s2485
          %s2487 = sand.u32 %s432, 1
          %s2488 = smul.addr %s2487, 8
          %s2489 = scalar_lea.vmem [#allocation19], %s2488
          %2490 = dma.done %s2486, 128
        $region140: #{tpu_custom_call.1} parent=135 // pred_fallthru
          _
      $region136: #{tpu_custom_call.1} parent=5 // pred_fallthru
        _
    $region6: #{tpu_custom_call.1} parent=1 // loop_footer
      %s40 = sadd.s32 1, %s36
    $region7: #{tpu_custom_call.1} parent=1 // loop_footer_branch
      %35 = sbr.rel target = $region3
    $region8: #{tpu_custom_call.1} parent=1 // loop_exit
      _
    %2491 = vsyncpa [#allocation3], 1
    %s2492 = scalar_lea.sflag [#allocation3], 1
    %2493 = vsyncpa %s2492, 1
    %2494 = vsyncpa [#allocation6], 1
    %s2495 = scalar_lea.sflag [#allocation6], 1
    %2496 = vsyncpa %s2495, 1
    %2497 = vsyncpa [#allocation9], 1
    %2498 = vsyncpa [#allocation12], 1
    %2499 = vsyncpa [#allocation15], 1
    %2500 = vsyncpa [#allocation18], 1
    %2501 = vsyncpa [#allocation4], 1
    %s2502 = scalar_lea.sflag [#allocation4], 1
    %2503 = vsyncpa %s2502, 1

</llo_original>
